<compile_context>
chip_gen: v7x
topology: tpu7x:2x2x1
jax: 0.10.0
libtpu: 0.0.40
codegen_flags: <defaults>
</compile_context>

<pallas_src>
import functools

import jax
import jax.numpy as jnp
from jax.experimental import pallas as pl
from jax.experimental.pallas import tpu as pltpu

_BN_EPS = 1e-5
_VMEM_LIMIT = 32 * 1024 * 1024   # explicit (review: v5e default scoped limit is 16 MiB)


# ---------------------------------------------------------------------------
# Pallas kernel 1: M-tiled fused linear  (y = x@W) * scale + shift, masked ReLU
# ---------------------------------------------------------------------------
def _fused_linear_kernel(x_ref, w_ref, e_ref, o_ref, *, use_vpu, k):
    scale = e_ref[0:1, :]
    shift = e_ref[1:2, :]
    rmask = e_ref[2:3, :]
    if use_vpu:
        # tiny-K path (e.g. K=3 input conv): broadcast FMAs on the VPU instead
        # of a latency-bound K=3 MXU matmul.
        x = x_ref[...]
        w = w_ref[...]
        y = x[:, 0:1] * w[0:1, :]
        for i in range(1, k):
            y = y + x[:, i:i + 1] * w[i:i + 1, :]
        y = y.astype(jnp.float32)
    else:
        y = jnp.dot(x_ref[...], w_ref[...], preferred_element_type=jnp.float32)
    y = y * scale + shift                                 # bias / BN folded here
    o_ref[...] = jnp.where(rmask > 0.0, jnp.maximum(y, 0.0), y)


def fused_linear(x, w, b, *, gamma=None, beta=None, bn_mask=None, relu_mask=None,
                 pad_n_to=128, block_m=256, use_vpu=False):
    """y = x @ w + b, with per-channel (masked) training-mode BatchNorm and ReLU
    fused as an affine + select epilogue.  BN batch statistics are computed
    EXACTLY in XLA from x (centered-Gram trick), so the Pallas grid can tile M."""
    M, K = x.shape
    Nc = w.shape[1]
    b = b.astype(jnp.float32)

    # ---- exact training-mode BN statistics folded to per-channel affine ----
    if bn_mask is not None:
        xf = x.astype(jnp.float32)
        wf = w.astype(jnp.float32)
        mean_x = jnp.mean(xf, axis=0)                       # (K,)
        xc = xf - mean_x
        cov = (xc.T @ xc) / M                               # (K,K)  centered Gram
        var_y = jnp.sum((cov @ wf) * wf, axis=0)            # (Nc,) = diag(W^T Cov W)
        mean_xw = mean_x @ wf                               # (Nc,)
        s_bn = gamma.astype(jnp.float32) * jax.lax.rsqrt(var_y + _BN_EPS)
        t_bn = beta.astype(jnp.float32) - mean_xw * s_bn    # bias cancels in BN
        bnm = bn_mask.astype(jnp.float32)
        scale = jnp.where(bnm > 0, s_bn, 1.0)
        shift = jnp.where(bnm > 0, t_bn, b)
    else:
        scale = jnp.ones((Nc,), jnp.float32)
        shift = b
    rmask = (jnp.zeros((Nc,), jnp.float32) if relu_mask is None
             else relu_mask.astype(jnp.float32))

    # ---- pad channels for lane-dense stores, pad rows for clean tiling ----
    Np = ((Nc + pad_n_to - 1) // pad_n_to) * pad_n_to if pad_n_to else Nc
    if Np != Nc:
        w = jnp.pad(w, ((0, 0), (0, Np - Nc)))
        scale = jnp.pad(scale, (0, Np - Nc))
        shift = jnp.pad(shift, (0, Np - Nc))
        rmask = jnp.pad(rmask, (0, Np - Nc))
    epi = jnp.stack([scale, shift, rmask], axis=0)           # one packed (3,Np) ref

    TM = block_m
    Mp = ((M + TM - 1) // TM) * TM
    if use_vpu:
        xk, wk = x.astype(jnp.float32), w.astype(jnp.float32)
    else:
        xk, wk = x.astype(jnp.bfloat16), w.astype(jnp.bfloat16)   # bf16 MXU operands
    if Mp != M:
        xk = jnp.pad(xk, ((0, Mp - M), (0, 0)))

    kern = functools.partial(_fused_linear_kernel, use_vpu=use_vpu, k=K)
    out = pl.pallas_call(
        kern,
        out_shape=jax.ShapeDtypeStruct((Mp, Np), jnp.float32),
        grid=(Mp // TM,),
        in_specs=[pl.BlockSpec((TM, K), lambda i: (i, 0)),
                  pl.BlockSpec((K, Np), lambda i: (0, 0)),
                  pl.BlockSpec((3, Np), lambda i: (0, 0))],
        out_specs=pl.BlockSpec((TM, Np), lambda i: (i, 0)),
        compiler_params=pltpu.CompilerParams(
            dimension_semantics=("parallel",),
            vmem_limit_bytes=_VMEM_LIMIT),
    )(xk, wk, epi)
    return out[:M, :Nc]


# ---------------------------------------------------------------------------
# Pallas kernel 2: fused spatial attention (softmax + cross-mix + A) + k-folded
# einsum 'nkctv,nkcvw->nctw' as a per-sample (q*T, 3V)@(3V, V) matmul.
# ---------------------------------------------------------------------------
def _spa_attn_kernel(m_ref, att_ref, cross_ref, a_ref, o_ref, *, num_subset, num_q):
    def softmax2d(x):
        mx = jnp.max(x, axis=-1, keepdims=True)
        e = jnp.exp(x - mx)
        return e / jnp.sum(e, axis=-1, keepdims=True)

    # cross-quarter attentions (shared by neighbouring quarters)
    cross = [[softmax2d(cross_ref[0, kk * (num_q - 1) + j]) for j in range(num_q - 1)]
             for kk in range(num_subset)]

    for s in range(num_q):
        blocks = []
        for kk in range(num_subset):
            # 0.5*(att/2 + left/4 + right/4) + (A_SE + A_GEME)
            a = 0.25 * softmax2d(att_ref[0, kk * num_q + s]) + a_ref[kk]
            if s > 0:
                a = a + 0.125 * cross[kk][s - 1]
            if s < num_q - 1:
                a = a + 0.125 * cross[kk][s]
            blocks.append(a)
        bmat = jnp.concatenate(blocks, axis=0).astype(jnp.bfloat16)   # (3V, V)
        o_ref[0, s] = jnp.dot(m_ref[0, s], bmat, preferred_element_type=jnp.float32)


def spa_attn_matmul(m_b, att_logit, cross_logit, a_sum):
    """m_b: (N,4,q*T,3V) bf16;  att_logit: (N,3,4,V,V);  cross_logit: (N,3,3,V,V);
    a_sum: (3,V,V).  Returns (N,4,q*T,V) f32."""
    N, nq, QT, KV = m_b.shape
    ns, V, _ = a_sum.shape
    attL = att_logit.reshape(N, ns * nq, V, V).astype(jnp.float32)
    crossL = cross_logit.reshape(N, ns * (nq - 1), V, V).astype(jnp.float32)
    kern = functools.partial(_spa_attn_kernel, num_subset=ns, num_q=nq)
    return pl.pallas_call(
        kern,
        out_shape=jax.ShapeDtypeStruct((N, nq, QT, V), jnp.float32),
        grid=(N,),
        in_specs=[pl.BlockSpec((1, nq, QT, KV), lambda i: (i, 0, 0, 0)),
                  pl.BlockSpec((1, ns * nq, V, V), lambda i: (i, 0, 0, 0)),
                  pl.BlockSpec((1, ns * (nq - 1), V, V), lambda i: (i, 0, 0, 0)),
                  pl.BlockSpec((ns, V, V), lambda i: (0, 0, 0))],
        out_specs=pl.BlockSpec((1, nq, QT, V), lambda i: (i, 0, 0, 0)),
        compiler_params=pltpu.CompilerParams(
            dimension_semantics=("parallel",),
            vmem_limit_bytes=_VMEM_LIMIT),
    )(m_b, attL, crossL, a_sum.astype(jnp.float32))


# ---------------------------------------------------------------------------
# Pallas kernel 3: small batched matmul (Tem_Trans einsum 'nctv,ntm->ncmv')
# ---------------------------------------------------------------------------
def _bmm_kernel(a_ref, b_ref, o_ref):
    o_ref[0] = jnp.dot(a_ref[0], b_ref[0], preferred_element_type=jnp.float32)


def bmm(a, b):
    B, M, K = a.shape
    _, _, Nc = b.shape
    return pl.pallas_call(
        _bmm_kernel,
        out_shape=jax.ShapeDtypeStruct((B, M, Nc), jnp.float32),
        grid=(B,),                                    # >=2 steps -> both TCs on v7x
        in_specs=[pl.BlockSpec((1, M, K), lambda i: (i, 0, 0)),
                  pl.BlockSpec((1, K, Nc), lambda i: (i, 0, 0))],
        out_specs=pl.BlockSpec((1, M, Nc), lambda i: (i, 0, 0)),
        compiler_params=pltpu.CompilerParams(dimension_semantics=("parallel",)),
    )(a.astype(jnp.bfloat16), b.astype(jnp.bfloat16))


# ---------------------------------------------------------------------------
# Small XLA glue (jit fuses these; a Pallas launch would cost more than the math)
# ---------------------------------------------------------------------------
def bn_cl(x, gamma, beta, eps=_BN_EPS):
    """Training-mode BatchNorm2d for channel-last tensors (stats over all axes but last)."""
    axes = tuple(range(x.ndim - 1))
    mean = jnp.mean(x, axis=axes, keepdims=True)
    var = jnp.mean(jnp.square(x - mean), axis=axes, keepdims=True)
    return gamma * (x - mean) * jax.lax.rsqrt(var + eps) + beta


# ---------------------------------------------------------------------------
# Spatial MixFormer (channel-last)
# ---------------------------------------------------------------------------
def spatial_mixformer(m_cl, down_cl, p, Cout):
    N, T, V, _ = m_cl.shape
    ns = 3
    q = Cout // 4
    m6 = m_cl.reshape(N, T, V, ns, 4, q)                    # (N,T,V,k,s,c)

    # pooled (pre-linear) Q/K per (subset, quarter): mean over T and half channels
    Qo = jnp.transpose(jnp.mean(m6[..., : q // 2], axis=(1, 5)), (0, 2, 3, 1))  # (N,3,4,V)
    Ko = jnp.transpose(jnp.mean(m6[..., q // 2:], axis=(1, 5)), (0, 2, 3, 1))

    # tiny 25->25 linears: plain XLA (review: a Pallas launch costs more than the math)
    QA = jax.nn.relu(Qo @ p['spa_att_lin_w'] + p['spa_att_lin_b'])
    KA = jax.nn.relu(Ko @ p['spa_att_lin_w'] + p['spa_att_lin_b'])
    QM = jax.nn.relu(Qo @ p['spa_mix_lin_w'] + p['spa_mix_lin_b'])
    KM = jax.nn.relu(Ko @ p['spa_mix_lin_w'] + p['spa_mix_lin_b'])

    att_logit = QA[..., :, None] * KA[..., None, :]               # (N,3,4,V,V)
    cross_logit = KM[:, :, :3, :, None] * QM[:, :, 1:, None, :]   # (N,3,3,V,V)

    # einsum 'nkctv,nkcvw->nctw' (k-sum folded into the contraction); the
    # softmax / cross-mix / +A construction happens inside the kernel so the
    # (N,3,4,V,V) attention tensors never round-trip through HBM.
    Mmat = jnp.transpose(m6, (0, 4, 5, 1, 3, 2)).reshape(N, 4, q * T, ns * V)
    prod = spa_attn_matmul(Mmat.astype(jnp.bfloat16), att_logit, cross_logit,
                           2.0 * p['A_base'])                      # A_SE + A_GEME
    m_agg = jnp.transpose(prod.reshape(N, 4, q, T, V),
                          (0, 3, 4, 1, 2)).reshape(N, T, V, Cout)

    # channel refinement: avg-pool -> Conv1d(1,1,3,pad=1,no bias) -> sigmoid gate
    cr = jnp.mean(m_agg, axis=(1, 2))                              # (N, Cout)
    crp = jnp.pad(cr, ((0, 0), (1, 1)))
    w3 = p['charef_w']
    cr_conv = w3[0] * crp[:, :-2] + w3[1] * crp[:, 1:-1] + w3[2] * crp[:, 2:]
    gate = jax.nn.sigmoid(cr_conv)[:, None, None, :]
    cr_out = m_agg + m_agg * gate

    out = bn_cl(cr_out, p['spa_bn_g'], p['spa_bn_b'])
    return jax.nn.relu(out + down_cl)


# ---------------------------------------------------------------------------
# Temporal MixFormer (channel-last)
# ---------------------------------------------------------------------------
def temporal_mixformer(s_cl, p, Cout, bc):
    N, T, V, _ = s_cl.shape
    M = N * T * V

    # ONE M-tiled fused matmul for the first conv of all five branches;
    # exact BN+ReLU fused on the first three branches' channels.
    W5 = jnp.concatenate([p['tb0_w1'], p['tb1_w1'], p['tb2_w1'],
                          p['tt_conv_w'], p['ts_conv_w']], axis=1)      # (Cout, 5bc)
    b5 = jnp.concatenate([p['tb0_b1'], p['tb1_b1'], p['tb2_b1'],
                          p['tt_conv_b'], p['ts_conv_b']], axis=0)
    g5 = jnp.concatenate([p['tb0_bn1_g'], p['tb1_bn1_g'], p['tb2_bn1_g'],
                          jnp.ones((2 * bc,), jnp.float32)], axis=0)
    bt5 = jnp.concatenate([p['tb0_bn1_b'], p['tb1_bn1_b'], p['tb2_bn1_b'],
                           jnp.zeros((2 * bc,), jnp.float32)], axis=0)
    mask5 = jnp.concatenate([jnp.ones((3 * bc,), jnp.float32),
                             jnp.zeros((2 * bc,), jnp.float32)], axis=0)
    y_all = fused_linear(s_cl.reshape(M, Cout), W5, b5,
                         gamma=g5, beta=bt5, bn_mask=mask5, relu_mask=mask5)
    y_all = y_all.reshape(N, T, V, 5 * bc)
    yb0 = y_all[..., 0 * bc:1 * bc]
    yb1 = y_all[..., 1 * bc:2 * bc]
    yb2 = y_all[..., 2 * bc:3 * bc]
    y_tt = y_all[..., 3 * bc:4 * bc]
    y_ts = y_all[..., 4 * bc:5 * bc]

    # branches 0/1: (5,1) temporal convs (dil 1 and 2) as one block-diagonal,
    # M-tiled matmul on bf16 im2col columns; their BNs applied afterwards in XLA
    # (narrow 16-ch output -> post-hoc exact stats are cheaper than another pass).
    # TODO(synk): replace the im2col with in-kernel shifted-slice matmuls to cut
    # the extra HBM traffic (v5e item).
    def im2col_t(y, dil):
        pad = 2 * dil
        yp = jnp.pad(y, ((0, 0), (pad, pad), (0, 0), (0, 0)))
        cols = jnp.stack([yp[:, k * dil:k * dil + T] for k in range(5)], axis=3)
        return cols.reshape(M, 5 * bc)

    cols = jnp.concatenate([im2col_t(yb0, 1), im2col_t(yb1, 2)],
                           axis=1).astype(jnp.bfloat16)                  # (M, 10bc)
    w0 = jnp.transpose(p['tb0_w2'], (2, 1, 0)).reshape(5 * bc, bc)       # (tap,cin)->cout
    w1 = jnp.transpose(p['tb1_w2'], (2, 1, 0)).reshape(5 * bc, bc)
    zblk = jnp.zeros((5 * bc, bc), jnp.float32)
    Wt = jnp.concatenate([jnp.concatenate([w0, zblk], axis=1),
                          jnp.concatenate([zblk, w1], axis=1)], axis=0)  # (10bc, 2bc)
    bt_ = jnp.concatenate([p['tb0_b2'], p['tb1_b2']], axis=0)
    out01 = fused_linear(cols, Wt, bt_, pad_n_to=None)                   # raw conv + bias
    out01 = bn_cl(out01.reshape(N, T, V, 2 * bc),
                  jnp.concatenate([p['tb0_bn2_g'], p['tb1_bn2_g']]),
                  jnp.concatenate([p['tb0_bn2_b'], p['tb1_bn2_b']]))

    # branch 2: MaxPool(3,1) over T + BN  (XLA glue)
    yp2 = jnp.pad(yb2, ((0, 0), (1, 1), (0, 0), (0, 0)), constant_values=-jnp.inf)
    mp = jnp.maximum(jnp.maximum(yp2[:, :T], yp2[:, 1:T + 1]), yp2[:, 2:T + 2])
    out2 = bn_cl(mp, p['tb2_bn2_g'], p['tb2_bn2_b'])

    # branch 3: Tem_Trans — tiny (T,T) linear stays in XLA; the einsum
    # 'nctv,ntm->ncmv' is a per-sample Pallas matmul with a (V*bc)-wide rhs.
    Q = jnp.mean(y_tt[..., : bc // 2], axis=(2, 3))                      # (N, T)
    K = jnp.max(y_tt[..., bc // 2:], axis=(2, 3))
    QL = jax.nn.relu(Q @ p['tt_lin_w'] + p['tt_lin_b'])
    KL = jax.nn.relu(K @ p['tt_lin_w'] + p['tt_lin_b'])
    att = jax.nn.sigmoid(QL[:, :, None] * KL[:, None, :])                # (N, t, m)
    a = jnp.swapaxes(att, 1, 2)                                          # (N, m, t)
    tt_out = bmm(a, y_tt.reshape(N, T, V * bc)).reshape(N, T, V, bc)
    tt_out = bn_cl(tt_out, p['tt_bn_g'], p['tt_bn_b'])
    out3 = bn_cl(tt_out, p['tb3_bn_g'], p['tb3_bn_b'])

    # branch 4: Tem_Seq_h (XLA glue)
    Qs = jnp.mean(y_ts, axis=(2, 3))
    Ks = jnp.max(y_ts, axis=(2, 3))
    comb = p['ts_comb_w'][0] * Qs + p['ts_comb_w'][1] * Ks + p['ts_comb_b'][0]
    gate = jax.nn.sigmoid(comb)[:, :, None, None]
    out4 = bn_cl(y_ts * gate, p['tb4_bn_g'], p['tb4_bn_b'])

    return jnp.concatenate([out01, out2, out3, out4], axis=-1)           # (N,T,V,5bc)


# ---------------------------------------------------------------------------
# Ske_MixF
# ---------------------------------------------------------------------------
def ske_mixf(x_nchw, p):
    N, Cin, T, V = x_nchw.shape
    Cout = p['down_w'].shape[1]
    bc = Cout // 5
    x_cl = jnp.transpose(x_nchw, (0, 2, 3, 1))                           # (N,T,V,Cin)

    # fused input convs: spa conv (3*Cout, raw) | down (Cout, +BN) | skip (Cout, +BN)
    # K=Cin=3 -> VPU broadcast-FMA path inside the kernel (review: avoid K=3 MXU).
    Win = jnp.concatenate([p['spa_conv_w'], p['down_w'], p['skip_w']], axis=1)
    bin_ = jnp.concatenate([p['spa_conv_b'], p['down_b'], p['skip_b']], axis=0)
    gin = jnp.concatenate([jnp.ones((3 * Cout,), jnp.float32),
                           p['down_bn_g'], p['skip_bn_g']], axis=0)
    btin = jnp.concatenate([jnp.zeros((3 * Cout,), jnp.float32),
                            p['down_bn_b'], p['skip_bn_b']], axis=0)
    mask_in = jnp.concatenate([jnp.zeros((3 * Cout,), jnp.float32),
                               jnp.ones((2 * Cout,), jnp.float32)], axis=0)
    y_in = fused_linear(x_cl.reshape(N * T * V, Cin), Win, bin_,
                        gamma=gin, beta=btin, bn_mask=mask_in, use_vpu=True)
    y_in = y_in.reshape(N, T, V, 5 * Cout)
    m_cl = y_in[..., : 3 * Cout]
    down_cl = y_in[..., 3 * Cout: 4 * Cout]
    skip_cl = y_in[..., 4 * Cout:]

    s_cl = spatial_mixformer(m_cl, down_cl, p, Cout)
    t_cl = temporal_mixformer(s_cl, p, Cout, bc)
    out_cl = jax.nn.relu(t_cl + skip_cl)
    return jnp.transpose(out_cl, (0, 3, 1, 2))                           # back to NCHW


# ---------------------------------------------------------------------------
# Deterministic parameter initialization (shapes mirror the torch __init__)
# ---------------------------------------------------------------------------
def init_params(key, Cin=3, Cout=40, T=8, V=25):
    ctr = [0]

    def nxt():
        ctr[0] += 1
        return jax.random.fold_in(key, ctr[0])

    def nrm(shape, scale=0.1):
        return scale * jax.random.normal(nxt(), shape, dtype=jnp.float32)

    bc = Cout // 5
    ones = lambda n: jnp.ones((n,), jnp.float32)
    zeros = lambda n: jnp.zeros((n,), jnp.float32)
    p = {}
    p['A_base'] = jnp.abs(nrm((3, V, V), 0.2))                   # adjacency A (3,25,25)
    # Spatial_MixFormer
    p['spa_conv_w'] = nrm((Cin, Cout * 3)); p['spa_conv_b'] = nrm((Cout * 3,), 0.01)
    p['spa_att_lin_w'] = nrm((V, V)); p['spa_att_lin_b'] = nrm((V,), 0.01)
    p['spa_mix_lin_w'] = nrm((V, V)); p['spa_mix_lin_b'] = nrm((V,), 0.01)
    p['charef_w'] = nrm((3,))                                    # Conv1d(1,1,3), no bias
    p['spa_bn_g'] = jnp.full((Cout,), 1e-6, jnp.float32); p['spa_bn_b'] = zeros(Cout)
    p['down_w'] = nrm((Cin, Cout)); p['down_b'] = nrm((Cout,), 0.01)
    p['down_bn_g'] = ones(Cout); p['down_bn_b'] = zeros(Cout)
    # Temporal_MixFormer
    for i in range(2):
        p[f'tb{i}_w1'] = nrm((Cout, bc)); p[f'tb{i}_b1'] = nrm((bc,), 0.01)
        p[f'tb{i}_bn1_g'] = ones(bc); p[f'tb{i}_bn1_b'] = zeros(bc)
        p[f'tb{i}_w2'] = nrm((bc, bc, 5)); p[f'tb{i}_b2'] = nrm((bc,), 0.01)
        p[f'tb{i}_bn2_g'] = ones(bc); p[f'tb{i}_bn2_b'] = zeros(bc)
    p['tb2_w1'] = nrm((Cout, bc)); p['tb2_b1'] = nrm((bc,), 0.01)
    p['tb2_bn1_g'] = ones(bc); p['tb2_bn1_b'] = zeros(bc)
    p['tb2_bn2_g'] = ones(bc); p['tb2_bn2_b'] = zeros(bc)
    p['tt_conv_w'] = nrm((Cout, bc)); p['tt_conv_b'] = nrm((bc,), 0.01)
    p['tt_lin_w'] = nrm((T, T)); p['tt_lin_b'] = nrm((T,), 0.01)
    p['tt_bn_g'] = ones(bc); p['tt_bn_b'] = zeros(bc)
    p['tb3_bn_g'] = ones(bc); p['tb3_bn_b'] = zeros(bc)
    p['ts_conv_w'] = nrm((Cout, bc)); p['ts_conv_b'] = nrm((bc,), 0.01)
    p['ts_comb_w'] = nrm((2,)); p['ts_comb_b'] = nrm((1,), 0.01)
    p['tb4_bn_g'] = ones(bc); p['tb4_bn_b'] = zeros(bc)
    # Ske_MixF residual (unit_skip, since Cin != Cout)
    p['skip_w'] = nrm((Cin, Cout)); p['skip_b'] = nrm((Cout,), 0.01)
    p['skip_bn_g'] = ones(Cout); p['skip_bn_b'] = zeros(Cout)
    return p


if __name__ == "__main__":
    N, Cin, Cout, T, V = 2, 3, 40, 8, 25   # Cout must be divisible by 4, 5 and 8
    key = jax.random.PRNGKey(0)
    params = init_params(key, Cin=Cin, Cout=Cout, T=T, V=V)
    x = jax.random.normal(jax.random.fold_in(key, 999), (N, Cin, T, V), dtype=jnp.float32)

    fwd = jax.jit(functools.partial(ske_mixf, p=params))
    out = fwd(x)
    out = jax.block_until_ready(out)
    assert out.shape == (N, Cout, T, V), out.shape
    assert bool(jnp.all(jnp.isfinite(out)))
    print("KERNEL_OK")
</pallas_src>

<mosaic_0001>
module attributes {stable_mosaic.version = 11 : i64} {
  func.func @_fused_linear_kernel(%arg0: i32, %arg1: memref<256x3xf32, #tpu.memory_space<vmem>>, %arg2: memref<3x256xf32, #tpu.memory_space<vmem>>, %arg3: memref<3x256xf32, #tpu.memory_space<vmem>>, %arg4: memref<256x256xf32, #tpu.memory_space<vmem>>) attributes {dimension_semantics = [#tpu.dimension_semantics<parallel>], iteration_bounds = array<i64: 2>, scalar_prefetch = 0 : i64, scratch_operands = 0 : i64, tpu.core_type = #tpu.core_type<tc>, window_params = [{transform_indices = @transform_0, window_bounds = array<i64: 256, 3>}, {pipeline_mode = #tpu.pipeline_mode<synchronous>, transform_indices = @transform_1, window_bounds = array<i64: 3, 256>}, {pipeline_mode = #tpu.pipeline_mode<synchronous>, transform_indices = @transform_2, window_bounds = array<i64: 3, 256>}, {transform_indices = @transform_3, window_bounds = array<i64: 256, 256>}]} {
    %c0 = arith.constant 0 : index
    %c0_0 = arith.constant 0 : index
    %0 = vector.load %arg3[%c0, %c0_0] : memref<3x256xf32, #tpu.memory_space<vmem>>, vector<1x256xf32>
    %c1 = arith.constant 1 : index
    %c0_1 = arith.constant 0 : index
    %1 = vector.load %arg3[%c1, %c0_1] : memref<3x256xf32, #tpu.memory_space<vmem>>, vector<1x256xf32>
    %c2 = arith.constant 2 : index
    %c0_2 = arith.constant 0 : index
    %2 = vector.load %arg3[%c2, %c0_2] : memref<3x256xf32, #tpu.memory_space<vmem>>, vector<1x256xf32>
    %c0_3 = arith.constant 0 : index
    %c0_4 = arith.constant 0 : index
    %3 = vector.load %arg1[%c0_3, %c0_4] : memref<256x3xf32, #tpu.memory_space<vmem>>, vector<256x3xf32>
    %c0_5 = arith.constant 0 : index
    %c0_6 = arith.constant 0 : index
    %4 = vector.load %arg2[%c0_5, %c0_6] : memref<3x256xf32, #tpu.memory_space<vmem>>, vector<3x256xf32>
    %5 = vector.extract_strided_slice %3 {offsets = [0, 0], sizes = [256, 1], strides = [1, 1]} : vector<256x3xf32> to vector<256x1xf32>
    %6 = vector.extract_strided_slice %4 {offsets = [0, 0], sizes = [1, 256], strides = [1, 1]} : vector<3x256xf32> to vector<1x256xf32>
    %7 = vector.broadcast %5 : vector<256x1xf32> to vector<256x256xf32>
    %8 = vector.broadcast %6 : vector<1x256xf32> to vector<256x256xf32>
    %9 = arith.mulf %7, %8 : vector<256x256xf32>
    %10 = vector.extract_strided_slice %3 {offsets = [0, 1], sizes = [256, 1], strides = [1, 1]} : vector<256x3xf32> to vector<256x1xf32>
    %11 = vector.extract_strided_slice %4 {offsets = [1, 0], sizes = [1, 256], strides = [1, 1]} : vector<3x256xf32> to vector<1x256xf32>
    %12 = vector.broadcast %10 : vector<256x1xf32> to vector<256x256xf32>
    %13 = vector.broadcast %11 : vector<1x256xf32> to vector<256x256xf32>
    %14 = arith.mulf %12, %13 : vector<256x256xf32>
    %15 = arith.addf %9, %14 : vector<256x256xf32>
    %16 = vector.extract_strided_slice %3 {offsets = [0, 2], sizes = [256, 1], strides = [1, 1]} : vector<256x3xf32> to vector<256x1xf32>
    %17 = vector.extract_strided_slice %4 {offsets = [2, 0], sizes = [1, 256], strides = [1, 1]} : vector<3x256xf32> to vector<1x256xf32>
    %18 = vector.broadcast %16 : vector<256x1xf32> to vector<256x256xf32>
    %19 = vector.broadcast %17 : vector<1x256xf32> to vector<256x256xf32>
    %20 = arith.mulf %18, %19 : vector<256x256xf32>
    %21 = arith.addf %15, %20 : vector<256x256xf32>
    %22 = vector.broadcast %0 : vector<1x256xf32> to vector<256x256xf32>
    %23 = arith.mulf %21, %22 : vector<256x256xf32>
    %24 = vector.broadcast %1 : vector<1x256xf32> to vector<256x256xf32>
    %25 = arith.addf %23, %24 : vector<256x256xf32>
    %cst = arith.constant 0.000000e+00 : f32
    %26 = vector.broadcast %cst : f32 to vector<1x256xf32>
    %27 = arith.cmpf ogt, %2, %26 : vector<1x256xf32>
    %cst_7 = arith.constant 0.000000e+00 : f32
    %28 = vector.broadcast %cst_7 : f32 to vector<256x256xf32>
    %29 = arith.maximumf %25, %28 : vector<256x256xf32>
    %30 = vector.shape_cast %27 : vector<1x256xi1> to vector<1x256xi1>
    %31 = vector.broadcast %30 : vector<1x256xi1> to vector<256x256xi1>
    %32 = arith.select %31, %29, %25 : vector<256x256xi1>, vector<256x256xf32>
    %c0_8 = arith.constant 0 : index
    %c0_9 = arith.constant 0 : index
    %33 = vector.load %arg4[%c0_8, %c0_9] : memref<256x256xf32, #tpu.memory_space<vmem>>, vector<256x256xf32>
    tpu.vector_store %arg4[%c0_8, %c0_9], %32 {strides = array<i32>} : memref<256x256xf32, #tpu.memory_space<vmem>>, vector<256x256xf32>,
    return
  }
  func.func @transform_0(%arg0: i32) -> (i32, i32) {
    %c0_i32 = arith.constant 0 : i32
    %c0_i32_0 = arith.constant 0 : i32
    return %arg0, %c0_i32 : i32, i32
  }
  func.func @transform_1(%arg0: i32) -> (i32, i32) {
    %c0_i32 = arith.constant 0 : i32
    %c0_i32_0 = arith.constant 0 : i32
    %c0_i32_1 = arith.constant 0 : i32
    return %c0_i32, %c0_i32_0 : i32, i32
  }
  func.func @transform_2(%arg0: i32) -> (i32, i32) {
    %c0_i32 = arith.constant 0 : i32
    %c0_i32_0 = arith.constant 0 : i32
    %c0_i32_1 = arith.constant 0 : i32
    return %c0_i32, %c0_i32_0 : i32, i32
  }
  func.func @transform_3(%arg0: i32) -> (i32, i32) {
    %c0_i32 = arith.constant 0 : i32
    %c0_i32_0 = arith.constant 0 : i32
    return %arg0, %c0_i32 : i32, i32
  }
}

module attributes {stable_mosaic.version = 11 : i64} {
  func.func @_spa_attn_kernel(%arg0: i32, %arg1: memref<1x4x80x75xbf16, #tpu.memory_space<vmem>>, %arg2: memref<1x12x25x25xf32, #tpu.memory_space<vmem>>, %arg3: memref<1x9x25x25xf32, #tpu.memory_space<vmem>>, %arg4: memref<3x25x25xf32, #tpu.memory_space<vmem>>, %arg5: memref<1x4x80x25xf32, #tpu.memory_space<vmem>>) attributes {dimension_semantics = [#tpu.dimension_semantics<parallel>], iteration_bounds = array<i64: 2>, scalar_prefetch = 0 : i64, scratch_operands = 0 : i64, tpu.core_type = #tpu.core_type<tc>, window_params = [{transform_indices = @transform_0, window_bounds = array<i64: 1, 4, 80, 75>}, {transform_indices = @transform_1, window_bounds = array<i64: 1, 12, 25, 25>}, {transform_indices = @transform_2, window_bounds = array<i64: 1, 9, 25, 25>}, {pipeline_mode = #tpu.pipeline_mode<synchronous>, transform_indices = @transform_3, window_bounds = array<i64: 3, 25, 25>}, {transform_indices = @transform_4, window_bounds = array<i64: 1, 4, 80, 25>}]} {
    %c0 = arith.constant 0 : index
    %c0_0 = arith.constant 0 : index
    %c0_1 = arith.constant 0 : index
    %c0_2 = arith.constant 0 : index
    %0 = vector.load %arg3[%c0, %c0_0, %c0_1, %c0_2] : memref<1x9x25x25xf32, #tpu.memory_space<vmem>>, vector<1x1x25x25xf32>
    %1 = vector.shape_cast %0 : vector<1x1x25x25xf32> to vector<25x25xf32>
    %cst = arith.constant dense<0xFF800000> : vector<25xf32>
    %2 = vector.multi_reduction <maximumf>, %1, %cst [1] : vector<25x25xf32> to vector<25xf32>
    %3 = vector.shape_cast %2 : vector<25xf32> to vector<25x1xf32>
    %4 = vector.broadcast %3 : vector<25x1xf32> to vector<25x25xf32>
    %5 = arith.subf %1, %4 : vector<25x25xf32>
    %6 = math.exp %5 : vector<25x25xf32>
    %cst_3 = arith.constant dense<0.000000e+00> : vector<25xf32>
    %7 = vector.multi_reduction <add>, %6, %cst_3 [1] : vector<25x25xf32> to vector<25xf32>
    %8 = vector.shape_cast %7 : vector<25xf32> to vector<25x1xf32>
    %9 = vector.broadcast %8 : vector<25x1xf32> to vector<25x25xf32>
    %10 = arith.divf %6, %9 : vector<25x25xf32>
    %c0_4 = arith.constant 0 : index
    %c1 = arith.constant 1 : index
    %c0_5 = arith.constant 0 : index
    %c0_6 = arith.constant 0 : index
    %11 = vector.load %arg3[%c0_4, %c1, %c0_5, %c0_6] : memref<1x9x25x25xf32, #tpu.memory_space<vmem>>, vector<1x1x25x25xf32>
    %12 = vector.shape_cast %11 : vector<1x1x25x25xf32> to vector<25x25xf32>
    %cst_7 = arith.constant dense<0xFF800000> : vector<25xf32>
    %13 = vector.multi_reduction <maximumf>, %12, %cst_7 [1] : vector<25x25xf32> to vector<25xf32>
    %14 = vector.shape_cast %13 : vector<25xf32> to vector<25x1xf32>
    %15 = vector.broadcast %14 : vector<25x1xf32> to vector<25x25xf32>
    %16 = arith.subf %12, %15 : vector<25x25xf32>
    %17 = math.exp %16 : vector<25x25xf32>
    %cst_8 = arith.constant dense<0.000000e+00> : vector<25xf32>
    %18 = vector.multi_reduction <add>, %17, %cst_8 [1] : vector<25x25xf32> to vector<25xf32>
    %19 = vector.shape_cast %18 : vector<25xf32> to vector<25x1xf32>
    %20 = vector.broadcast %19 : vector<25x1xf32> to vector<25x25xf32>
    %21 = arith.divf %17, %20 : vector<25x25xf32>
    %c0_9 = arith.constant 0 : index
    %c2 = arith.constant 2 : index
    %c0_10 = arith.constant 0 : index
    %c0_11 = arith.constant 0 : index
    %22 = vector.load %arg3[%c0_9, %c2, %c0_10, %c0_11] : memref<1x9x25x25xf32, #tpu.memory_space<vmem>>, vector<1x1x25x25xf32>
    %23 = vector.shape_cast %22 : vector<1x1x25x25xf32> to vector<25x25xf32>
    %cst_12 = arith.constant dense<0xFF800000> : vector<25xf32>
    %24 = vector.multi_reduction <maximumf>, %23, %cst_12 [1] : vector<25x25xf32> to vector<25xf32>
    %25 = vector.shape_cast %24 : vector<25xf32> to vector<25x1xf32>
    %26 = vector.broadcast %25 : vector<25x1xf32> to vector<25x25xf32>
    %27 = arith.subf %23, %26 : vector<25x25xf32>
    %28 = math.exp %27 : vector<25x25xf32>
    %cst_13 = arith.constant dense<0.000000e+00> : vector<25xf32>
    %29 = vector.multi_reduction <add>, %28, %cst_13 [1] : vector<25x25xf32> to vector<25xf32>
    %30 = vector.shape_cast %29 : vector<25xf32> to vector<25x1xf32>
    %31 = vector.broadcast %30 : vector<25x1xf32> to vector<25x25xf32>
    %32 = arith.divf %28, %31 : vector<25x25xf32>
    %c0_14 = arith.constant 0 : index
    %c3 = arith.constant 3 : index
    %c0_15 = arith.constant 0 : index
    %c0_16 = arith.constant 0 : index
    %33 = vector.load %arg3[%c0_14, %c3, %c0_15, %c0_16] : memref<1x9x25x25xf32, #tpu.memory_space<vmem>>, vector<1x1x25x25xf32>
    %34 = vector.shape_cast %33 : vector<1x1x25x25xf32> to vector<25x25xf32>
    %cst_17 = arith.constant dense<0xFF800000> : vector<25xf32>
    %35 = vector.multi_reduction <maximumf>, %34, %cst_17 [1] : vector<25x25xf32> to vector<25xf32>
    %36 = vector.shape_cast %35 : vector<25xf32> to vector<25x1xf32>
    %37 = vector.broadcast %36 : vector<25x1xf32> to vector<25x25xf32>
    %38 = arith.subf %34, %37 : vector<25x25xf32>
    %39 = math.exp %38 : vector<25x25xf32>
    %cst_18 = arith.constant dense<0.000000e+00> : vector<25xf32>
    %40 = vector.multi_reduction <add>, %39, %cst_18 [1] : vector<25x25xf32> to vector<25xf32>
    %41 = vector.shape_cast %40 : vector<25xf32> to vector<25x1xf32>
    %42 = vector.broadcast %41 : vector<25x1xf32> to vector<25x25xf32>
    %43 = arith.divf %39, %42 : vector<25x25xf32>
    %c0_19 = arith.constant 0 : index
    %c4 = arith.constant 4 : index
    %c0_20 = arith.constant 0 : index
    %c0_21 = arith.constant 0 : index
    %44 = vector.load %arg3[%c0_19, %c4, %c0_20, %c0_21] : memref<1x9x25x25xf32, #tpu.memory_space<vmem>>, vector<1x1x25x25xf32>
    %45 = vector.shape_cast %44 : vector<1x1x25x25xf32> to vector<25x25xf32>
    %cst_22 = arith.constant dense<0xFF800000> : vector<25xf32>
    %46 = vector.multi_reduction <maximumf>, %45, %cst_22 [1] : vector<25x25xf32> to vector<25xf32>
    %47 = vector.shape_cast %46 : vector<25xf32> to vector<25x1xf32>
    %48 = vector.broadcast %47 : vector<25x1xf32> to vector<25x25xf32>
    %49 = arith.subf %45, %48 : vector<25x25xf32>
    %50 = math.exp %49 : vector<25x25xf32>
    %cst_23 = arith.constant dense<0.000000e+00> : vector<25xf32>
    %51 = vector.multi_reduction <add>, %50, %cst_23 [1] : vector<25x25xf32> to vector<25xf32>
    %52 = vector.shape_cast %51 : vector<25xf32> to vector<25x1xf32>
    %53 = vector.broadcast %52 : vector<25x1xf32> to vector<25x25xf32>
    %54 = arith.divf %50, %53 : vector<25x25xf32>
    %c0_24 = arith.constant 0 : index
    %c5 = arith.constant 5 : index
    %c0_25 = arith.constant 0 : index
    %c0_26 = arith.constant 0 : index
    %55 = vector.load %arg3[%c0_24, %c5, %c0_25, %c0_26] : memref<1x9x25x25xf32, #tpu.memory_space<vmem>>, vector<1x1x25x25xf32>
    %56 = vector.shape_cast %55 : vector<1x1x25x25xf32> to vector<25x25xf32>
    %cst_27 = arith.constant dense<0xFF800000> : vector<25xf32>
    %57 = vector.multi_reduction <maximumf>, %56, %cst_27 [1] : vector<25x25xf32> to vector<25xf32>
    %58 = vector.shape_cast %57 : vector<25xf32> to vector<25x1xf32>
    %59 = vector.broadcast %58 : vector<25x1xf32> to vector<25x25xf32>
    %60 = arith.subf %56, %59 : vector<25x25xf32>
    %61 = math.exp %60 : vector<25x25xf32>
    %cst_28 = arith.constant dense<0.000000e+00> : vector<25xf32>
    %62 = vector.multi_reduction <add>, %61, %cst_28 [1] : vector<25x25xf32> to vector<25xf32>
    %63 = vector.shape_cast %62 : vector<25xf32> to vector<25x1xf32>
    %64 = vector.broadcast %63 : vector<25x1xf32> to vector<25x25xf32>
    %65 = arith.divf %61, %64 : vector<25x25xf32>
    %c0_29 = arith.constant 0 : index
    %c6 = arith.constant 6 : index
    %c0_30 = arith.constant 0 : index
    %c0_31 = arith.constant 0 : index
    %66 = vector.load %arg3[%c0_29, %c6, %c0_30, %c0_31] : memref<1x9x25x25xf32, #tpu.memory_space<vmem>>, vector<1x1x25x25xf32>
    %67 = vector.shape_cast %66 : vector<1x1x25x25xf32> to vector<25x25xf32>
    %cst_32 = arith.constant dense<0xFF800000> : vector<25xf32>
    %68 = vector.multi_reduction <maximumf>, %67, %cst_32 [1] : vector<25x25xf32> to vector<25xf32>
    %69 = vector.shape_cast %68 : vector<25xf32> to vector<25x1xf32>
    %70 = vector.broadcast %69 : vector<25x1xf32> to vector<25x25xf32>
    %71 = arith.subf %67, %70 : vector<25x25xf32>
    %72 = math.exp %71 : vector<25x25xf32>
    %cst_33 = arith.constant dense<0.000000e+00> : vector<25xf32>
    %73 = vector.multi_reduction <add>, %72, %cst_33 [1] : vector<25x25xf32> to vector<25xf32>
    %74 = vector.shape_cast %73 : vector<25xf32> to vector<25x1xf32>
    %75 = vector.broadcast %74 : vector<25x1xf32> to vector<25x25xf32>
    %76 = arith.divf %72, %75 : vector<25x25xf32>
    %c0_34 = arith.constant 0 : index
    %c7 = arith.constant 7 : index
    %c0_35 = arith.constant 0 : index
    %c0_36 = arith.constant 0 : index
    %77 = vector.load %arg3[%c0_34, %c7, %c0_35, %c0_36] : memref<1x9x25x25xf32, #tpu.memory_space<vmem>>, vector<1x1x25x25xf32>
    %78 = vector.shape_cast %77 : vector<1x1x25x25xf32> to vector<25x25xf32>
    %cst_37 = arith.constant dense<0xFF800000> : vector<25xf32>
    %79 = vector.multi_reduction <maximumf>, %78, %cst_37 [1] : vector<25x25xf32> to vector<25xf32>
    %80 = vector.shape_cast %79 : vector<25xf32> to vector<25x1xf32>
    %81 = vector.broadcast %80 : vector<25x1xf32> to vector<25x25xf32>
    %82 = arith.subf %78, %81 : vector<25x25xf32>
    %83 = math.exp %82 : vector<25x25xf32>
    %cst_38 = arith.constant dense<0.000000e+00> : vector<25xf32>
    %84 = vector.multi_reduction <add>, %83, %cst_38 [1] : vector<25x25xf32> to vector<25xf32>
    %85 = vector.shape_cast %84 : vector<25xf32> to vector<25x1xf32>
    %86 = vector.broadcast %85 : vector<25x1xf32> to vector<25x25xf32>
    %87 = arith.divf %83, %86 : vector<25x25xf32>
    %c0_39 = arith.constant 0 : index
    %c8 = arith.constant 8 : index
    %c0_40 = arith.constant 0 : index
    %c0_41 = arith.constant 0 : index
    %88 = vector.load %arg3[%c0_39, %c8, %c0_40, %c0_41] : memref<1x9x25x25xf32, #tpu.memory_space<vmem>>, vector<1x1x25x25xf32>
    %89 = vector.shape_cast %88 : vector<1x1x25x25xf32> to vector<25x25xf32>
    %cst_42 = arith.constant dense<0xFF800000> : vector<25xf32>
    %90 = vector.multi_reduction <maximumf>, %89, %cst_42 [1] : vector<25x25xf32> to vector<25xf32>
    %91 = vector.shape_cast %90 : vector<25xf32> to vector<25x1xf32>
    %92 = vector.broadcast %91 : vector<25x1xf32> to vector<25x25xf32>
    %93 = arith.subf %89, %92 : vector<25x25xf32>
    %94 = math.exp %93 : vector<25x25xf32>
    %cst_43 = arith.constant dense<0.000000e+00> : vector<25xf32>
    %95 = vector.multi_reduction <add>, %94, %cst_43 [1] : vector<25x25xf32> to vector<25xf32>
    %96 = vector.shape_cast %95 : vector<25xf32> to vector<25x1xf32>
    %97 = vector.broadcast %96 : vector<25x1xf32> to vector<25x25xf32>
    %98 = arith.divf %94, %97 : vector<25x25xf32>
    %c0_44 = arith.constant 0 : index
    %c0_45 = arith.constant 0 : index
    %c0_46 = arith.constant 0 : index
    %c0_47 = arith.constant 0 : index
    %99 = vector.load %arg2[%c0_44, %c0_45, %c0_46, %c0_47] : memref<1x12x25x25xf32, #tpu.memory_space<vmem>>, vector<1x1x25x25xf32>
    %100 = vector.shape_cast %99 : vector<1x1x25x25xf32> to vector<25x25xf32>
    %cst_48 = arith.constant dense<0xFF800000> : vector<25xf32>
    %101 = vector.multi_reduction <maximumf>, %100, %cst_48 [1] : vector<25x25xf32> to vector<25xf32>
    %102 = vector.shape_cast %101 : vector<25xf32> to vector<25x1xf32>
    %103 = vector.broadcast %102 : vector<25x1xf32> to vector<25x25xf32>
    %104 = arith.subf %100, %103 : vector<25x25xf32>
    %105 = math.exp %104 : vector<25x25xf32>
    %cst_49 = arith.constant dense<0.000000e+00> : vector<25xf32>
    %106 = vector.multi_reduction <add>, %105, %cst_49 [1] : vector<25x25xf32> to vector<25xf32>
    %107 = vector.shape_cast %106 : vector<25xf32> to vector<25x1xf32>
    %108 = vector.broadcast %107 : vector<25x1xf32> to vector<25x25xf32>
    %109 = arith.divf %105, %108 : vector<25x25xf32>
    %cst_50 = arith.constant 2.500000e-01 : f32
    %110 = vector.broadcast %cst_50 : f32 to vector<25x25xf32>
    %111 = arith.mulf %110, %109 : vector<25x25xf32>
    %c0_51 = arith.constant 0 : index
    %c0_52 = arith.constant 0 : index
    %c0_53 = arith.constant 0 : index
    %112 = vector.load %arg4[%c0_51, %c0_52, %c0_53] : memref<3x25x25xf32, #tpu.memory_space<vmem>>, vector<1x25x25xf32>
    %113 = vector.shape_cast %112 : vector<1x25x25xf32> to vector<25x25xf32>
    %114 = arith.addf %111, %113 : vector<25x25xf32>
    %cst_54 = arith.constant 1.250000e-01 : f32
    %115 = vector.broadcast %cst_54 : f32 to vector<25x25xf32>
    %116 = arith.mulf %115, %10 : vector<25x25xf32>
    %117 = arith.addf %114, %116 : vector<25x25xf32>
    %c0_55 = arith.constant 0 : index
    %c4_56 = arith.constant 4 : index
    %c0_57 = arith.constant 0 : index
    %c0_58 = arith.constant 0 : index
    %118 = vector.load %arg2[%c0_55, %c4_56, %c0_57, %c0_58] : memref<1x12x25x25xf32, #tpu.memory_space<vmem>>, vector<1x1x25x25xf32>
    %119 = vector.shape_cast %118 : vector<1x1x25x25xf32> to vector<25x25xf32>
    %cst_59 = arith.constant dense<0xFF800000> : vector<25xf32>
    %120 = vector.multi_reduction <maximumf>, %119, %cst_59 [1] : vector<25x25xf32> to vector<25xf32>
    %121 = vector.shape_cast %120 : vector<25xf32> to vector<25x1xf32>
    %122 = vector.broadcast %121 : vector<25x1xf32> to vector<25x25xf32>
    %123 = arith.subf %119, %122 : vector<25x25xf32>
    %124 = math.exp %123 : vector<25x25xf32>
    %cst_60 = arith.constant dense<0.000000e+00> : vector<25xf32>
    %125 = vector.multi_reduction <add>, %124, %cst_60 [1] : vector<25x25xf32> to vector<25xf32>
    %126 = vector.shape_cast %125 : vector<25xf32> to vector<25x1xf32>
    %127 = vector.broadcast %126 : vector<25x1xf32> to vector<25x25xf32>
    %128 = arith.divf %124, %127 : vector<25x25xf32>
    %cst_61 = arith.constant 2.500000e-01 : f32
    %129 = vector.broadcast %cst_61 : f32 to vector<25x25xf32>
    %130 = arith.mulf %129, %128 : vector<25x25xf32>
    %c1_62 = arith.constant 1 : index
    %c0_63 = arith.constant 0 : index
    %c0_64 = arith.constant 0 : index
    %131 = vector.load %arg4[%c1_62, %c0_63, %c0_64] : memref<3x25x25xf32, #tpu.memory_space<vmem>>, vector<1x25x25xf32>
    %132 = vector.shape_cast %131 : vector<1x25x25xf32> to vector<25x25xf32>
    %133 = arith.addf %130, %132 : vector<25x25xf32>
    %cst_65 = arith.constant 1.250000e-01 : f32
    %134 = vector.broadcast %cst_65 : f32 to vector<25x25xf32>
    %135 = arith.mulf %134, %43 : vector<25x25xf32>
    %136 = arith.addf %133, %135 : vector<25x25xf32>
    %c0_66 = arith.constant 0 : index
    %c8_67 = arith.constant 8 : index
    %c0_68 = arith.constant 0 : index
    %c0_69 = arith.constant 0 : index
    %137 = vector.load %arg2[%c0_66, %c8_67, %c0_68, %c0_69] : memref<1x12x25x25xf32, #tpu.memory_space<vmem>>, vector<1x1x25x25xf32>
    %138 = vector.shape_cast %137 : vector<1x1x25x25xf32> to vector<25x25xf32>
    %cst_70 = arith.constant dense<0xFF800000> : vector<25xf32>
    %139 = vector.multi_reduction <maximumf>, %138, %cst_70 [1] : vector<25x25xf32> to vector<25xf32>
    %140 = vector.shape_cast %139 : vector<25xf32> to vector<25x1xf32>
    %141 = vector.broadcast %140 : vector<25x1xf32> to vector<25x25xf32>
    %142 = arith.subf %138, %141 : vector<25x25xf32>
    %143 = math.exp %142 : vector<25x25xf32>
    %cst_71 = arith.constant dense<0.000000e+00> : vector<25xf32>
    %144 = vector.multi_reduction <add>, %143, %cst_71 [1] : vector<25x25xf32> to vector<25xf32>
    %145 = vector.shape_cast %144 : vector<25xf32> to vector<25x1xf32>
    %146 = vector.broadcast %145 : vector<25x1xf32> to vector<25x25xf32>
    %147 = arith.divf %143, %146 : vector<25x25xf32>
    %cst_72 = arith.constant 2.500000e-01 : f32
    %148 = vector.broadcast %cst_72 : f32 to vector<25x25xf32>
    %149 = arith.mulf %148, %147 : vector<25x25xf32>
    %c2_73 = arith.constant 2 : index
    %c0_74 = arith.constant 0 : index
    %c0_75 = arith.constant 0 : index
    %150 = vector.load %arg4[%c2_73, %c0_74, %c0_75] : memref<3x25x25xf32, #tpu.memory_space<vmem>>, vector<1x25x25xf32>
    %151 = vector.shape_cast %150 : vector<1x25x25xf32> to vector<25x25xf32>
    %152 = arith.addf %149, %151 : vector<25x25xf32>
    %cst_76 = arith.constant 1.250000e-01 : f32
    %153 = vector.broadcast %cst_76 : f32 to vector<25x25xf32>
    %154 = arith.mulf %153, %76 : vector<25x25xf32>
    %155 = arith.addf %152, %154 : vector<25x25xf32>
    %156 = tpu.concatenate %117, %136, %155 in 0 : vector<25x25xf32>, vector<25x25xf32>, vector<25x25xf32> -> vector<75x25xf32>
    %157 = arith.truncf %156 : vector<75x25xf32> to vector<75x25xbf16>
    %c0_77 = arith.constant 0 : index
    %c0_78 = arith.constant 0 : index
    %c0_79 = arith.constant 0 : index
    %c0_80 = arith.constant 0 : index
    %158 = vector.load %arg1[%c0_77, %c0_78, %c0_79, %c0_80] : memref<1x4x80x75xbf16, #tpu.memory_space<vmem>>, vector<1x1x80x75xbf16>
    %159 = vector.shape_cast %158 : vector<1x1x80x75xbf16> to vector<80x75xbf16>
    %cst_81 = arith.constant dense<0.000000e+00> : vector<80x25xf32>
    %160 = tpu.matmul %159, %157, %cst_81 {dimension_numbers = #tpu.dot_dimension_numbers<[1], [0], [0], [1], [0, 0, 1, 1], [], []>} : vector<80x75xbf16>, vector<75x25xbf16>, vector<80x25xf32> -> vector<80x25xf32>
    %c0_82 = arith.constant 0 : index
    %c0_83 = arith.constant 0 : index
    %c0_84 = arith.constant 0 : index
    %c0_85 = arith.constant 0 : index
    %161 = vector.load %arg5[%c0_82, %c0_83, %c0_84, %c0_85] : memref<1x4x80x25xf32, #tpu.memory_space<vmem>>, vector<1x1x80x25xf32>
    %162 = vector.shape_cast %161 : vector<1x1x80x25xf32> to vector<80x25xf32>
    %163 = vector.shape_cast %160 : vector<80x25xf32> to vector<1x1x80x25xf32>
    tpu.vector_store %arg5[%c0_82, %c0_83, %c0_84, %c0_85], %163 {strides = array<i32>} : memref<1x4x80x25xf32, #tpu.memory_space<vmem>>, vector<1x1x80x25xf32>,
    %c0_86 = arith.constant 0 : index
    %c1_87 = arith.constant 1 : index
    %c0_88 = arith.constant 0 : index
    %c0_89 = arith.constant 0 : index
    %164 = vector.load %arg2[%c0_86, %c1_87, %c0_88, %c0_89] : memref<1x12x25x25xf32, #tpu.memory_space<vmem>>, vector<1x1x25x25xf32>
    %165 = vector.shape_cast %164 : vector<1x1x25x25xf32> to vector<25x25xf32>
    %cst_90 = arith.constant dense<0xFF800000> : vector<25xf32>
    %166 = vector.multi_reduction <maximumf>, %165, %cst_90 [1] : vector<25x25xf32> to vector<25xf32>
    %167 = vector.shape_cast %166 : vector<25xf32> to vector<25x1xf32>
    %168 = vector.broadcast %167 : vector<25x1xf32> to vector<25x25xf32>
    %169 = arith.subf %165, %168 : vector<25x25xf32>
    %170 = math.exp %169 : vector<25x25xf32>
    %cst_91 = arith.constant dense<0.000000e+00> : vector<25xf32>
    %171 = vector.multi_reduction <add>, %170, %cst_91 [1] : vector<25x25xf32> to vector<25xf32>
    %172 = vector.shape_cast %171 : vector<25xf32> to vector<25x1xf32>
    %173 = vector.broadcast %172 : vector<25x1xf32> to vector<25x25xf32>
    %174 = arith.divf %170, %173 : vector<25x25xf32>
    %cst_92 = arith.constant 2.500000e-01 : f32
    %175 = vector.broadcast %cst_92 : f32 to vector<25x25xf32>
    %176 = arith.mulf %175, %174 : vector<25x25xf32>
    %c0_93 = arith.constant 0 : index
    %c0_94 = arith.constant 0 : index
    %c0_95 = arith.constant 0 : index
    %177 = vector.load %arg4[%c0_93, %c0_94, %c0_95] : memref<3x25x25xf32, #tpu.memory_space<vmem>>, vector<1x25x25xf32>
    %178 = vector.shape_cast %177 : vector<1x25x25xf32> to vector<25x25xf32>
    %179 = arith.addf %176, %178 : vector<25x25xf32>
    %cst_96 = arith.constant 1.250000e-01 : f32
    %180 = vector.broadcast %cst_96 : f32 to vector<25x25xf32>
    %181 = arith.mulf %180, %10 : vector<25x25xf32>
    %182 = arith.addf %179, %181 : vector<25x25xf32>
    %cst_97 = arith.constant 1.250000e-01 : f32
    %183 = vector.broadcast %cst_97 : f32 to vector<25x25xf32>
    %184 = arith.mulf %183, %21 : vector<25x25xf32>
    %185 = arith.addf %182, %184 : vector<25x25xf32>
    %c0_98 = arith.constant 0 : index
    %c5_99 = arith.constant 5 : index
    %c0_100 = arith.constant 0 : index
    %c0_101 = arith.constant 0 : index
    %186 = vector.load %arg2[%c0_98, %c5_99, %c0_100, %c0_101] : memref<1x12x25x25xf32, #tpu.memory_space<vmem>>, vector<1x1x25x25xf32>
    %187 = vector.shape_cast %186 : vector<1x1x25x25xf32> to vector<25x25xf32>
    %cst_102 = arith.constant dense<0xFF800000> : vector<25xf32>
    %188 = vector.multi_reduction <maximumf>, %187, %cst_102 [1] : vector<25x25xf32> to vector<25xf32>
    %189 = vector.shape_cast %188 : vector<25xf32> to vector<25x1xf32>
    %190 = vector.broadcast %189 : vector<25x1xf32> to vector<25x25xf32>
    %191 = arith.subf %187, %190 : vector<25x25xf32>
    %192 = math.exp %191 : vector<25x25xf32>
    %cst_103 = arith.constant dense<0.000000e+00> : vector<25xf32>
    %193 = vector.multi_reduction <add>, %192, %cst_103 [1] : vector<25x25xf32> to vector<25xf32>
    %194 = vector.shape_cast %193 : vector<25xf32> to vector<25x1xf32>
    %195 = vector.broadcast %194 : vector<25x1xf32> to vector<25x25xf32>
    %196 = arith.divf %192, %195 : vector<25x25xf32>
    %cst_104 = arith.constant 2.500000e-01 : f32
    %197 = vector.broadcast %cst_104 : f32 to vector<25x25xf32>
    %198 = arith.mulf %197, %196 : vector<25x25xf32>
    %c1_105 = arith.constant 1 : index
    %c0_106 = arith.constant 0 : index
    %c0_107 = arith.constant 0 : index
    %199 = vector.load %arg4[%c1_105, %c0_106, %c0_107] : memref<3x25x25xf32, #tpu.memory_space<vmem>>, vector<1x25x25xf32>
    %200 = vector.shape_cast %199 : vector<1x25x25xf32> to vector<25x25xf32>
    %201 = arith.addf %198, %200 : vector<25x25xf32>
    %cst_108 = arith.constant 1.250000e-01 : f32
    %202 = vector.broadcast %cst_108 : f32 to vector<25x25xf32>
    %203 = arith.mulf %202, %43 : vector<25x25xf32>
    %204 = arith.addf %201, %203 : vector<25x25xf32>
    %cst_109 = arith.constant 1.250000e-01 : f32
    %205 = vector.broadcast %cst_109 : f32 to vector<25x25xf32>
    %206 = arith.mulf %205, %54 : vector<25x25xf32>
    %207 = arith.addf %204, %206 : vector<25x25xf32>
    %c0_110 = arith.constant 0 : index
    %c9 = arith.constant 9 : index
    %c0_111 = arith.constant 0 : index
    %c0_112 = arith.constant 0 : index
    %208 = vector.load %arg2[%c0_110, %c9, %c0_111, %c0_112] : memref<1x12x25x25xf32, #tpu.memory_space<vmem>>, vector<1x1x25x25xf32>
    %209 = vector.shape_cast %208 : vector<1x1x25x25xf32> to vector<25x25xf32>
    %cst_113 = arith.constant dense<0xFF800000> : vector<25xf32>
    %210 = vector.multi_reduction <maximumf>, %209, %cst_113 [1] : vector<25x25xf32> to vector<25xf32>
    %211 = vector.shape_cast %210 : vector<25xf32> to vector<25x1xf32>
    %212 = vector.broadcast %211 : vector<25x1xf32> to vector<25x25xf32>
    %213 = arith.subf %209, %212 : vector<25x25xf32>
    %214 = math.exp %213 : vector<25x25xf32>
    %cst_114 = arith.constant dense<0.000000e+00> : vector<25xf32>
    %215 = vector.multi_reduction <add>, %214, %cst_114 [1] : vector<25x25xf32> to vector<25xf32>
    %216 = vector.shape_cast %215 : vector<25xf32> to vector<25x1xf32>
    %217 = vector.broadcast %216 : vector<25x1xf32> to vector<25x25xf32>
    %218 = arith.divf %214, %217 : vector<25x25xf32>
    %cst_115 = arith.constant 2.500000e-01 : f32
    %219 = vector.broadcast %cst_115 : f32 to vector<25x25xf32>
    %220 = arith.mulf %219, %218 : vector<25x25xf32>
    %c2_116 = arith.constant 2 : index
    %c0_117 = arith.constant 0 : index
    %c0_118 = arith.constant 0 : index
    %221 = vector.load %arg4[%c2_116, %c0_117, %c0_118] : memref<3x25x25xf32, #tpu.memory_space<vmem>>, vector<1x25x25xf32>
    %222 = vector.shape_cast %221 : vector<1x25x25xf32> to vector<25x25xf32>
    %223 = arith.addf %220, %222 : vector<25x25xf32>
    %cst_119 = arith.constant 1.250000e-01 : f32
    %224 = vector.broadcast %cst_119 : f32 to vector<25x25xf32>
    %225 = arith.mulf %224, %76 : vector<25x25xf32>
    %226 = arith.addf %223, %225 : vector<25x25xf32>
    %cst_120 = arith.constant 1.250000e-01 : f32
    %227 = vector.broadcast %cst_120 : f32 to vector<25x25xf32>
    %228 = arith.mulf %227, %87 : vector<25x25xf32>
    %229 = arith.addf %226, %228 : vector<25x25xf32>
    %230 = tpu.concatenate %185, %207, %229 in 0 : vector<25x25xf32>, vector<25x25xf32>, vector<25x25xf32> -> vector<75x25xf32>
    %231 = arith.truncf %230 : vector<75x25xf32> to vector<75x25xbf16>
    %c0_121 = arith.constant 0 : index
    %c1_122 = arith.constant 1 : index
    %c0_123 = arith.constant 0 : index
    %c0_124 = arith.constant 0 : index
    %232 = vector.load %arg1[%c0_121, %c1_122, %c0_123, %c0_124] : memref<1x4x80x75xbf16, #tpu.memory_space<vmem>>, vector<1x1x80x75xbf16>
    %233 = vector.shape_cast %232 : vector<1x1x80x75xbf16> to vector<80x75xbf16>
    %cst_125 = arith.constant dense<0.000000e+00> : vector<80x25xf32>
    %234 = tpu.matmul %233, %231, %cst_125 {dimension_numbers = #tpu.dot_dimension_numbers<[1], [0], [0], [1], [0, 0, 1, 1], [], []>} : vector<80x75xbf16>, vector<75x25xbf16>, vector<80x25xf32> -> vector<80x25xf32>
    %c0_126 = arith.constant 0 : index
    %c1_127 = arith.constant 1 : index
    %c0_128 = arith.constant 0 : index
    %c0_129 = arith.constant 0 : index
    %235 = vector.load %arg5[%c0_126, %c1_127, %c0_128, %c0_129] : memref<1x4x80x25xf32, #tpu.memory_space<vmem>>, vector<1x1x80x25xf32>
    %236 = vector.shape_cast %235 : vector<1x1x80x25xf32> to vector<80x25xf32>
    %237 = vector.shape_cast %234 : vector<80x25xf32> to vector<1x1x80x25xf32>
    tpu.vector_store %arg5[%c0_126, %c1_127, %c0_128, %c0_129], %237 {strides = array<i32>} : memref<1x4x80x25xf32, #tpu.memory_space<vmem>>, vector<1x1x80x25xf32>,
    %c0_130 = arith.constant 0 : index
    %c2_131 = arith.constant 2 : index
    %c0_132 = arith.constant 0 : index
    %c0_133 = arith.constant 0 : index
    %238 = vector.load %arg2[%c0_130, %c2_131, %c0_132, %c0_133] : memref<1x12x25x25xf32, #tpu.memory_space<vmem>>, vector<1x1x25x25xf32>
    %239 = vector.shape_cast %238 : vector<1x1x25x25xf32> to vector<25x25xf32>
    %cst_134 = arith.constant dense<0xFF800000> : vector<25xf32>
    %240 = vector.multi_reduction <maximumf>, %239, %cst_134 [1] : vector<25x25xf32> to vector<25xf32>
    %241 = vector.shape_cast %240 : vector<25xf32> to vector<25x1xf32>
    %242 = vector.broadcast %241 : vector<25x1xf32> to vector<25x25xf32>
    %243 = arith.subf %239, %242 : vector<25x25xf32>
    %244 = math.exp %243 : vector<25x25xf32>
    %cst_135 = arith.constant dense<0.000000e+00> : vector<25xf32>
    %245 = vector.multi_reduction <add>, %244, %cst_135 [1] : vector<25x25xf32> to vector<25xf32>
    %246 = vector.shape_cast %245 : vector<25xf32> to vector<25x1xf32>
    %247 = vector.broadcast %246 : vector<25x1xf32> to vector<25x25xf32>
    %248 = arith.divf %244, %247 : vector<25x25xf32>
    %cst_136 = arith.constant 2.500000e-01 : f32
    %249 = vector.broadcast %cst_136 : f32 to vector<25x25xf32>
    %250 = arith.mulf %249, %248 : vector<25x25xf32>
    %c0_137 = arith.constant 0 : index
    %c0_138 = arith.constant 0 : index
    %c0_139 = arith.constant 0 : index
    %251 = vector.load %arg4[%c0_137, %c0_138, %c0_139] : memref<3x25x25xf32, #tpu.memory_space<vmem>>, vector<1x25x25xf32>
    %252 = vector.shape_cast %251 : vector<1x25x25xf32> to vector<25x25xf32>
    %253 = arith.addf %250, %252 : vector<25x25xf32>
    %cst_140 = arith.constant 1.250000e-01 : f32
    %254 = vector.broadcast %cst_140 : f32 to vector<25x25xf32>
    %255 = arith.mulf %254, %21 : vector<25x25xf32>
    %256 = arith.addf %253, %255 : vector<25x25xf32>
    %cst_141 = arith.constant 1.250000e-01 : f32
    %257 = vector.broadcast %cst_141 : f32 to vector<25x25xf32>
    %258 = arith.mulf %257, %32 : vector<25x25xf32>
    %259 = arith.addf %256, %258 : vector<25x25xf32>
    %c0_142 = arith.constant 0 : index
    %c6_143 = arith.constant 6 : index
    %c0_144 = arith.constant 0 : index
    %c0_145 = arith.constant 0 : index
    %260 = vector.load %arg2[%c0_142, %c6_143, %c0_144, %c0_145] : memref<1x12x25x25xf32, #tpu.memory_space<vmem>>, vector<1x1x25x25xf32>
    %261 = vector.shape_cast %260 : vector<1x1x25x25xf32> to vector<25x25xf32>
    %cst_146 = arith.constant dense<0xFF800000> : vector<25xf32>
    %262 = vector.multi_reduction <maximumf>, %261, %cst_146 [1] : vector<25x25xf32> to vector<25xf32>
    %263 = vector.shape_cast %262 : vector<25xf32> to vector<25x1xf32>
    %264 = vector.broadcast %263 : vector<25x1xf32> to vector<25x25xf32>
    %265 = arith.subf %261, %264 : vector<25x25xf32>
    %266 = math.exp %265 : vector<25x25xf32>
    %cst_147 = arith.constant dense<0.000000e+00> : vector<25xf32>
    %267 = vector.multi_reduction <add>, %266, %cst_147 [1] : vector<25x25xf32> to vector<25xf32>
    %268 = vector.shape_cast %267 : vector<25xf32> to vector<25x1xf32>
    %269 = vector.broadcast %268 : vector<25x1xf32> to vector<25x25xf32>
    %270 = arith.divf %266, %269 : vector<25x25xf32>
    %cst_148 = arith.constant 2.500000e-01 : f32
    %271 = vector.broadcast %cst_148 : f32 to vector<25x25xf32>
    %272 = arith.mulf %271, %270 : vector<25x25xf32>
    %c1_149 = arith.constant 1 : index
    %c0_150 = arith.constant 0 : index
    %c0_151 = arith.constant 0 : index
    %273 = vector.load %arg4[%c1_149, %c0_150, %c0_151] : memref<3x25x25xf32, #tpu.memory_space<vmem>>, vector<1x25x25xf32>
    %274 = vector.shape_cast %273 : vector<1x25x25xf32> to vector<25x25xf32>
    %275 = arith.addf %272, %274 : vector<25x25xf32>
    %cst_152 = arith.constant 1.250000e-01 : f32
    %276 = vector.broadcast %cst_152 : f32 to vector<25x25xf32>
    %277 = arith.mulf %276, %54 : vector<25x25xf32>
    %278 = arith.addf %275, %277 : vector<25x25xf32>
    %cst_153 = arith.constant 1.250000e-01 : f32
    %279 = vector.broadcast %cst_153 : f32 to vector<25x25xf32>
    %280 = arith.mulf %279, %65 : vector<25x25xf32>
    %281 = arith.addf %278, %280 : vector<25x25xf32>
    %c0_154 = arith.constant 0 : index
    %c10 = arith.constant 10 : index
    %c0_155 = arith.constant 0 : index
    %c0_156 = arith.constant 0 : index
    %282 = vector.load %arg2[%c0_154, %c10, %c0_155, %c0_156] : memref<1x12x25x25xf32, #tpu.memory_space<vmem>>, vector<1x1x25x25xf32>
    %283 = vector.shape_cast %282 : vector<1x1x25x25xf32> to vector<25x25xf32>
    %cst_157 = arith.constant dense<0xFF800000> : vector<25xf32>
    %284 = vector.multi_reduction <maximumf>, %283, %cst_157 [1] : vector<25x25xf32> to vector<25xf32>
    %285 = vector.shape_cast %284 : vector<25xf32> to vector<25x1xf32>
    %286 = vector.broadcast %285 : vector<25x1xf32> to vector<25x25xf32>
    %287 = arith.subf %283, %286 : vector<25x25xf32>
    %288 = math.exp %287 : vector<25x25xf32>
    %cst_158 = arith.constant dense<0.000000e+00> : vector<25xf32>
    %289 = vector.multi_reduction <add>, %288, %cst_158 [1] : vector<25x25xf32> to vector<25xf32>
    %290 = vector.shape_cast %289 : vector<25xf32> to vector<25x1xf32>
    %291 = vector.broadcast %290 : vector<25x1xf32> to vector<25x25xf32>
    %292 = arith.divf %288, %291 : vector<25x25xf32>
    %cst_159 = arith.constant 2.500000e-01 : f32
    %293 = vector.broadcast %cst_159 : f32 to vector<25x25xf32>
    %294 = arith.mulf %293, %292 : vector<25x25xf32>
    %c2_160 = arith.constant 2 : index
    %c0_161 = arith.constant 0 : index
    %c0_162 = arith.constant 0 : index
    %295 = vector.load %arg4[%c2_160, %c0_161, %c0_162] : memref<3x25x25xf32, #tpu.memory_space<vmem>>, vector<1x25x25xf32>
    %296 = vector.shape_cast %295 : vector<1x25x25xf32> to vector<25x25xf32>
    %297 = arith.addf %294, %296 : vector<25x25xf32>
    %cst_163 = arith.constant 1.250000e-01 : f32
    %298 = vector.broadcast %cst_163 : f32 to vector<25x25xf32>
    %299 = arith.mulf %298, %87 : vector<25x25xf32>
    %300 = arith.addf %297, %299 : vector<25x25xf32>
    %cst_164 = arith.constant 1.250000e-01 : f32
    %301 = vector.broadcast %cst_164 : f32 to vector<25x25xf32>
    %302 = arith.mulf %301, %98 : vector<25x25xf32>
    %303 = arith.addf %300, %302 : vector<25x25xf32>
    %304 = tpu.concatenate %259, %281, %303 in 0 : vector<25x25xf32>, vector<25x25xf32>, vector<25x25xf32> -> vector<75x25xf32>
    %305 = arith.truncf %304 : vector<75x25xf32> to vector<75x25xbf16>
    %c0_165 = arith.constant 0 : index
    %c2_166 = arith.constant 2 : index
    %c0_167 = arith.constant 0 : index
    %c0_168 = arith.constant 0 : index
    %306 = vector.load %arg1[%c0_165, %c2_166, %c0_167, %c0_168] : memref<1x4x80x75xbf16, #tpu.memory_space<vmem>>, vector<1x1x80x75xbf16>
    %307 = vector.shape_cast %306 : vector<1x1x80x75xbf16> to vector<80x75xbf16>
    %cst_169 = arith.constant dense<0.000000e+00> : vector<80x25xf32>
    %308 = tpu.matmul %307, %305, %cst_169 {dimension_numbers = #tpu.dot_dimension_numbers<[1], [0], [0], [1], [0, 0, 1, 1], [], []>} : vector<80x75xbf16>, vector<75x25xbf16>, vector<80x25xf32> -> vector<80x25xf32>
    %c0_170 = arith.constant 0 : index
    %c2_171 = arith.constant 2 : index
    %c0_172 = arith.constant 0 : index
    %c0_173 = arith.constant 0 : index
    %309 = vector.load %arg5[%c0_170, %c2_171, %c0_172, %c0_173] : memref<1x4x80x25xf32, #tpu.memory_space<vmem>>, vector<1x1x80x25xf32>
    %310 = vector.shape_cast %309 : vector<1x1x80x25xf32> to vector<80x25xf32>
    %311 = vector.shape_cast %308 : vector<80x25xf32> to vector<1x1x80x25xf32>
    tpu.vector_store %arg5[%c0_170, %c2_171, %c0_172, %c0_173], %311 {strides = array<i32>} : memref<1x4x80x25xf32, #tpu.memory_space<vmem>>, vector<1x1x80x25xf32>,
    %c0_174 = arith.constant 0 : index
    %c3_175 = arith.constant 3 : index
    %c0_176 = arith.constant 0 : index
    %c0_177 = arith.constant 0 : index
    %312 = vector.load %arg2[%c0_174, %c3_175, %c0_176, %c0_177] : memref<1x12x25x25xf32, #tpu.memory_space<vmem>>, vector<1x1x25x25xf32>
    %313 = vector.shape_cast %312 : vector<1x1x25x25xf32> to vector<25x25xf32>
    %cst_178 = arith.constant dense<0xFF800000> : vector<25xf32>
    %314 = vector.multi_reduction <maximumf>, %313, %cst_178 [1] : vector<25x25xf32> to vector<25xf32>
    %315 = vector.shape_cast %314 : vector<25xf32> to vector<25x1xf32>
    %316 = vector.broadcast %315 : vector<25x1xf32> to vector<25x25xf32>
    %317 = arith.subf %313, %316 : vector<25x25xf32>
    %318 = math.exp %317 : vector<25x25xf32>
    %cst_179 = arith.constant dense<0.000000e+00> : vector<25xf32>
    %319 = vector.multi_reduction <add>, %318, %cst_179 [1] : vector<25x25xf32> to vector<25xf32>
    %320 = vector.shape_cast %319 : vector<25xf32> to vector<25x1xf32>
    %321 = vector.broadcast %320 : vector<25x1xf32> to vector<25x25xf32>
    %322 = arith.divf %318, %321 : vector<25x25xf32>
    %cst_180 = arith.constant 2.500000e-01 : f32
    %323 = vector.broadcast %cst_180 : f32 to vector<25x25xf32>
    %324 = arith.mulf %323, %322 : vector<25x25xf32>
    %c0_181 = arith.constant 0 : index
    %c0_182 = arith.constant 0 : index
    %c0_183 = arith.constant 0 : index
    %325 = vector.load %arg4[%c0_181, %c0_182, %c0_183] : memref<3x25x25xf32, #tpu.memory_space<vmem>>, vector<1x25x25xf32>
    %326 = vector.shape_cast %325 : vector<1x25x25xf32> to vector<25x25xf32>
    %327 = arith.addf %324, %326 : vector<25x25xf32>
    %cst_184 = arith.constant 1.250000e-01 : f32
    %328 = vector.broadcast %cst_184 : f32 to vector<25x25xf32>
    %329 = arith.mulf %328, %32 : vector<25x25xf32>
    %330 = arith.addf %327, %329 : vector<25x25xf32>
    %c0_185 = arith.constant 0 : index
    %c7_186 = arith.constant 7 : index
    %c0_187 = arith.constant 0 : index
    %c0_188 = arith.constant 0 : index
    %331 = vector.load %arg2[%c0_185, %c7_186, %c0_187, %c0_188] : memref<1x12x25x25xf32, #tpu.memory_space<vmem>>, vector<1x1x25x25xf32>
    %332 = vector.shape_cast %331 : vector<1x1x25x25xf32> to vector<25x25xf32>
    %cst_189 = arith.constant dense<0xFF800000> : vector<25xf32>
    %333 = vector.multi_reduction <maximumf>, %332, %cst_189 [1] : vector<25x25xf32> to vector<25xf32>
    %334 = vector.shape_cast %333 : vector<25xf32> to vector<25x1xf32>
    %335 = vector.broadcast %334 : vector<25x1xf32> to vector<25x25xf32>
    %336 = arith.subf %332, %335 : vector<25x25xf32>
    %337 = math.exp %336 : vector<25x25xf32>
    %cst_190 = arith.constant dense<0.000000e+00> : vector<25xf32>
    %338 = vector.multi_reduction <add>, %337, %cst_190 [1] : vector<25x25xf32> to vector<25xf32>
    %339 = vector.shape_cast %338 : vector<25xf32> to vector<25x1xf32>
    %340 = vector.broadcast %339 : vector<25x1xf32> to vector<25x25xf32>
    %341 = arith.divf %337, %340 : vector<25x25xf32>
    %cst_191 = arith.constant 2.500000e-01 : f32
    %342 = vector.broadcast %cst_191 : f32 to vector<25x25xf32>
    %343 = arith.mulf %342, %341 : vector<25x25xf32>
    %c1_192 = arith.constant 1 : index
    %c0_193 = arith.constant 0 : index
    %c0_194 = arith.constant 0 : index
    %344 = vector.load %arg4[%c1_192, %c0_193, %c0_194] : memref<3x25x25xf32, #tpu.memory_space<vmem>>, vector<1x25x25xf32>
    %345 = vector.shape_cast %344 : vector<1x25x25xf32> to vector<25x25xf32>
    %346 = arith.addf %343, %345 : vector<25x25xf32>
    %cst_195 = arith.constant 1.250000e-01 : f32
    %347 = vector.broadcast %cst_195 : f32 to vector<25x25xf32>
    %348 = arith.mulf %347, %65 : vector<25x25xf32>
    %349 = arith.addf %346, %348 : vector<25x25xf32>
    %c0_196 = arith.constant 0 : index
    %c11 = arith.constant 11 : index
    %c0_197 = arith.constant 0 : index
    %c0_198 = arith.constant 0 : index
    %350 = vector.load %arg2[%c0_196, %c11, %c0_197, %c0_198] : memref<1x12x25x25xf32, #tpu.memory_space<vmem>>, vector<1x1x25x25xf32>
    %351 = vector.shape_cast %350 : vector<1x1x25x25xf32> to vector<25x25xf32>
    %cst_199 = arith.constant dense<0xFF800000> : vector<25xf32>
    %352 = vector.multi_reduction <maximumf>, %351, %cst_199 [1] : vector<25x25xf32> to vector<25xf32>
    %353 = vector.shape_cast %352 : vector<25xf32> to vector<25x1xf32>
    %354 = vector.broadcast %353 : vector<25x1xf32> to vector<25x25xf32>
    %355 = arith.subf %351, %354 : vector<25x25xf32>
    %356 = math.exp %355 : vector<25x25xf32>
    %cst_200 = arith.constant dense<0.000000e+00> : vector<25xf32>
    %357 = vector.multi_reduction <add>, %356, %cst_200 [1] : vector<25x25xf32> to vector<25xf32>
    %358 = vector.shape_cast %357 : vector<25xf32> to vector<25x1xf32>
    %359 = vector.broadcast %358 : vector<25x1xf32> to vector<25x25xf32>
    %360 = arith.divf %356, %359 : vector<25x25xf32>
    %cst_201 = arith.constant 2.500000e-01 : f32
    %361 = vector.broadcast %cst_201 : f32 to vector<25x25xf32>
    %362 = arith.mulf %361, %360 : vector<25x25xf32>
    %c2_202 = arith.constant 2 : index
    %c0_203 = arith.constant 0 : index
    %c0_204 = arith.constant 0 : index
    %363 = vector.load %arg4[%c2_202, %c0_203, %c0_204] : memref<3x25x25xf32, #tpu.memory_space<vmem>>, vector<1x25x25xf32>
    %364 = vector.shape_cast %363 : vector<1x25x25xf32> to vector<25x25xf32>
    %365 = arith.addf %362, %364 : vector<25x25xf32>
    %cst_205 = arith.constant 1.250000e-01 : f32
    %366 = vector.broadcast %cst_205 : f32 to vector<25x25xf32>
    %367 = arith.mulf %366, %98 : vector<25x25xf32>
    %368 = arith.addf %365, %367 : vector<25x25xf32>
    %369 = tpu.concatenate %330, %349, %368 in 0 : vector<25x25xf32>, vector<25x25xf32>, vector<25x25xf32> -> vector<75x25xf32>
    %370 = arith.truncf %369 : vector<75x25xf32> to vector<75x25xbf16>
    %c0_206 = arith.constant 0 : index
    %c3_207 = arith.constant 3 : index
    %c0_208 = arith.constant 0 : index
    %c0_209 = arith.constant 0 : index
    %371 = vector.load %arg1[%c0_206, %c3_207, %c0_208, %c0_209] : memref<1x4x80x75xbf16, #tpu.memory_space<vmem>>, vector<1x1x80x75xbf16>
    %372 = vector.shape_cast %371 : vector<1x1x80x75xbf16> to vector<80x75xbf16>
    %cst_210 = arith.constant dense<0.000000e+00> : vector<80x25xf32>
    %373 = tpu.matmul %372, %370, %cst_210 {dimension_numbers = #tpu.dot_dimension_numbers<[1], [0], [0], [1], [0, 0, 1, 1], [], []>} : vector<80x75xbf16>, vector<75x25xbf16>, vector<80x25xf32> -> vector<80x25xf32>
    %c0_211 = arith.constant 0 : index
    %c3_212 = arith.constant 3 : index
    %c0_213 = arith.constant 0 : index
    %c0_214 = arith.constant 0 : index
    %374 = vector.load %arg5[%c0_211, %c3_212, %c0_213, %c0_214] : memref<1x4x80x25xf32, #tpu.memory_space<vmem>>, vector<1x1x80x25xf32>
    %375 = vector.shape_cast %374 : vector<1x1x80x25xf32> to vector<80x25xf32>
    %376 = vector.shape_cast %373 : vector<80x25xf32> to vector<1x1x80x25xf32>
    tpu.vector_store %arg5[%c0_211, %c3_212, %c0_213, %c0_214], %376 {strides = array<i32>} : memref<1x4x80x25xf32, #tpu.memory_space<vmem>>, vector<1x1x80x25xf32>,
    return
  }
  func.func @transform_0(%arg0: i32) -> (i32, i32, i32, i32) {
    %c0_i32 = arith.constant 0 : i32
    %c0_i32_0 = arith.constant 0 : i32
    %c0_i32_1 = arith.constant 0 : i32
    %c0_i32_2 = arith.constant 0 : i32
    return %arg0, %c0_i32, %c0_i32_0, %c0_i32_1 : i32, i32, i32, i32
  }
  func.func @transform_1(%arg0: i32) -> (i32, i32, i32, i32) {
    %c0_i32 = arith.constant 0 : i32
    %c0_i32_0 = arith.constant 0 : i32
    %c0_i32_1 = arith.constant 0 : i32
    %c0_i32_2 = arith.constant 0 : i32
    return %arg0, %c0_i32, %c0_i32_0, %c0_i32_1 : i32, i32, i32, i32
  }
  func.func @transform_2(%arg0: i32) -> (i32, i32, i32, i32) {
    %c0_i32 = arith.constant 0 : i32
    %c0_i32_0 = arith.constant 0 : i32
    %c0_i32_1 = arith.constant 0 : i32
    %c0_i32_2 = arith.constant 0 : i32
    return %arg0, %c0_i32, %c0_i32_0, %c0_i32_1 : i32, i32, i32, i32
  }
  func.func @transform_3(%arg0: i32) -> (i32, i32, i32) {
    %c0_i32 = arith.constant 0 : i32
    %c0_i32_0 = arith.constant 0 : i32
    %c0_i32_1 = arith.constant 0 : i32
    %c0_i32_2 = arith.constant 0 : i32
    return %c0_i32, %c0_i32_0, %c0_i32_1 : i32, i32, i32
  }
  func.func @transform_4(%arg0: i32) -> (i32, i32, i32, i32) {
    %c0_i32 = arith.constant 0 : i32
    %c0_i32_0 = arith.constant 0 : i32
    %c0_i32_1 = arith.constant 0 : i32
    %c0_i32_2 = arith.constant 0 : i32
    return %arg0, %c0_i32, %c0_i32_0, %c0_i32_1 : i32, i32, i32, i32
  }
}

module attributes {stable_mosaic.version = 11 : i64} {
  func.func @_fused_linear_kernel(%arg0: i32, %arg1: memref<256x40xbf16, #tpu.memory_space<vmem>>, %arg2: memref<40x128xbf16, #tpu.memory_space<vmem>>, %arg3: memref<3x128xf32, #tpu.memory_space<vmem>>, %arg4: memref<256x128xf32, #tpu.memory_space<vmem>>) attributes {dimension_semantics = [#tpu.dimension_semantics<parallel>], iteration_bounds = array<i64: 2>, scalar_prefetch = 0 : i64, scratch_operands = 0 : i64, tpu.core_type = #tpu.core_type<tc>, window_params = [{transform_indices = @transform_0, window_bounds = array<i64: 256, 40>}, {pipeline_mode = #tpu.pipeline_mode<synchronous>, transform_indices = @transform_1, window_bounds = array<i64: 40, 128>}, {pipeline_mode = #tpu.pipeline_mode<synchronous>, transform_indices = @transform_2, window_bounds = array<i64: 3, 128>}, {transform_indices = @transform_3, window_bounds = array<i64: 256, 128>}]} {
    %c0 = arith.constant 0 : index
    %c0_0 = arith.constant 0 : index
    %0 = vector.load %arg3[%c0, %c0_0] : memref<3x128xf32, #tpu.memory_space<vmem>>, vector<1x128xf32>
    %c1 = arith.constant 1 : index
    %c0_1 = arith.constant 0 : index
    %1 = vector.load %arg3[%c1, %c0_1] : memref<3x128xf32, #tpu.memory_space<vmem>>, vector<1x128xf32>
    %c2 = arith.constant 2 : index
    %c0_2 = arith.constant 0 : index
    %2 = vector.load %arg3[%c2, %c0_2] : memref<3x128xf32, #tpu.memory_space<vmem>>, vector<1x128xf32>
    %c0_3 = arith.constant 0 : index
    %c0_4 = arith.constant 0 : index
    %3 = vector.load %arg1[%c0_3, %c0_4] : memref<256x40xbf16, #tpu.memory_space<vmem>>, vector<256x40xbf16>
    %c0_5 = arith.constant 0 : index
    %c0_6 = arith.constant 0 : index
    %4 = vector.load %arg2[%c0_5, %c0_6] : memref<40x128xbf16, #tpu.memory_space<vmem>>, vector<40x128xbf16>
    %cst = arith.constant dense<0.000000e+00> : vector<256x128xf32>
    %5 = tpu.matmul %3, %4, %cst {dimension_numbers = #tpu.dot_dimension_numbers<[1], [0], [0], [1], [0, 0, 1, 1], [], []>} : vector<256x40xbf16>, vector<40x128xbf16>, vector<256x128xf32> -> vector<256x128xf32>
    %6 = vector.broadcast %0 : vector<1x128xf32> to vector<256x128xf32>
    %7 = arith.mulf %5, %6 : vector<256x128xf32>
    %8 = vector.broadcast %1 : vector<1x128xf32> to vector<256x128xf32>
    %9 = arith.addf %7, %8 : vector<256x128xf32>
    %cst_7 = arith.constant 0.000000e+00 : f32
    %10 = vector.broadcast %cst_7 : f32 to vector<1x128xf32>
    %11 = arith.cmpf ogt, %2, %10 : vector<1x128xf32>
    %cst_8 = arith.constant 0.000000e+00 : f32
    %12 = vector.broadcast %cst_8 : f32 to vector<256x128xf32>
    %13 = arith.maximumf %9, %12 : vector<256x128xf32>
    %14 = vector.shape_cast %11 : vector<1x128xi1> to vector<1x128xi1>
    %15 = vector.broadcast %14 : vector<1x128xi1> to vector<256x128xi1>
    %16 = arith.select %15, %13, %9 : vector<256x128xi1>, vector<256x128xf32>
    %c0_9 = arith.constant 0 : index
    %c0_10 = arith.constant 0 : index
    %17 = vector.load %arg4[%c0_9, %c0_10] : memref<256x128xf32, #tpu.memory_space<vmem>>, vector<256x128xf32>
    tpu.vector_store %arg4[%c0_9, %c0_10], %16 {strides = array<i32>} : memref<256x128xf32, #tpu.memory_space<vmem>>, vector<256x128xf32>,
    return
  }
  func.func @transform_0(%arg0: i32) -> (i32, i32) {
    %c0_i32 = arith.constant 0 : i32
    %c0_i32_0 = arith.constant 0 : i32
    return %arg0, %c0_i32 : i32, i32
  }
  func.func @transform_1(%arg0: i32) -> (i32, i32) {
    %c0_i32 = arith.constant 0 : i32
    %c0_i32_0 = arith.constant 0 : i32
    %c0_i32_1 = arith.constant 0 : i32
    return %c0_i32, %c0_i32_0 : i32, i32
  }
  func.func @transform_2(%arg0: i32) -> (i32, i32) {
    %c0_i32 = arith.constant 0 : i32
    %c0_i32_0 = arith.constant 0 : i32
    %c0_i32_1 = arith.constant 0 : i32
    return %c0_i32, %c0_i32_0 : i32, i32
  }
  func.func @transform_3(%arg0: i32) -> (i32, i32) {
    %c0_i32 = arith.constant 0 : i32
    %c0_i32_0 = arith.constant 0 : i32
    return %arg0, %c0_i32 : i32, i32
  }
}

module attributes {stable_mosaic.version = 11 : i64} {
  func.func @_bmm_kernel(%arg0: i32, %arg1: memref<1x8x8xbf16, #tpu.memory_space<vmem>>, %arg2: memref<1x8x200xbf16, #tpu.memory_space<vmem>>, %arg3: memref<1x8x200xf32, #tpu.memory_space<vmem>>) attributes {dimension_semantics = [#tpu.dimension_semantics<parallel>], iteration_bounds = array<i64: 2>, scalar_prefetch = 0 : i64, scratch_operands = 0 : i64, tpu.core_type = #tpu.core_type<tc>, window_params = [{transform_indices = @transform_0, window_bounds = array<i64: 1, 8, 8>}, {transform_indices = @transform_1, window_bounds = array<i64: 1, 8, 200>}, {transform_indices = @transform_2, window_bounds = array<i64: 1, 8, 200>}]} {
    %c0 = arith.constant 0 : index
    %c0_0 = arith.constant 0 : index
    %c0_1 = arith.constant 0 : index
    %0 = vector.load %arg1[%c0, %c0_0, %c0_1] : memref<1x8x8xbf16, #tpu.memory_space<vmem>>, vector<1x8x8xbf16>
    %1 = vector.shape_cast %0 : vector<1x8x8xbf16> to vector<8x8xbf16>
    %c0_2 = arith.constant 0 : index
    %c0_3 = arith.constant 0 : index
    %c0_4 = arith.constant 0 : index
    %2 = vector.load %arg2[%c0_2, %c0_3, %c0_4] : memref<1x8x200xbf16, #tpu.memory_space<vmem>>, vector<1x8x200xbf16>
    %3 = vector.shape_cast %2 : vector<1x8x200xbf16> to vector<8x200xbf16>
    %cst = arith.constant dense<0.000000e+00> : vector<8x200xf32>
    %4 = tpu.matmul %1, %3, %cst {dimension_numbers = #tpu.dot_dimension_numbers<[1], [0], [0], [1], [0, 0, 1, 1], [], []>} : vector<8x8xbf16>, vector<8x200xbf16>, vector<8x200xf32> -> vector<8x200xf32>
    %c0_5 = arith.constant 0 : index
    %c0_6 = arith.constant 0 : index
    %c0_7 = arith.constant 0 : index
    %5 = vector.load %arg3[%c0_5, %c0_6, %c0_7] : memref<1x8x200xf32, #tpu.memory_space<vmem>>, vector<1x8x200xf32>
    %6 = vector.shape_cast %5 : vector<1x8x200xf32> to vector<8x200xf32>
    %7 = vector.shape_cast %4 : vector<8x200xf32> to vector<1x8x200xf32>
    tpu.vector_store %arg3[%c0_5, %c0_6, %c0_7], %7 {strides = array<i32>} : memref<1x8x200xf32, #tpu.memory_space<vmem>>, vector<1x8x200xf32>,
    return
  }
  func.func @transform_0(%arg0: i32) -> (i32, i32, i32) {
    %c0_i32 = arith.constant 0 : i32
    %c0_i32_0 = arith.constant 0 : i32
    %c0_i32_1 = arith.constant 0 : i32
    return %arg0, %c0_i32, %c0_i32_0 : i32, i32, i32
  }
  func.func @transform_1(%arg0: i32) -> (i32, i32, i32) {
    %c0_i32 = arith.constant 0 : i32
    %c0_i32_0 = arith.constant 0 : i32
    %c0_i32_1 = arith.constant 0 : i32
    return %arg0, %c0_i32, %c0_i32_0 : i32, i32, i32
  }
  func.func @transform_2(%arg0: i32) -> (i32, i32, i32) {
    %c0_i32 = arith.constant 0 : i32
    %c0_i32_0 = arith.constant 0 : i32
    %c0_i32_1 = arith.constant 0 : i32
    return %arg0, %c0_i32, %c0_i32_0 : i32, i32, i32
  }
}

module attributes {stable_mosaic.version = 11 : i64} {
  func.func @_fused_linear_kernel(%arg0: i32, %arg1: memref<256x80xbf16, #tpu.memory_space<vmem>>, %arg2: memref<80x16xbf16, #tpu.memory_space<vmem>>, %arg3: memref<3x16xf32, #tpu.memory_space<vmem>>, %arg4: memref<256x16xf32, #tpu.memory_space<vmem>>) attributes {dimension_semantics = [#tpu.dimension_semantics<parallel>], iteration_bounds = array<i64: 2>, scalar_prefetch = 0 : i64, scratch_operands = 0 : i64, tpu.core_type = #tpu.core_type<tc>, window_params = [{transform_indices = @transform_0, window_bounds = array<i64: 256, 80>}, {pipeline_mode = #tpu.pipeline_mode<synchronous>, transform_indices = @transform_1, window_bounds = array<i64: 80, 16>}, {pipeline_mode = #tpu.pipeline_mode<synchronous>, transform_indices = @transform_2, window_bounds = array<i64: 3, 16>}, {transform_indices = @transform_3, window_bounds = array<i64: 256, 16>}]} {
    %c0 = arith.constant 0 : index
    %c0_0 = arith.constant 0 : index
    %0 = vector.load %arg3[%c0, %c0_0] : memref<3x16xf32, #tpu.memory_space<vmem>>, vector<1x16xf32>
    %c1 = arith.constant 1 : index
    %c0_1 = arith.constant 0 : index
    %1 = vector.load %arg3[%c1, %c0_1] : memref<3x16xf32, #tpu.memory_space<vmem>>, vector<1x16xf32>
    %c2 = arith.constant 2 : index
    %c0_2 = arith.constant 0 : index
    %2 = vector.load %arg3[%c2, %c0_2] : memref<3x16xf32, #tpu.memory_space<vmem>>, vector<1x16xf32>
    %c0_3 = arith.constant 0 : index
    %c0_4 = arith.constant 0 : index
    %3 = vector.load %arg1[%c0_3, %c0_4] : memref<256x80xbf16, #tpu.memory_space<vmem>>, vector<256x80xbf16>
    %c0_5 = arith.constant 0 : index
    %c0_6 = arith.constant 0 : index
    %4 = vector.load %arg2[%c0_5, %c0_6] : memref<80x16xbf16, #tpu.memory_space<vmem>>, vector<80x16xbf16>
    %cst = arith.constant dense<0.000000e+00> : vector<256x16xf32>
    %5 = tpu.matmul %3, %4, %cst {dimension_numbers = #tpu.dot_dimension_numbers<[1], [0], [0], [1], [0, 0, 1, 1], [], []>} : vector<256x80xbf16>, vector<80x16xbf16>, vector<256x16xf32> -> vector<256x16xf32>
    %6 = vector.broadcast %0 : vector<1x16xf32> to vector<256x16xf32>
    %7 = arith.mulf %5, %6 : vector<256x16xf32>
    %8 = vector.broadcast %1 : vector<1x16xf32> to vector<256x16xf32>
    %9 = arith.addf %7, %8 : vector<256x16xf32>
    %cst_7 = arith.constant 0.000000e+00 : f32
    %10 = vector.broadcast %cst_7 : f32 to vector<1x16xf32>
    %11 = arith.cmpf ogt, %2, %10 : vector<1x16xf32>
    %cst_8 = arith.constant 0.000000e+00 : f32
    %12 = vector.broadcast %cst_8 : f32 to vector<256x16xf32>
    %13 = arith.maximumf %9, %12 : vector<256x16xf32>
    %14 = vector.shape_cast %11 : vector<1x16xi1> to vector<1x16xi1>
    %15 = vector.broadcast %14 : vector<1x16xi1> to vector<256x16xi1>
    %16 = arith.select %15, %13, %9 : vector<256x16xi1>, vector<256x16xf32>
    %c0_9 = arith.constant 0 : index
    %c0_10 = arith.constant 0 : index
    %17 = vector.load %arg4[%c0_9, %c0_10] : memref<256x16xf32, #tpu.memory_space<vmem>>, vector<256x16xf32>
    tpu.vector_store %arg4[%c0_9, %c0_10], %16 {strides = array<i32>} : memref<256x16xf32, #tpu.memory_space<vmem>>, vector<256x16xf32>,
    return
  }
  func.func @transform_0(%arg0: i32) -> (i32, i32) {
    %c0_i32 = arith.constant 0 : i32
    %c0_i32_0 = arith.constant 0 : i32
    return %arg0, %c0_i32 : i32, i32
  }
  func.func @transform_1(%arg0: i32) -> (i32, i32) {
    %c0_i32 = arith.constant 0 : i32
    %c0_i32_0 = arith.constant 0 : i32
    %c0_i32_1 = arith.constant 0 : i32
    return %c0_i32, %c0_i32_0 : i32, i32
  }
  func.func @transform_2(%arg0: i32) -> (i32, i32) {
    %c0_i32 = arith.constant 0 : i32
    %c0_i32_0 = arith.constant 0 : i32
    %c0_i32_1 = arith.constant 0 : i32
    return %c0_i32, %c0_i32_0 : i32, i32
  }
  func.func @transform_3(%arg0: i32) -> (i32, i32) {
    %c0_i32 = arith.constant 0 : i32
    %c0_i32_0 = arith.constant 0 : i32
    return %arg0, %c0_i32 : i32, i32
  }
}

</mosaic_0001>

<llo_original>
// kernel: ske_mixf.5
$region0: #{ske_mixf.5}
  #allocation0 [shape = 'u32[]', space=smem, size = 0x4, offset = 0x4, fixed_abs, tag = 'smem constant byte address 0x4 - core index']
  #allocation1 [shape = 'u32[144,128]{1,0:T(1,128)}', space=vmem, size = 0x12000, scoped, tag = 'internal scratch']
  %s0 = inlined_call_operand.vmem [shape: f32[512,3], index: 0, kind: input, shape index: {}]
  %s1 = inlined_call_operand.vmem [shape: f32[3,256], index: 1, kind: input, shape index: {}]
  %s2 = inlined_call_operand.vmem [shape: f32[3,256], index: 2, kind: input, shape index: {}]
  %s3 = inlined_call_operand.vmem [shape: f32[512,256], index: 3, kind: output, shape index: {}]
  %s4 = sld [smem:[#allocation0]]
  $region45: #{ske_mixf.5} parent=0
    _
  %s6 = ssub.s32 1, %s4
  %s7 = scalar_select 0, %s6, %s4
  loop: start=0, step=1, limit=4
  $region2: #{ske_mixf.5} parent=0 // loop_pre_header
    _
  $region3: #{ske_mixf.5} parent=0 // loop_header
    %s9 = sphi 0, %s13
    %p10 = scmp.ge.s32.totalorder %s9, 4
    %s19 = sphi 0, %s21
    %s22 = sphi 0, %s19
    %s23 = sphi 0, %s22
    %s39 = sphi 0, %s23
    %s43 = sphi 0, %s43
    %s45 = sphi 0, %s43
    %s46 = sphi 0, %s45
    %s60 = sphi 0, %s46
    %s64 = sphi 0, %s64
    %s66 = sphi 0, %s64
    %s67 = sphi 0, %s66
    %s81 = sphi 0, %s67
    %s87 = sphi 0, %s89
    %s90 = sphi 0, %s87
    %s91 = sphi 0, %s90
    %s107 = sphi 0, %s91
  $region4: #{ske_mixf.5} parent=0 // loop_header_branch
    %12 = sbr.rel (%p10) target = $region8
  $region5: #{ske_mixf.5} parent=0 // loop_body
    %s14 = ssub.s32 %s9, 1
    %s15 = ssub.s32 %s9, 2
    %s16 = sadd.s32 %s9, 1
    %s17 = ssub.s32 %s9, %s16
    %p18 = scmp.eq.s32.totalorder %s17, 0
    %s20 = sadd.s32 %s19, 1
    %s21 = scalar_select %p18, %s19, %s20
    %p24 = pneg %p18
    %p25 = scmp.eq.s32.totalorder %s9, 1
    %p26 = por %p24, %p25
    %p27 = scmp.ne.s32.totalorder %s19, %s22
    %p28 = scmp.eq.s32.totalorder %s9, 0
    %p29 = por %p27, %p28
    %p30 = scmp.ne.s32.totalorder %s19, %s22
    %p31 = scmp.eq.s32.totalorder %s14, 1
    %p32 = por %p30, %p31
    %p33 = scmp.ne.s32.totalorder %s22, %s23
    %p34 = scmp.eq.s32.totalorder %s14, 0
    %p35 = por %p33, %p34
    %p36 = scmp.ne.s32.totalorder %s22, %s23
    %p37 = scmp.eq.s32.totalorder %s15, 1
    %p38 = por %p36, %p37
    %p40 = scmp.ne.s32.totalorder %s23, %s39
    %p41 = scmp.eq.s32.totalorder %s15, 0
    %p42 = por %p40, %p41
    %s44 = sadd.s32 %s43, 1
    %p47 = scmp.eq.s32.totalorder %s9, 1
    %p48 = scmp.ne.s32.totalorder %s43, %s45
    %p49 = scmp.eq.s32.totalorder %s9, 0
    %p50 = por %p48, %p49
    %p51 = scmp.ne.s32.totalorder %s43, %s45
    %p52 = scmp.eq.s32.totalorder %s14, 1
    %p53 = por %p51, %p52
    %p54 = scmp.ne.s32.totalorder %s45, %s46
    %p55 = scmp.eq.s32.totalorder %s14, 0
    %p56 = por %p54, %p55
    %p57 = scmp.ne.s32.totalorder %s45, %s46
    %p58 = scmp.eq.s32.totalorder %s15, 1
    %p59 = por %p57, %p58
    %p61 = scmp.ne.s32.totalorder %s46, %s60
    %p62 = scmp.eq.s32.totalorder %s15, 0
    %p63 = por %p61, %p62
    %s65 = sadd.s32 %s64, 1
    %p68 = scmp.eq.s32.totalorder %s9, 1
    %p69 = scmp.ne.s32.totalorder %s64, %s66
    %p70 = scmp.eq.s32.totalorder %s9, 0
    %p71 = por %p69, %p70
    %p72 = scmp.ne.s32.totalorder %s64, %s66
    %p73 = scmp.eq.s32.totalorder %s14, 1
    %p74 = por %p72, %p73
    %p75 = scmp.ne.s32.totalorder %s66, %s67
    %p76 = scmp.eq.s32.totalorder %s14, 0
    %p77 = por %p75, %p76
    %p78 = scmp.ne.s32.totalorder %s66, %s67
    %p79 = scmp.eq.s32.totalorder %s15, 1
    %p80 = por %p78, %p79
    %p82 = scmp.ne.s32.totalorder %s67, %s81
    %p83 = scmp.eq.s32.totalorder %s15, 0
    %p84 = por %p82, %p83
    %s85 = ssub.s32 %s9, %s16
    %p86 = scmp.eq.s32.totalorder %s85, 0
    %s88 = sadd.s32 %s87, 1
    %s89 = scalar_select %p86, %s87, %s88
    %p92 = pneg %p86
    %p93 = scmp.eq.s32.totalorder %s9, 1
    %p94 = por %p92, %p93
    %p95 = scmp.ne.s32.totalorder %s87, %s90
    %p96 = scmp.eq.s32.totalorder %s9, 0
    %p97 = por %p95, %p96
    %p98 = scmp.ne.s32.totalorder %s87, %s90
    %p99 = scmp.eq.s32.totalorder %s14, 1
    %p100 = por %p98, %p99
    %p101 = scmp.ne.s32.totalorder %s90, %s91
    %p102 = scmp.eq.s32.totalorder %s14, 0
    %p103 = por %p101, %p102
    %p104 = scmp.ne.s32.totalorder %s90, %s91
    %p105 = scmp.eq.s32.totalorder %s15, 1
    %p106 = por %p104, %p105
    %p108 = scmp.ne.s32.totalorder %s91, %s107
    %p109 = scmp.eq.s32.totalorder %s15, 0
    %p110 = por %p108, %p109
    %p111 = scmp.le.s32.totalorder 1, %s9
    %p112 = scmp.lt.s32.totalorder %s9, 3
    %p113 = pnand %p111, %p112
    %p114 = pneg %p113
    // Predicated region
    $region9: #{ske_mixf.5} parent=5 // pred_check
      _
    $region10: #{ske_mixf.5} parent=5 // pred_check_branch
      %116 = sbr.rel (%p113) target = $region12
    $region11: #{ske_mixf.5} parent=5 // pred_region
      %s117 = ssub.s32 %s9, 1
      // Predicated region
      $region13: #{ske_mixf.5} parent=11 // pred_check
        %p118 = pneg %p56
      $region14: #{ske_mixf.5} parent=11 // pred_check_branch
        %120 = sbr.rel (%p118) target = $region16
      $region15: #{ske_mixf.5} parent=11 // pred_region
        _
      $region16: #{ske_mixf.5} parent=11 // pred_fallthru
        _
      // Predicated region
      $region17: #{ske_mixf.5} parent=11 // pred_check
        %p121 = pneg %p77
      $region18: #{ske_mixf.5} parent=11 // pred_check_branch
        %123 = sbr.rel (%p121) target = $region20
      $region19: #{ske_mixf.5} parent=11 // pred_region
        _
      $region20: #{ske_mixf.5} parent=11 // pred_fallthru
        _
    $region12: #{ske_mixf.5} parent=5 // pred_fallthru
      _
    %p124 = scmp.lt.s32.totalorder %s9, 2
    // Predicated region
    $region21: #{ske_mixf.5} parent=5 // pred_check
      %p125 = pneg %p124
    $region22: #{ske_mixf.5} parent=5 // pred_check_branch
      %127 = sbr.rel (%p125) target = $region24
    $region23: #{ske_mixf.5} parent=5 // pred_region
      // Predicated region
      $region25: #{ske_mixf.5} parent=23 // pred_check
        %p128 = pneg %p29
      $region26: #{ske_mixf.5} parent=23 // pred_check_branch
        %130 = sbr.rel (%p128) target = $region28
      $region27: #{ske_mixf.5} parent=23 // pred_region
        %s131 = smul.u32 32, %s9
        %p132 = scmp.lt.s32.totalorder %s131, 63
        %s133 = scalar_select %p132, %s131, 63
        %s134 = smul.addr %s133, 8
        %s135 = scalar_lea.vmem %s0, %s134
        %s136 = smul.u32 32, %s9
      $region28: #{ske_mixf.5} parent=23 // pred_fallthru
        _
    $region24: #{ske_mixf.5} parent=5 // pred_fallthru
      _
    %p137 = scmp.le.s32.totalorder 1, %s9
    %p138 = scmp.lt.s32.totalorder %s9, 3
    %p139 = pnand %p137, %p138
    %p140 = pneg %p139
    // Predicated region
    $region29: #{ske_mixf.5} parent=5 // pred_check
      _
    $region30: #{ske_mixf.5} parent=5 // pred_check_branch
      %142 = sbr.rel (%p139) target = $region32
    $region31: #{ske_mixf.5} parent=5 // pred_region
      %s143 = ssub.s32 %s9, 1
      %s144 = smul.u32 32, %s14
      %p145 = scmp.lt.s32.totalorder %s144, 63
      %s146 = scalar_select %p145, %s144, 63
      %s147 = smul.addr %s146, 8
      %s148 = scalar_lea.vmem %s0, %s147
      %p149 = pneg %p35
      %p150 = pneg %p32
      %p151 = pneg %p56
      %p152 = pneg %p53
      %p153 = pneg %p77
      %p154 = pneg %p74
      %p155 = pneg %p103
      %p156 = pneg %p100
      %s157 = smul.u32 32, %s14
      %p158 = scmp.lt.s32.totalorder %s157, 63
      %s159 = scalar_select %p158, %s157, 63
      %s160 = smul.addr %s159, 2
      %s161 = smul.addr %s160, 8
      %s162 = scalar_lea.vmem %s3, %s161
      %s163 = smul.u32 32, %s14
      %p164 = scmp.lt.s32.totalorder %s163, 63
      %s165 = scalar_select %p164, %s163, 63
      %s166 = smul.addr %s165, 8
      %s167 = scalar_lea.vmem %s0, %s166
      %s168 = smul.u32 32, %s14
      %s169 = smul.u32 32, %s14
      %p170 = scmp.lt.s32.totalorder %s169, 63
      %s171 = scalar_select %p170, %s169, 63
      %s172 = smul.addr %s171, 2
      %s173 = smul.addr %s172, 8
      %s174 = scalar_lea.vmem %s3, %s173
      %s175 = smul.u32 32, %s14
      %v176 = vld [vmem:[%s2] ss:$4 sm:$0x3]
      %s177 = scalar_lea.vmem %s2, 1
      %v178 = vld [vmem:[%s177] ss:$4 sm:$0x3]
      %s179 = scalar_lea.vmem %s2, 2
      %v180 = vld [vmem:[%s179] ss:$4 sm:$0x3]
      %v181 = vld [vmem:[%s167] sm:$0xff]
      %v182 = vld [vmem:[%s167 + $0x8] sm:$0xff]
      %v183 = vld [vmem:[%s167 + $0x10] sm:$0xff]
      %v184 = vld [vmem:[%s167 + $0x18] sm:$0xff]
      %v185 = vld [vmem:[%s167 + $0x20] sm:$0xff]
      %v186 = vld [vmem:[%s167 + $0x28] sm:$0xff]
      %v187 = vld [vmem:[%s167 + $0x30] sm:$0xff]
      %v188 = vld [vmem:[%s167 + $0x38] sm:$0xff]
      %v189 = vld [vmem:[%s167 + $0x40] sm:$0xff]
      %v190 = vld [vmem:[%s167 + $0x48] sm:$0xff]
      %v191 = vld [vmem:[%s167 + $0x50] sm:$0xff]
      %v192 = vld [vmem:[%s167 + $0x58] sm:$0xff]
      %v193 = vld [vmem:[%s167 + $0x60] sm:$0xff]
      %v194 = vld [vmem:[%s167 + $0x68] sm:$0xff]
      %v195 = vld [vmem:[%s167 + $0x70] sm:$0xff]
      %v196 = vld [vmem:[%s167 + $0x78] sm:$0xff]
      %v197 = vld [vmem:[%s167 + $0x80] sm:$0xff]
      %v198 = vld [vmem:[%s167 + $0x88] sm:$0xff]
      %v199 = vld [vmem:[%s167 + $0x90] sm:$0xff]
      %v200 = vld [vmem:[%s167 + $0x98] sm:$0xff]
      %v201 = vld [vmem:[%s167 + $0xa0] sm:$0xff]
      %v202 = vld [vmem:[%s167 + $0xa8] sm:$0xff]
      %v203 = vld [vmem:[%s167 + $0xb0] sm:$0xff]
      %v204 = vld [vmem:[%s167 + $0xb8] sm:$0xff]
      %v205 = vld [vmem:[%s167 + $0xc0] sm:$0xff]
      %v206 = vld [vmem:[%s167 + $0xc8] sm:$0xff]
      %v207 = vld [vmem:[%s167 + $0xd0] sm:$0xff]
      %v208 = vld [vmem:[%s167 + $0xd8] sm:$0xff]
      %v209 = vld [vmem:[%s167 + $0xe0] sm:$0xff]
      %v210 = vld [vmem:[%s167 + $0xe8] sm:$0xff]
      %v211 = vld [vmem:[%s167 + $0xf0] sm:$0xff]
      %v212 = vld [vmem:[%s167 + $0xf8] sm:$0xff]
      %v213 = vld [vmem:[%s1] sm:$0x77]
      %215 = vset.pattern.permute.xlu0 0
      %216 = vperm.xlu0 %215, %v181
      %v217 = vpop.permute.xlu0 %216
      %220 = vset.pattern.permute.xlu0 0
      %221 = vperm.xlu0 %220, %v182
      %v222 = vpop.permute.xlu0 %221
      %225 = vset.pattern.permute.xlu0 0
      %226 = vperm.xlu0 %225, %v183
      %v227 = vpop.permute.xlu0 %226
      %230 = vset.pattern.permute.xlu0 0
      %231 = vperm.xlu0 %230, %v184
      %v232 = vpop.permute.xlu0 %231
      %235 = vset.pattern.permute.xlu0 0
      %236 = vperm.xlu0 %235, %v185
      %v237 = vpop.permute.xlu0 %236
      %240 = vset.pattern.permute.xlu0 0
      %241 = vperm.xlu0 %240, %v186
      %v242 = vpop.permute.xlu0 %241
      %245 = vset.pattern.permute.xlu0 0
      %246 = vperm.xlu0 %245, %v187
      %v247 = vpop.permute.xlu0 %246
      %250 = vset.pattern.permute.xlu0 0
      %251 = vperm.xlu0 %250, %v188
      %v252 = vpop.permute.xlu0 %251
      %255 = vset.pattern.permute.xlu0 0
      %256 = vperm.xlu0 %255, %v189
      %v257 = vpop.permute.xlu0 %256
      %260 = vset.pattern.permute.xlu0 0
      %261 = vperm.xlu0 %260, %v190
      %v262 = vpop.permute.xlu0 %261
      %265 = vset.pattern.permute.xlu0 0
      %266 = vperm.xlu0 %265, %v191
      %v267 = vpop.permute.xlu0 %266
      %270 = vset.pattern.permute.xlu0 0
      %271 = vperm.xlu0 %270, %v192
      %v272 = vpop.permute.xlu0 %271
      %275 = vset.pattern.permute.xlu0 0
      %276 = vperm.xlu0 %275, %v193
      %v277 = vpop.permute.xlu0 %276
      %280 = vset.pattern.permute.xlu0 0
      %281 = vperm.xlu0 %280, %v194
      %v282 = vpop.permute.xlu0 %281
      %285 = vset.pattern.permute.xlu0 0
      %286 = vperm.xlu0 %285, %v195
      %v287 = vpop.permute.xlu0 %286
      %290 = vset.pattern.permute.xlu0 0
      %291 = vperm.xlu0 %290, %v196
      %v292 = vpop.permute.xlu0 %291
      %295 = vset.pattern.permute.xlu0 0
      %296 = vperm.xlu0 %295, %v197
      %v297 = vpop.permute.xlu0 %296
      %300 = vset.pattern.permute.xlu0 0
      %301 = vperm.xlu0 %300, %v198
      %v302 = vpop.permute.xlu0 %301
      %305 = vset.pattern.permute.xlu0 0
      %306 = vperm.xlu0 %305, %v199
      %v307 = vpop.permute.xlu0 %306
      %310 = vset.pattern.permute.xlu0 0
      %311 = vperm.xlu0 %310, %v200
      %v312 = vpop.permute.xlu0 %311
      %315 = vset.pattern.permute.xlu0 0
      %316 = vperm.xlu0 %315, %v201
      %v317 = vpop.permute.xlu0 %316
      %320 = vset.pattern.permute.xlu0 0
      %321 = vperm.xlu0 %320, %v202
      %v322 = vpop.permute.xlu0 %321
      %325 = vset.pattern.permute.xlu0 0
      %326 = vperm.xlu0 %325, %v203
      %v327 = vpop.permute.xlu0 %326
      %330 = vset.pattern.permute.xlu0 0
      %331 = vperm.xlu0 %330, %v204
      %v332 = vpop.permute.xlu0 %331
      %335 = vset.pattern.permute.xlu0 0
      %336 = vperm.xlu0 %335, %v205
      %v337 = vpop.permute.xlu0 %336
      %340 = vset.pattern.permute.xlu0 0
      %341 = vperm.xlu0 %340, %v206
      %v342 = vpop.permute.xlu0 %341
      %345 = vset.pattern.permute.xlu0 0
      %346 = vperm.xlu0 %345, %v207
      %v347 = vpop.permute.xlu0 %346
      %350 = vset.pattern.permute.xlu0 0
      %351 = vperm.xlu0 %350, %v208
      %v352 = vpop.permute.xlu0 %351
      %355 = vset.pattern.permute.xlu0 0
      %356 = vperm.xlu0 %355, %v209
      %v357 = vpop.permute.xlu0 %356
      %360 = vset.pattern.permute.xlu0 0
      %361 = vperm.xlu0 %360, %v210
      %v362 = vpop.permute.xlu0 %361
      %365 = vset.pattern.permute.xlu0 0
      %366 = vperm.xlu0 %365, %v211
      %v367 = vpop.permute.xlu0 %366
      %370 = vset.pattern.permute.xlu0 0
      %371 = vperm.xlu0 %370, %v212
      %v372 = vpop.permute.xlu0 %371
      %v375 = vlaneseq
      %v376 = vshrl.u32 %v375, 7
      %v377 = vsub.s32 0, %v376
      %v378 = vrot.slane %v213, %v377
      %v379 = vlaneseq
      %v380 = vshrl.u32 %v379, 7
      %v381 = vsub.s32 4, %v380
      %v382 = vrot.slane %v213, %v381
      %v385 = vlaneseq
      %v386 = vshrl.u32 %v385, 7
      %v387 = vsub.s32 0, %v386
      %v388 = vrot.slane %v378, %v387
      %v389 = vlaneseq
      %v390 = vshrl.u32 %v389, 7
      %v391 = vsub.s32 0, %v390
      %v392 = vrot.slane %v382, %v391
      %v393 = vmul.f32 %v217, %v388
      %v394 = vmul.f32 %v217, %v392
      %v395 = vmul.f32 %v222, %v388
      %v396 = vmul.f32 %v222, %v392
      %v397 = vmul.f32 %v227, %v388
      %v398 = vmul.f32 %v227, %v392
      %v399 = vmul.f32 %v232, %v388
      %v400 = vmul.f32 %v232, %v392
      %v401 = vmul.f32 %v237, %v388
      %v402 = vmul.f32 %v237, %v392
      %v403 = vmul.f32 %v242, %v388
      %v404 = vmul.f32 %v242, %v392
      %v405 = vmul.f32 %v247, %v388
      %v406 = vmul.f32 %v247, %v392
      %v407 = vmul.f32 %v252, %v388
      %v408 = vmul.f32 %v252, %v392
      %v409 = vmul.f32 %v257, %v388
      %v410 = vmul.f32 %v257, %v392
      %v411 = vmul.f32 %v262, %v388
      %v412 = vmul.f32 %v262, %v392
      %v413 = vmul.f32 %v267, %v388
      %v414 = vmul.f32 %v267, %v392
      %v415 = vmul.f32 %v272, %v388
      %v416 = vmul.f32 %v272, %v392
      %v417 = vmul.f32 %v277, %v388
      %v418 = vmul.f32 %v277, %v392
      %v419 = vmul.f32 %v282, %v388
      %v420 = vmul.f32 %v282, %v392
      %v421 = vmul.f32 %v287, %v388
      %v422 = vmul.f32 %v287, %v392
      %v423 = vmul.f32 %v292, %v388
      %v424 = vmul.f32 %v292, %v392
      %v425 = vmul.f32 %v297, %v388
      %v426 = vmul.f32 %v297, %v392
      %v427 = vmul.f32 %v302, %v388
      %v428 = vmul.f32 %v302, %v392
      %v429 = vmul.f32 %v307, %v388
      %v430 = vmul.f32 %v307, %v392
      %v431 = vmul.f32 %v312, %v388
      %v432 = vmul.f32 %v312, %v392
      %v433 = vmul.f32 %v317, %v388
      %v434 = vmul.f32 %v317, %v392
      %v435 = vmul.f32 %v322, %v388
      %v436 = vmul.f32 %v322, %v392
      %v437 = vmul.f32 %v327, %v388
      %v438 = vmul.f32 %v327, %v392
      %v439 = vmul.f32 %v332, %v388
      %v440 = vmul.f32 %v332, %v392
      %v441 = vmul.f32 %v337, %v388
      %v442 = vmul.f32 %v337, %v392
      %v443 = vmul.f32 %v342, %v388
      %v444 = vmul.f32 %v342, %v392
      %v445 = vmul.f32 %v347, %v388
      %v446 = vmul.f32 %v347, %v392
      %v447 = vmul.f32 %v352, %v388
      %v448 = vmul.f32 %v352, %v392
      %v449 = vmul.f32 %v357, %v388
      %v450 = vmul.f32 %v357, %v392
      %v451 = vmul.f32 %v362, %v388
      %v452 = vmul.f32 %v362, %v392
      %v453 = vmul.f32 %v367, %v388
      %v454 = vmul.f32 %v367, %v392
      %v455 = vmul.f32 %v372, %v388
      %v456 = vmul.f32 %v372, %v392
      %457 = vset.pattern.permute.xlu0 1
      %458 = vperm.xlu0 %457, %v181
      %v459 = vpop.permute.xlu0 %458
      %461 = vset.pattern.permute.xlu0 1
      %462 = vperm.xlu0 %461, %v182
      %v463 = vpop.permute.xlu0 %462
      %465 = vset.pattern.permute.xlu0 1
      %466 = vperm.xlu0 %465, %v183
      %v467 = vpop.permute.xlu0 %466
      %469 = vset.pattern.permute.xlu0 1
      %470 = vperm.xlu0 %469, %v184
      %v471 = vpop.permute.xlu0 %470
      %473 = vset.pattern.permute.xlu0 1
      %474 = vperm.xlu0 %473, %v185
      %v475 = vpop.permute.xlu0 %474
      %477 = vset.pattern.permute.xlu0 1
      %478 = vperm.xlu0 %477, %v186
      %v479 = vpop.permute.xlu0 %478
      %481 = vset.pattern.permute.xlu0 1
      %482 = vperm.xlu0 %481, %v187
      %v483 = vpop.permute.xlu0 %482
      %485 = vset.pattern.permute.xlu0 1
      %486 = vperm.xlu0 %485, %v188
      %v487 = vpop.permute.xlu0 %486
      %489 = vset.pattern.permute.xlu0 1
      %490 = vperm.xlu0 %489, %v189
      %v491 = vpop.permute.xlu0 %490
      %493 = vset.pattern.permute.xlu0 1
      %494 = vperm.xlu0 %493, %v190
      %v495 = vpop.permute.xlu0 %494
      %497 = vset.pattern.permute.xlu0 1
      %498 = vperm.xlu0 %497, %v191
      %v499 = vpop.permute.xlu0 %498
      %501 = vset.pattern.permute.xlu0 1
      %502 = vperm.xlu0 %501, %v192
      %v503 = vpop.permute.xlu0 %502
      %505 = vset.pattern.permute.xlu0 1
      %506 = vperm.xlu0 %505, %v193
      %v507 = vpop.permute.xlu0 %506
      %509 = vset.pattern.permute.xlu0 1
      %510 = vperm.xlu0 %509, %v194
      %v511 = vpop.permute.xlu0 %510
      %513 = vset.pattern.permute.xlu0 1
      %514 = vperm.xlu0 %513, %v195
      %v515 = vpop.permute.xlu0 %514
      %517 = vset.pattern.permute.xlu0 1
      %518 = vperm.xlu0 %517, %v196
      %v519 = vpop.permute.xlu0 %518
      %521 = vset.pattern.permute.xlu0 1
      %522 = vperm.xlu0 %521, %v197
      %v523 = vpop.permute.xlu0 %522
      %525 = vset.pattern.permute.xlu0 1
      %526 = vperm.xlu0 %525, %v198
      %v527 = vpop.permute.xlu0 %526
      %529 = vset.pattern.permute.xlu0 1
      %530 = vperm.xlu0 %529, %v199
      %v531 = vpop.permute.xlu0 %530
      %533 = vset.pattern.permute.xlu0 1
      %534 = vperm.xlu0 %533, %v200
      %v535 = vpop.permute.xlu0 %534
      %537 = vset.pattern.permute.xlu0 1
      %538 = vperm.xlu0 %537, %v201
      %v539 = vpop.permute.xlu0 %538
      %541 = vset.pattern.permute.xlu0 1
      %542 = vperm.xlu0 %541, %v202
      %v543 = vpop.permute.xlu0 %542
      %545 = vset.pattern.permute.xlu0 1
      %546 = vperm.xlu0 %545, %v203
      %v547 = vpop.permute.xlu0 %546
      %549 = vset.pattern.permute.xlu0 1
      %550 = vperm.xlu0 %549, %v204
      %v551 = vpop.permute.xlu0 %550
      %553 = vset.pattern.permute.xlu0 1
      %554 = vperm.xlu0 %553, %v205
      %v555 = vpop.permute.xlu0 %554
      %557 = vset.pattern.permute.xlu0 1
      %558 = vperm.xlu0 %557, %v206
      %v559 = vpop.permute.xlu0 %558
      %561 = vset.pattern.permute.xlu0 1
      %562 = vperm.xlu0 %561, %v207
      %v563 = vpop.permute.xlu0 %562
      %565 = vset.pattern.permute.xlu0 1
      %566 = vperm.xlu0 %565, %v208
      %v567 = vpop.permute.xlu0 %566
      %569 = vset.pattern.permute.xlu0 1
      %570 = vperm.xlu0 %569, %v209
      %v571 = vpop.permute.xlu0 %570
      %573 = vset.pattern.permute.xlu0 1
      %574 = vperm.xlu0 %573, %v210
      %v575 = vpop.permute.xlu0 %574
      %577 = vset.pattern.permute.xlu0 1
      %578 = vperm.xlu0 %577, %v211
      %v579 = vpop.permute.xlu0 %578
      %581 = vset.pattern.permute.xlu0 1
      %582 = vperm.xlu0 %581, %v212
      %v583 = vpop.permute.xlu0 %582
      %v585 = vlaneseq
      %v586 = vshrl.u32 %v585, 7
      %v587 = vsub.s32 1, %v586
      %v588 = vrot.slane %v213, %v587
      %v589 = vlaneseq
      %v590 = vshrl.u32 %v589, 7
      %v591 = vsub.s32 5, %v590
      %v592 = vrot.slane %v213, %v591
      %v595 = vlaneseq
      %v596 = vshrl.u32 %v595, 7
      %v597 = vsub.s32 1, %v596
      %v598 = vrot.slane %v588, %v597
      %v599 = vlaneseq
      %v600 = vshrl.u32 %v599, 7
      %v601 = vsub.s32 1, %v600
      %v602 = vrot.slane %v592, %v601
      %v603 = vmul.f32 %v459, %v598
      %v604 = vmul.f32 %v459, %v602
      %v605 = vmul.f32 %v463, %v598
      %v606 = vmul.f32 %v463, %v602
      %v607 = vmul.f32 %v467, %v598
      %v608 = vmul.f32 %v467, %v602
      %v609 = vmul.f32 %v471, %v598
      %v610 = vmul.f32 %v471, %v602
      %v611 = vmul.f32 %v475, %v598
      %v612 = vmul.f32 %v475, %v602
      %v613 = vmul.f32 %v479, %v598
      %v614 = vmul.f32 %v479, %v602
      %v615 = vmul.f32 %v483, %v598
      %v616 = vmul.f32 %v483, %v602
      %v617 = vmul.f32 %v487, %v598
      %v618 = vmul.f32 %v487, %v602
      %v619 = vmul.f32 %v491, %v598
      %v620 = vmul.f32 %v491, %v602
      %v621 = vmul.f32 %v495, %v598
      %v622 = vmul.f32 %v495, %v602
      %v623 = vmul.f32 %v499, %v598
      %v624 = vmul.f32 %v499, %v602
      %v625 = vmul.f32 %v503, %v598
      %v626 = vmul.f32 %v503, %v602
      %v627 = vmul.f32 %v507, %v598
      %v628 = vmul.f32 %v507, %v602
      %v629 = vmul.f32 %v511, %v598
      %v630 = vmul.f32 %v511, %v602
      %v631 = vmul.f32 %v515, %v598
      %v632 = vmul.f32 %v515, %v602
      %v633 = vmul.f32 %v519, %v598
      %v634 = vmul.f32 %v519, %v602
      %v635 = vmul.f32 %v523, %v598
      %v636 = vmul.f32 %v523, %v602
      %v637 = vmul.f32 %v527, %v598
      %v638 = vmul.f32 %v527, %v602
      %v639 = vmul.f32 %v531, %v598
      %v640 = vmul.f32 %v531, %v602
      %v641 = vmul.f32 %v535, %v598
      %v642 = vmul.f32 %v535, %v602
      %v643 = vmul.f32 %v539, %v598
      %v644 = vmul.f32 %v539, %v602
      %v645 = vmul.f32 %v543, %v598
      %v646 = vmul.f32 %v543, %v602
      %v647 = vmul.f32 %v547, %v598
      %v648 = vmul.f32 %v547, %v602
      %v649 = vmul.f32 %v551, %v598
      %v650 = vmul.f32 %v551, %v602
      %v651 = vmul.f32 %v555, %v598
      %v652 = vmul.f32 %v555, %v602
      %v653 = vmul.f32 %v559, %v598
      %v654 = vmul.f32 %v559, %v602
      %v655 = vmul.f32 %v563, %v598
      %v656 = vmul.f32 %v563, %v602
      %v657 = vmul.f32 %v567, %v598
      %v658 = vmul.f32 %v567, %v602
      %v659 = vmul.f32 %v571, %v598
      %v660 = vmul.f32 %v571, %v602
      %v661 = vmul.f32 %v575, %v598
      %v662 = vmul.f32 %v575, %v602
      %v663 = vmul.f32 %v579, %v598
      %v664 = vmul.f32 %v579, %v602
      %v665 = vmul.f32 %v583, %v598
      %v666 = vmul.f32 %v583, %v602
      %v667 = vadd.f32 %v393, %v603
      %v668 = vadd.f32 %v394, %v604
      %v669 = vadd.f32 %v395, %v605
      %v670 = vadd.f32 %v396, %v606
      %v671 = vadd.f32 %v397, %v607
      %v672 = vadd.f32 %v398, %v608
      %v673 = vadd.f32 %v399, %v609
      %v674 = vadd.f32 %v400, %v610
      %v675 = vadd.f32 %v401, %v611
      %v676 = vadd.f32 %v402, %v612
      %v677 = vadd.f32 %v403, %v613
      %v678 = vadd.f32 %v404, %v614
      %v679 = vadd.f32 %v405, %v615
      %v680 = vadd.f32 %v406, %v616
      %v681 = vadd.f32 %v407, %v617
      %v682 = vadd.f32 %v408, %v618
      %v683 = vadd.f32 %v409, %v619
      %v684 = vadd.f32 %v410, %v620
      %v685 = vadd.f32 %v411, %v621
      %v686 = vadd.f32 %v412, %v622
      %v687 = vadd.f32 %v413, %v623
      %v688 = vadd.f32 %v414, %v624
      %v689 = vadd.f32 %v415, %v625
      %v690 = vadd.f32 %v416, %v626
      %v691 = vadd.f32 %v417, %v627
      %v692 = vadd.f32 %v418, %v628
      %v693 = vadd.f32 %v419, %v629
      %v694 = vadd.f32 %v420, %v630
      %v695 = vadd.f32 %v421, %v631
      %v696 = vadd.f32 %v422, %v632
      %v697 = vadd.f32 %v423, %v633
      %v698 = vadd.f32 %v424, %v634
      %v699 = vadd.f32 %v425, %v635
      %v700 = vadd.f32 %v426, %v636
      %v701 = vadd.f32 %v427, %v637
      %v702 = vadd.f32 %v428, %v638
      %v703 = vadd.f32 %v429, %v639
      %v704 = vadd.f32 %v430, %v640
      %v705 = vadd.f32 %v431, %v641
      %v706 = vadd.f32 %v432, %v642
      %v707 = vadd.f32 %v433, %v643
      %v708 = vadd.f32 %v434, %v644
      %v709 = vadd.f32 %v435, %v645
      %v710 = vadd.f32 %v436, %v646
      %v711 = vadd.f32 %v437, %v647
      %v712 = vadd.f32 %v438, %v648
      %v713 = vadd.f32 %v439, %v649
      %v714 = vadd.f32 %v440, %v650
      %v715 = vadd.f32 %v441, %v651
      %v716 = vadd.f32 %v442, %v652
      %v717 = vadd.f32 %v443, %v653
      %v718 = vadd.f32 %v444, %v654
      %v719 = vadd.f32 %v445, %v655
      %v720 = vadd.f32 %v446, %v656
      %v721 = vadd.f32 %v447, %v657
      %v722 = vadd.f32 %v448, %v658
      %v723 = vadd.f32 %v449, %v659
      %v724 = vadd.f32 %v450, %v660
      %v725 = vadd.f32 %v451, %v661
      %v726 = vadd.f32 %v452, %v662
      %v727 = vadd.f32 %v453, %v663
      %v728 = vadd.f32 %v454, %v664
      %v729 = vadd.f32 %v455, %v665
      %v730 = vadd.f32 %v456, %v666
      %731 = vset.pattern.permute.xlu0 2
      %732 = vperm.xlu0 %731, %v181
      %v733 = vpop.permute.xlu0 %732
      %735 = vset.pattern.permute.xlu0 2
      %736 = vperm.xlu0 %735, %v182
      %v737 = vpop.permute.xlu0 %736
      %739 = vset.pattern.permute.xlu0 2
      %740 = vperm.xlu0 %739, %v183
      %v741 = vpop.permute.xlu0 %740
      %743 = vset.pattern.permute.xlu0 2
      %744 = vperm.xlu0 %743, %v184
      %v745 = vpop.permute.xlu0 %744
      %747 = vset.pattern.permute.xlu0 2
      %748 = vperm.xlu0 %747, %v185
      %v749 = vpop.permute.xlu0 %748
      %751 = vset.pattern.permute.xlu0 2
      %752 = vperm.xlu0 %751, %v186
      %v753 = vpop.permute.xlu0 %752
      %755 = vset.pattern.permute.xlu0 2
      %756 = vperm.xlu0 %755, %v187
      %v757 = vpop.permute.xlu0 %756
      %759 = vset.pattern.permute.xlu0 2
      %760 = vperm.xlu0 %759, %v188
      %v761 = vpop.permute.xlu0 %760
      %763 = vset.pattern.permute.xlu0 2
      %764 = vperm.xlu0 %763, %v189
      %v765 = vpop.permute.xlu0 %764
      %767 = vset.pattern.permute.xlu0 2
      %768 = vperm.xlu0 %767, %v190
      %v769 = vpop.permute.xlu0 %768
      %771 = vset.pattern.permute.xlu0 2
      %772 = vperm.xlu0 %771, %v191
      %v773 = vpop.permute.xlu0 %772
      %775 = vset.pattern.permute.xlu0 2
      %776 = vperm.xlu0 %775, %v192
      %v777 = vpop.permute.xlu0 %776
      %779 = vset.pattern.permute.xlu0 2
      %780 = vperm.xlu0 %779, %v193
      %v781 = vpop.permute.xlu0 %780
      %783 = vset.pattern.permute.xlu0 2
      %784 = vperm.xlu0 %783, %v194
      %v785 = vpop.permute.xlu0 %784
      %787 = vset.pattern.permute.xlu0 2
      %788 = vperm.xlu0 %787, %v195
      %v789 = vpop.permute.xlu0 %788
      %791 = vset.pattern.permute.xlu0 2
      %792 = vperm.xlu0 %791, %v196
      %v793 = vpop.permute.xlu0 %792
      %795 = vset.pattern.permute.xlu0 2
      %796 = vperm.xlu0 %795, %v197
      %v797 = vpop.permute.xlu0 %796
      %799 = vset.pattern.permute.xlu0 2
      %800 = vperm.xlu0 %799, %v198
      %v801 = vpop.permute.xlu0 %800
      %803 = vset.pattern.permute.xlu0 2
      %804 = vperm.xlu0 %803, %v199
      %v805 = vpop.permute.xlu0 %804
      %807 = vset.pattern.permute.xlu0 2
      %808 = vperm.xlu0 %807, %v200
      %v809 = vpop.permute.xlu0 %808
      %811 = vset.pattern.permute.xlu0 2
      %812 = vperm.xlu0 %811, %v201
      %v813 = vpop.permute.xlu0 %812
      %815 = vset.pattern.permute.xlu0 2
      %816 = vperm.xlu0 %815, %v202
      %v817 = vpop.permute.xlu0 %816
      %819 = vset.pattern.permute.xlu0 2
      %820 = vperm.xlu0 %819, %v203
      %v821 = vpop.permute.xlu0 %820
      %823 = vset.pattern.permute.xlu0 2
      %824 = vperm.xlu0 %823, %v204
      %v825 = vpop.permute.xlu0 %824
      %827 = vset.pattern.permute.xlu0 2
      %828 = vperm.xlu0 %827, %v205
      %v829 = vpop.permute.xlu0 %828
      %831 = vset.pattern.permute.xlu0 2
      %832 = vperm.xlu0 %831, %v206
      %v833 = vpop.permute.xlu0 %832
      %835 = vset.pattern.permute.xlu0 2
      %836 = vperm.xlu0 %835, %v207
      %v837 = vpop.permute.xlu0 %836
      %839 = vset.pattern.permute.xlu0 2
      %840 = vperm.xlu0 %839, %v208
      %v841 = vpop.permute.xlu0 %840
      %843 = vset.pattern.permute.xlu0 2
      %844 = vperm.xlu0 %843, %v209
      %v845 = vpop.permute.xlu0 %844
      %847 = vset.pattern.permute.xlu0 2
      %848 = vperm.xlu0 %847, %v210
      %v849 = vpop.permute.xlu0 %848
      %851 = vset.pattern.permute.xlu0 2
      %852 = vperm.xlu0 %851, %v211
      %v853 = vpop.permute.xlu0 %852
      %855 = vset.pattern.permute.xlu0 2
      %856 = vperm.xlu0 %855, %v212
      %v857 = vpop.permute.xlu0 %856
      %v859 = vlaneseq
      %v860 = vshrl.u32 %v859, 7
      %v861 = vsub.s32 2, %v860
      %v862 = vrot.slane %v213, %v861
      %v863 = vlaneseq
      %v864 = vshrl.u32 %v863, 7
      %v865 = vsub.s32 6, %v864
      %v866 = vrot.slane %v213, %v865
      %v869 = vlaneseq
      %v870 = vshrl.u32 %v869, 7
      %v871 = vsub.s32 2, %v870
      %v872 = vrot.slane %v862, %v871
      %v873 = vlaneseq
      %v874 = vshrl.u32 %v873, 7
      %v875 = vsub.s32 2, %v874
      %v876 = vrot.slane %v866, %v875
      %v877 = vmul.f32 %v733, %v872
      %v878 = vmul.f32 %v733, %v876
      %v879 = vmul.f32 %v737, %v872
      %v880 = vmul.f32 %v737, %v876
      %v881 = vmul.f32 %v741, %v872
      %v882 = vmul.f32 %v741, %v876
      %v883 = vmul.f32 %v745, %v872
      %v884 = vmul.f32 %v745, %v876
      %v885 = vmul.f32 %v749, %v872
      %v886 = vmul.f32 %v749, %v876
      %v887 = vmul.f32 %v753, %v872
      %v888 = vmul.f32 %v753, %v876
      %v889 = vmul.f32 %v757, %v872
      %v890 = vmul.f32 %v757, %v876
      %v891 = vmul.f32 %v761, %v872
      %v892 = vmul.f32 %v761, %v876
      %v893 = vmul.f32 %v765, %v872
      %v894 = vmul.f32 %v765, %v876
      %v895 = vmul.f32 %v769, %v872
      %v896 = vmul.f32 %v769, %v876
      %v897 = vmul.f32 %v773, %v872
      %v898 = vmul.f32 %v773, %v876
      %v899 = vmul.f32 %v777, %v872
      %v900 = vmul.f32 %v777, %v876
      %v901 = vmul.f32 %v781, %v872
      %v902 = vmul.f32 %v781, %v876
      %v903 = vmul.f32 %v785, %v872
      %v904 = vmul.f32 %v785, %v876
      %v905 = vmul.f32 %v789, %v872
      %v906 = vmul.f32 %v789, %v876
      %v907 = vmul.f32 %v793, %v872
      %v908 = vmul.f32 %v793, %v876
      %v909 = vmul.f32 %v797, %v872
      %v910 = vmul.f32 %v797, %v876
      %v911 = vmul.f32 %v801, %v872
      %v912 = vmul.f32 %v801, %v876
      %v913 = vmul.f32 %v805, %v872
      %v914 = vmul.f32 %v805, %v876
      %v915 = vmul.f32 %v809, %v872
      %v916 = vmul.f32 %v809, %v876
      %v917 = vmul.f32 %v813, %v872
      %v918 = vmul.f32 %v813, %v876
      %v919 = vmul.f32 %v817, %v872
      %v920 = vmul.f32 %v817, %v876
      %v921 = vmul.f32 %v821, %v872
      %v922 = vmul.f32 %v821, %v876
      %v923 = vmul.f32 %v825, %v872
      %v924 = vmul.f32 %v825, %v876
      %v925 = vmul.f32 %v829, %v872
      %v926 = vmul.f32 %v829, %v876
      %v927 = vmul.f32 %v833, %v872
      %v928 = vmul.f32 %v833, %v876
      %v929 = vmul.f32 %v837, %v872
      %v930 = vmul.f32 %v837, %v876
      %v931 = vmul.f32 %v841, %v872
      %v932 = vmul.f32 %v841, %v876
      %v933 = vmul.f32 %v845, %v872
      %v934 = vmul.f32 %v845, %v876
      %v935 = vmul.f32 %v849, %v872
      %v936 = vmul.f32 %v849, %v876
      %v937 = vmul.f32 %v853, %v872
      %v938 = vmul.f32 %v853, %v876
      %v939 = vmul.f32 %v857, %v872
      %v940 = vmul.f32 %v857, %v876
      %v941 = vadd.f32 %v667, %v877
      %v942 = vadd.f32 %v668, %v878
      %v943 = vadd.f32 %v669, %v879
      %v944 = vadd.f32 %v670, %v880
      %v945 = vadd.f32 %v671, %v881
      %v946 = vadd.f32 %v672, %v882
      %v947 = vadd.f32 %v673, %v883
      %v948 = vadd.f32 %v674, %v884
      %v949 = vadd.f32 %v675, %v885
      %v950 = vadd.f32 %v676, %v886
      %v951 = vadd.f32 %v677, %v887
      %v952 = vadd.f32 %v678, %v888
      %v953 = vadd.f32 %v679, %v889
      %v954 = vadd.f32 %v680, %v890
      %v955 = vadd.f32 %v681, %v891
      %v956 = vadd.f32 %v682, %v892
      %v957 = vadd.f32 %v683, %v893
      %v958 = vadd.f32 %v684, %v894
      %v959 = vadd.f32 %v685, %v895
      %v960 = vadd.f32 %v686, %v896
      %v961 = vadd.f32 %v687, %v897
      %v962 = vadd.f32 %v688, %v898
      %v963 = vadd.f32 %v689, %v899
      %v964 = vadd.f32 %v690, %v900
      %v965 = vadd.f32 %v691, %v901
      %v966 = vadd.f32 %v692, %v902
      %v967 = vadd.f32 %v693, %v903
      %v968 = vadd.f32 %v694, %v904
      %v969 = vadd.f32 %v695, %v905
      %v970 = vadd.f32 %v696, %v906
      %v971 = vadd.f32 %v697, %v907
      %v972 = vadd.f32 %v698, %v908
      %v973 = vadd.f32 %v699, %v909
      %v974 = vadd.f32 %v700, %v910
      %v975 = vadd.f32 %v701, %v911
      %v976 = vadd.f32 %v702, %v912
      %v977 = vadd.f32 %v703, %v913
      %v978 = vadd.f32 %v704, %v914
      %v979 = vadd.f32 %v705, %v915
      %v980 = vadd.f32 %v706, %v916
      %v981 = vadd.f32 %v707, %v917
      %v982 = vadd.f32 %v708, %v918
      %v983 = vadd.f32 %v709, %v919
      %v984 = vadd.f32 %v710, %v920
      %v985 = vadd.f32 %v711, %v921
      %v986 = vadd.f32 %v712, %v922
      %v987 = vadd.f32 %v713, %v923
      %v988 = vadd.f32 %v714, %v924
      %v989 = vadd.f32 %v715, %v925
      %v990 = vadd.f32 %v716, %v926
      %v991 = vadd.f32 %v717, %v927
      %v992 = vadd.f32 %v718, %v928
      %v993 = vadd.f32 %v719, %v929
      %v994 = vadd.f32 %v720, %v930
      %v995 = vadd.f32 %v721, %v931
      %v996 = vadd.f32 %v722, %v932
      %v997 = vadd.f32 %v723, %v933
      %v998 = vadd.f32 %v724, %v934
      %v999 = vadd.f32 %v725, %v935
      %v1000 = vadd.f32 %v726, %v936
      %v1001 = vadd.f32 %v727, %v937
      %v1002 = vadd.f32 %v728, %v938
      %v1003 = vadd.f32 %v729, %v939
      %v1004 = vadd.f32 %v730, %v940
      %v1006 = vlaneseq
      %v1007 = vshrl.u32 %v1006, 7
      %v1008 = vsub.s32 0, %v1007
      %v1009 = vrot.slane %v176, %v1008
      %v1010 = vlaneseq
      %v1011 = vshrl.u32 %v1010, 7
      %v1012 = vsub.s32 1, %v1011
      %v1013 = vrot.slane %v176, %v1012
      %v1016 = vmul.f32 %v941, %v1009
      %v1017 = vmul.f32 %v942, %v1013
      %v1018 = vmul.f32 %v943, %v1009
      %v1019 = vmul.f32 %v944, %v1013
      %v1020 = vmul.f32 %v945, %v1009
      %v1021 = vmul.f32 %v946, %v1013
      %v1022 = vmul.f32 %v947, %v1009
      %v1023 = vmul.f32 %v948, %v1013
      %v1024 = vmul.f32 %v949, %v1009
      %v1025 = vmul.f32 %v950, %v1013
      %v1026 = vmul.f32 %v951, %v1009
      %v1027 = vmul.f32 %v952, %v1013
      %v1028 = vmul.f32 %v953, %v1009
      %v1029 = vmul.f32 %v954, %v1013
      %v1030 = vmul.f32 %v955, %v1009
      %v1031 = vmul.f32 %v956, %v1013
      %v1032 = vmul.f32 %v957, %v1009
      %v1033 = vmul.f32 %v958, %v1013
      %v1034 = vmul.f32 %v959, %v1009
      %v1035 = vmul.f32 %v960, %v1013
      %v1036 = vmul.f32 %v961, %v1009
      %v1037 = vmul.f32 %v962, %v1013
      %v1038 = vmul.f32 %v963, %v1009
      %v1039 = vmul.f32 %v964, %v1013
      %v1040 = vmul.f32 %v965, %v1009
      %v1041 = vmul.f32 %v966, %v1013
      %v1042 = vmul.f32 %v967, %v1009
      %v1043 = vmul.f32 %v968, %v1013
      %v1044 = vmul.f32 %v969, %v1009
      %v1045 = vmul.f32 %v970, %v1013
      %v1046 = vmul.f32 %v971, %v1009
      %v1047 = vmul.f32 %v972, %v1013
      %v1048 = vmul.f32 %v973, %v1009
      %v1049 = vmul.f32 %v974, %v1013
      %v1050 = vmul.f32 %v975, %v1009
      %v1051 = vmul.f32 %v976, %v1013
      %v1052 = vmul.f32 %v977, %v1009
      %v1053 = vmul.f32 %v978, %v1013
      %v1054 = vmul.f32 %v979, %v1009
      %v1055 = vmul.f32 %v980, %v1013
      %v1056 = vmul.f32 %v981, %v1009
      %v1057 = vmul.f32 %v982, %v1013
      %v1058 = vmul.f32 %v983, %v1009
      %v1059 = vmul.f32 %v984, %v1013
      %v1060 = vmul.f32 %v985, %v1009
      %v1061 = vmul.f32 %v986, %v1013
      %v1062 = vmul.f32 %v987, %v1009
      %v1063 = vmul.f32 %v988, %v1013
      %v1064 = vmul.f32 %v989, %v1009
      %v1065 = vmul.f32 %v990, %v1013
      %v1066 = vmul.f32 %v991, %v1009
      %v1067 = vmul.f32 %v992, %v1013
      %v1068 = vmul.f32 %v993, %v1009
      %v1069 = vmul.f32 %v994, %v1013
      %v1070 = vmul.f32 %v995, %v1009
      %v1071 = vmul.f32 %v996, %v1013
      %v1072 = vmul.f32 %v997, %v1009
      %v1073 = vmul.f32 %v998, %v1013
      %v1074 = vmul.f32 %v999, %v1009
      %v1075 = vmul.f32 %v1000, %v1013
      %v1076 = vmul.f32 %v1001, %v1009
      %v1077 = vmul.f32 %v1002, %v1013
      %v1078 = vmul.f32 %v1003, %v1009
      %v1079 = vmul.f32 %v1004, %v1013
      %v1081 = vlaneseq
      %v1082 = vshrl.u32 %v1081, 7
      %v1083 = vsub.s32 0, %v1082
      %v1084 = vrot.slane %v178, %v1083
      %v1085 = vlaneseq
      %v1086 = vshrl.u32 %v1085, 7
      %v1087 = vsub.s32 1, %v1086
      %v1088 = vrot.slane %v178, %v1087
      %v1091 = vadd.f32 %v1016, %v1084
      %v1092 = vadd.f32 %v1017, %v1088
      %v1093 = vadd.f32 %v1018, %v1084
      %v1094 = vadd.f32 %v1019, %v1088
      %v1095 = vadd.f32 %v1020, %v1084
      %v1096 = vadd.f32 %v1021, %v1088
      %v1097 = vadd.f32 %v1022, %v1084
      %v1098 = vadd.f32 %v1023, %v1088
      %v1099 = vadd.f32 %v1024, %v1084
      %v1100 = vadd.f32 %v1025, %v1088
      %v1101 = vadd.f32 %v1026, %v1084
      %v1102 = vadd.f32 %v1027, %v1088
      %v1103 = vadd.f32 %v1028, %v1084
      %v1104 = vadd.f32 %v1029, %v1088
      %v1105 = vadd.f32 %v1030, %v1084
      %v1106 = vadd.f32 %v1031, %v1088
      %v1107 = vadd.f32 %v1032, %v1084
      %v1108 = vadd.f32 %v1033, %v1088
      %v1109 = vadd.f32 %v1034, %v1084
      %v1110 = vadd.f32 %v1035, %v1088
      %v1111 = vadd.f32 %v1036, %v1084
      %v1112 = vadd.f32 %v1037, %v1088
      %v1113 = vadd.f32 %v1038, %v1084
      %v1114 = vadd.f32 %v1039, %v1088
      %v1115 = vadd.f32 %v1040, %v1084
      %v1116 = vadd.f32 %v1041, %v1088
      %v1117 = vadd.f32 %v1042, %v1084
      %v1118 = vadd.f32 %v1043, %v1088
      %v1119 = vadd.f32 %v1044, %v1084
      %v1120 = vadd.f32 %v1045, %v1088
      %v1121 = vadd.f32 %v1046, %v1084
      %v1122 = vadd.f32 %v1047, %v1088
      %v1123 = vadd.f32 %v1048, %v1084
      %v1124 = vadd.f32 %v1049, %v1088
      %v1125 = vadd.f32 %v1050, %v1084
      %v1126 = vadd.f32 %v1051, %v1088
      %v1127 = vadd.f32 %v1052, %v1084
      %v1128 = vadd.f32 %v1053, %v1088
      %v1129 = vadd.f32 %v1054, %v1084
      %v1130 = vadd.f32 %v1055, %v1088
      %v1131 = vadd.f32 %v1056, %v1084
      %v1132 = vadd.f32 %v1057, %v1088
      %v1133 = vadd.f32 %v1058, %v1084
      %v1134 = vadd.f32 %v1059, %v1088
      %v1135 = vadd.f32 %v1060, %v1084
      %v1136 = vadd.f32 %v1061, %v1088
      %v1137 = vadd.f32 %v1062, %v1084
      %v1138 = vadd.f32 %v1063, %v1088
      %v1139 = vadd.f32 %v1064, %v1084
      %v1140 = vadd.f32 %v1065, %v1088
      %v1141 = vadd.f32 %v1066, %v1084
      %v1142 = vadd.f32 %v1067, %v1088
      %v1143 = vadd.f32 %v1068, %v1084
      %v1144 = vadd.f32 %v1069, %v1088
      %v1145 = vadd.f32 %v1070, %v1084
      %v1146 = vadd.f32 %v1071, %v1088
      %v1147 = vadd.f32 %v1072, %v1084
      %v1148 = vadd.f32 %v1073, %v1088
      %v1149 = vadd.f32 %v1074, %v1084
      %v1150 = vadd.f32 %v1075, %v1088
      %v1151 = vadd.f32 %v1076, %v1084
      %v1152 = vadd.f32 %v1077, %v1088
      %v1153 = vadd.f32 %v1078, %v1084
      %v1154 = vadd.f32 %v1079, %v1088
      %vm1155 = vcmp.gt.f32.partialorder %v180, 0.0
      %v1156 = vmax.f32 %v1091, 0.0
      %v1157 = vmax.f32 %v1092, 0.0
      %v1158 = vmax.f32 %v1093, 0.0
      %v1159 = vmax.f32 %v1094, 0.0
      %v1160 = vmax.f32 %v1095, 0.0
      %v1161 = vmax.f32 %v1096, 0.0
      %v1162 = vmax.f32 %v1097, 0.0
      %v1163 = vmax.f32 %v1098, 0.0
      %v1164 = vmax.f32 %v1099, 0.0
      %v1165 = vmax.f32 %v1100, 0.0
      %v1166 = vmax.f32 %v1101, 0.0
      %v1167 = vmax.f32 %v1102, 0.0
      %v1168 = vmax.f32 %v1103, 0.0
      %v1169 = vmax.f32 %v1104, 0.0
      %v1170 = vmax.f32 %v1105, 0.0
      %v1171 = vmax.f32 %v1106, 0.0
      %v1172 = vmax.f32 %v1107, 0.0
      %v1173 = vmax.f32 %v1108, 0.0
      %v1174 = vmax.f32 %v1109, 0.0
      %v1175 = vmax.f32 %v1110, 0.0
      %v1176 = vmax.f32 %v1111, 0.0
      %v1177 = vmax.f32 %v1112, 0.0
      %v1178 = vmax.f32 %v1113, 0.0
      %v1179 = vmax.f32 %v1114, 0.0
      %v1180 = vmax.f32 %v1115, 0.0
      %v1181 = vmax.f32 %v1116, 0.0
      %v1182 = vmax.f32 %v1117, 0.0
      %v1183 = vmax.f32 %v1118, 0.0
      %v1184 = vmax.f32 %v1119, 0.0
      %v1185 = vmax.f32 %v1120, 0.0
      %v1186 = vmax.f32 %v1121, 0.0
      %v1187 = vmax.f32 %v1122, 0.0
      %v1188 = vmax.f32 %v1123, 0.0
      %v1189 = vmax.f32 %v1124, 0.0
      %v1190 = vmax.f32 %v1125, 0.0
      %v1191 = vmax.f32 %v1126, 0.0
      %v1192 = vmax.f32 %v1127, 0.0
      %v1193 = vmax.f32 %v1128, 0.0
      %v1194 = vmax.f32 %v1129, 0.0
      %v1195 = vmax.f32 %v1130, 0.0
      %v1196 = vmax.f32 %v1131, 0.0
      %v1197 = vmax.f32 %v1132, 0.0
      %v1198 = vmax.f32 %v1133, 0.0
      %v1199 = vmax.f32 %v1134, 0.0
      %v1200 = vmax.f32 %v1135, 0.0
      %v1201 = vmax.f32 %v1136, 0.0
      %v1202 = vmax.f32 %v1137, 0.0
      %v1203 = vmax.f32 %v1138, 0.0
      %v1204 = vmax.f32 %v1139, 0.0
      %v1205 = vmax.f32 %v1140, 0.0
      %v1206 = vmax.f32 %v1141, 0.0
      %v1207 = vmax.f32 %v1142, 0.0
      %v1208 = vmax.f32 %v1143, 0.0
      %v1209 = vmax.f32 %v1144, 0.0
      %v1210 = vmax.f32 %v1145, 0.0
      %v1211 = vmax.f32 %v1146, 0.0
      %v1212 = vmax.f32 %v1147, 0.0
      %v1213 = vmax.f32 %v1148, 0.0
      %v1214 = vmax.f32 %v1149, 0.0
      %v1215 = vmax.f32 %v1150, 0.0
      %v1216 = vmax.f32 %v1151, 0.0
      %v1217 = vmax.f32 %v1152, 0.0
      %v1218 = vmax.f32 %v1153, 0.0
      %v1219 = vmax.f32 %v1154, 0.0
      %v1220 = vsel %vm1155, 1, 0
      %v1221 = vlaneseq
      %v1222 = vshrl.u32 %v1221, 7
      %v1223 = vsub.s32 0, %v1222
      %v1224 = vrot.slane %v1220, %v1223
      %v1225 = vlaneseq
      %v1226 = vshrl.u32 %v1225, 7
      %v1227 = vsub.s32 1, %v1226
      %v1228 = vrot.slane %v1220, %v1227
      %vm1229 = vcmp.eq.s32.totalorder %v1224, 1
      %vm1230 = vcmp.eq.s32.totalorder %v1228, 1
      %v1231 = vsel %vm1229, %v1156, %v1091
      %v1232 = vsel %vm1230, %v1157, %v1092
      %v1233 = vsel %vm1229, %v1158, %v1093
      %v1234 = vsel %vm1230, %v1159, %v1094
      %v1235 = vsel %vm1229, %v1160, %v1095
      %v1236 = vsel %vm1230, %v1161, %v1096
      %v1237 = vsel %vm1229, %v1162, %v1097
      %v1238 = vsel %vm1230, %v1163, %v1098
      %v1239 = vsel %vm1229, %v1164, %v1099
      %v1240 = vsel %vm1230, %v1165, %v1100
      %v1241 = vsel %vm1229, %v1166, %v1101
      %v1242 = vsel %vm1230, %v1167, %v1102
      %v1243 = vsel %vm1229, %v1168, %v1103
      %v1244 = vsel %vm1230, %v1169, %v1104
      %v1245 = vsel %vm1229, %v1170, %v1105
      %v1246 = vsel %vm1230, %v1171, %v1106
      %v1247 = vsel %vm1229, %v1172, %v1107
      %v1248 = vsel %vm1230, %v1173, %v1108
      %v1249 = vsel %vm1229, %v1174, %v1109
      %v1250 = vsel %vm1230, %v1175, %v1110
      %v1251 = vsel %vm1229, %v1176, %v1111
      %v1252 = vsel %vm1230, %v1177, %v1112
      %v1253 = vsel %vm1229, %v1178, %v1113
      %v1254 = vsel %vm1230, %v1179, %v1114
      %v1255 = vsel %vm1229, %v1180, %v1115
      %v1256 = vsel %vm1230, %v1181, %v1116
      %v1257 = vsel %vm1229, %v1182, %v1117
      %v1258 = vsel %vm1230, %v1183, %v1118
      %v1259 = vsel %vm1229, %v1184, %v1119
      %v1260 = vsel %vm1230, %v1185, %v1120
      %v1261 = vsel %vm1229, %v1186, %v1121
      %v1262 = vsel %vm1230, %v1187, %v1122
      %v1263 = vsel %vm1229, %v1188, %v1123
      %v1264 = vsel %vm1230, %v1189, %v1124
      %v1265 = vsel %vm1229, %v1190, %v1125
      %v1266 = vsel %vm1230, %v1191, %v1126
      %v1267 = vsel %vm1229, %v1192, %v1127
      %v1268 = vsel %vm1230, %v1193, %v1128
      %v1269 = vsel %vm1229, %v1194, %v1129
      %v1270 = vsel %vm1230, %v1195, %v1130
      %v1271 = vsel %vm1229, %v1196, %v1131
      %v1272 = vsel %vm1230, %v1197, %v1132
      %v1273 = vsel %vm1229, %v1198, %v1133
      %v1274 = vsel %vm1230, %v1199, %v1134
      %v1275 = vsel %vm1229, %v1200, %v1135
      %v1276 = vsel %vm1230, %v1201, %v1136
      %v1277 = vsel %vm1229, %v1202, %v1137
      %v1278 = vsel %vm1230, %v1203, %v1138
      %v1279 = vsel %vm1229, %v1204, %v1139
      %v1280 = vsel %vm1230, %v1205, %v1140
      %v1281 = vsel %vm1229, %v1206, %v1141
      %v1282 = vsel %vm1230, %v1207, %v1142
      %v1283 = vsel %vm1229, %v1208, %v1143
      %v1284 = vsel %vm1230, %v1209, %v1144
      %v1285 = vsel %vm1229, %v1210, %v1145
      %v1286 = vsel %vm1230, %v1211, %v1146
      %v1287 = vsel %vm1229, %v1212, %v1147
      %v1288 = vsel %vm1230, %v1213, %v1148
      %v1289 = vsel %vm1229, %v1214, %v1149
      %v1290 = vsel %vm1230, %v1215, %v1150
      %v1291 = vsel %vm1229, %v1216, %v1151
      %v1292 = vsel %vm1230, %v1217, %v1152
      %v1293 = vsel %vm1229, %v1218, %v1153
      %v1294 = vsel %vm1230, %v1219, %v1154
      %1295 = vst [vmem:[%s174] sm:$0xff] %v1231
      %1296 = vst [vmem:[%s174 + $0x8] sm:$0xff] %v1232
      %1297 = vst [vmem:[%s174 + $0x10] sm:$0xff] %v1233
      %1298 = vst [vmem:[%s174 + $0x18] sm:$0xff] %v1234
      %1299 = vst [vmem:[%s174 + $0x20] sm:$0xff] %v1235
      %1300 = vst [vmem:[%s174 + $0x28] sm:$0xff] %v1236
      %1301 = vst [vmem:[%s174 + $0x30] sm:$0xff] %v1237
      %1302 = vst [vmem:[%s174 + $0x38] sm:$0xff] %v1238
      %1303 = vst [vmem:[%s174 + $0x40] sm:$0xff] %v1239
      %1304 = vst [vmem:[%s174 + $0x48] sm:$0xff] %v1240
      %1305 = vst [vmem:[%s174 + $0x50] sm:$0xff] %v1241
      %1306 = vst [vmem:[%s174 + $0x58] sm:$0xff] %v1242
      %1307 = vst [vmem:[%s174 + $0x60] sm:$0xff] %v1243
      %1308 = vst [vmem:[%s174 + $0x68] sm:$0xff] %v1244
      %1309 = vst [vmem:[%s174 + $0x70] sm:$0xff] %v1245
      %1310 = vst [vmem:[%s174 + $0x78] sm:$0xff] %v1246
      %1311 = vst [vmem:[%s174 + $0x80] sm:$0xff] %v1247
      %1312 = vst [vmem:[%s174 + $0x88] sm:$0xff] %v1248
      %1313 = vst [vmem:[%s174 + $0x90] sm:$0xff] %v1249
      %1314 = vst [vmem:[%s174 + $0x98] sm:$0xff] %v1250
      %1315 = vst [vmem:[%s174 + $0xa0] sm:$0xff] %v1251
      %1316 = vst [vmem:[%s174 + $0xa8] sm:$0xff] %v1252
      %1317 = vst [vmem:[%s174 + $0xb0] sm:$0xff] %v1253
      %1318 = vst [vmem:[%s174 + $0xb8] sm:$0xff] %v1254
      %1319 = vst [vmem:[%s174 + $0xc0] sm:$0xff] %v1255
      %1320 = vst [vmem:[%s174 + $0xc8] sm:$0xff] %v1256
      %1321 = vst [vmem:[%s174 + $0xd0] sm:$0xff] %v1257
      %1322 = vst [vmem:[%s174 + $0xd8] sm:$0xff] %v1258
      %1323 = vst [vmem:[%s174 + $0xe0] sm:$0xff] %v1259
      %1324 = vst [vmem:[%s174 + $0xe8] sm:$0xff] %v1260
      %1325 = vst [vmem:[%s174 + $0xf0] sm:$0xff] %v1261
      %1326 = vst [vmem:[%s174 + $0xf8] sm:$0xff] %v1262
      %1327 = vst [vmem:[%s174 + $0x100] sm:$0xff] %v1263
      %1328 = vst [vmem:[%s174 + $0x108] sm:$0xff] %v1264
      %1329 = vst [vmem:[%s174 + $0x110] sm:$0xff] %v1265
      %1330 = vst [vmem:[%s174 + $0x118] sm:$0xff] %v1266
      %1331 = vst [vmem:[%s174 + $0x120] sm:$0xff] %v1267
      %1332 = vst [vmem:[%s174 + $0x128] sm:$0xff] %v1268
      %1333 = vst [vmem:[%s174 + $0x130] sm:$0xff] %v1269
      %1334 = vst [vmem:[%s174 + $0x138] sm:$0xff] %v1270
      %1335 = vst [vmem:[%s174 + $0x140] sm:$0xff] %v1271
      %1336 = vst [vmem:[%s174 + $0x148] sm:$0xff] %v1272
      %1337 = vst [vmem:[%s174 + $0x150] sm:$0xff] %v1273
      %1338 = vst [vmem:[%s174 + $0x158] sm:$0xff] %v1274
      %1339 = vst [vmem:[%s174 + $0x160] sm:$0xff] %v1275
      %1340 = vst [vmem:[%s174 + $0x168] sm:$0xff] %v1276
      %1341 = vst [vmem:[%s174 + $0x170] sm:$0xff] %v1277
      %1342 = vst [vmem:[%s174 + $0x178] sm:$0xff] %v1278
      %1343 = vst [vmem:[%s174 + $0x180] sm:$0xff] %v1279
      %1344 = vst [vmem:[%s174 + $0x188] sm:$0xff] %v1280
      %1345 = vst [vmem:[%s174 + $0x190] sm:$0xff] %v1281
      %1346 = vst [vmem:[%s174 + $0x198] sm:$0xff] %v1282
      %1347 = vst [vmem:[%s174 + $0x1a0] sm:$0xff] %v1283
      %1348 = vst [vmem:[%s174 + $0x1a8] sm:$0xff] %v1284
      %1349 = vst [vmem:[%s174 + $0x1b0] sm:$0xff] %v1285
      %1350 = vst [vmem:[%s174 + $0x1b8] sm:$0xff] %v1286
      %1351 = vst [vmem:[%s174 + $0x1c0] sm:$0xff] %v1287
      %1352 = vst [vmem:[%s174 + $0x1c8] sm:$0xff] %v1288
      %1353 = vst [vmem:[%s174 + $0x1d0] sm:$0xff] %v1289
      %1354 = vst [vmem:[%s174 + $0x1d8] sm:$0xff] %v1290
      %1355 = vst [vmem:[%s174 + $0x1e0] sm:$0xff] %v1291
      %1356 = vst [vmem:[%s174 + $0x1e8] sm:$0xff] %v1292
      %1357 = vst [vmem:[%s174 + $0x1f0] sm:$0xff] %v1293
      %1358 = vst [vmem:[%s174 + $0x1f8] sm:$0xff] %v1294
      %s1359 = smul.u32 32, %s14
      %p1360 = scmp.lt.s32.totalorder %s1359, 63
      %s1361 = scalar_select %p1360, %s1359, 63
      %s1362 = smul.addr %s1361, 2
      %s1363 = smul.addr %s1362, 8
      %s1364 = scalar_lea.vmem %s3, %s1363
      // Predicated region
      $region33: #{ske_mixf.5} parent=31 // pred_check
        %p1365 = pneg %p100
      $region34: #{ske_mixf.5} parent=31 // pred_check_branch
        %1367 = sbr.rel (%p1365) target = $region36
      $region35: #{ske_mixf.5} parent=31 // pred_region
        %s1368 = smul.u32 32, %s14
      $region36: #{ske_mixf.5} parent=31 // pred_fallthru
        _
    $region32: #{ske_mixf.5} parent=5 // pred_fallthru
      _
    %p1369 = scmp.le.s32.totalorder 2, %s9
    // Predicated region
    $region37: #{ske_mixf.5} parent=5 // pred_check
      %p1370 = pneg %p1369
    $region38: #{ske_mixf.5} parent=5 // pred_check_branch
      %1372 = sbr.rel (%p1370) target = $region40
    $region39: #{ske_mixf.5} parent=5 // pred_region
      %s1373 = ssub.s32 %s9, 2
      // Predicated region
      $region41: #{ske_mixf.5} parent=39 // pred_check
        %p1374 = pneg %p106
      $region42: #{ske_mixf.5} parent=39 // pred_check_branch
        %1376 = sbr.rel (%p1374) target = $region44
      $region43: #{ske_mixf.5} parent=39 // pred_region
        %s1377 = smul.u32 32, %s15
        %p1378 = scmp.lt.s32.totalorder %s1377, 63
        %s1379 = scalar_select %p1378, %s1377, 63
        %s1380 = smul.addr %s1379, 2
        %s1381 = smul.addr %s1380, 8
        %s1382 = scalar_lea.vmem %s3, %s1381
      $region44: #{ske_mixf.5} parent=39 // pred_fallthru
        _
    $region40: #{ske_mixf.5} parent=5 // pred_fallthru
      _
  $region6: #{ske_mixf.5} parent=0 // loop_footer
    %s13 = sadd.s32 1, %s9
  $region7: #{ske_mixf.5} parent=0 // loop_footer_branch
    %8 = sbr.rel target = $region3
  $region8: #{ske_mixf.5} parent=0 // loop_exit
    _

// kernel: ske_mixf.6
$region0: #{ske_mixf.6}
  #allocation0 [shape = 'u32[]', space=smem, size = 0x4, offset = 0x4, fixed_abs, tag = 'smem constant byte address 0x4 - core index']
  #allocation1 [shape = 'u32[144,128]{1,0:T(1,128)}', space=vmem, size = 0x12000, scoped, tag = 'internal scratch']
  %s0 = inlined_call_operand.vmem [shape: bf16[2,4,80,75], index: 0, kind: input, shape index: {}]
  %s1 = inlined_call_operand.vmem [shape: f32[2,12,25,25], index: 1, kind: input, shape index: {}]
  %s2 = inlined_call_operand.vmem [shape: f32[2,9,25,25], index: 2, kind: input, shape index: {}]
  %s3 = inlined_call_operand.vmem [shape: f32[3,25,25], index: 3, kind: input, shape index: {}]
  %s4 = inlined_call_operand.vmem [shape: f32[2,4,80,25], index: 4, kind: output, shape index: {}]
  %s5 = sld [smem:[#allocation0]]
  $region49: #{ske_mixf.6} parent=0
    _
  %s7 = ssub.s32 1, %s5
  %s8 = scalar_select 0, %s7, %s5
  loop: start=0, step=1, limit=4
  $region2: #{ske_mixf.6} parent=0 // loop_pre_header
    _
  $region3: #{ske_mixf.6} parent=0 // loop_header
    %s10 = sphi 0, %s14
    %p11 = scmp.ge.s32.totalorder %s10, 4
    %s20 = sphi 0, %s22
    %s23 = sphi 0, %s20
    %s24 = sphi 0, %s23
    %s40 = sphi 0, %s24
    %s46 = sphi 0, %s48
    %s49 = sphi 0, %s46
    %s50 = sphi 0, %s49
    %s66 = sphi 0, %s50
    %s72 = sphi 0, %s74
    %s75 = sphi 0, %s72
    %s76 = sphi 0, %s75
    %s92 = sphi 0, %s76
    %s96 = sphi 0, %s96
    %s98 = sphi 0, %s96
    %s99 = sphi 0, %s98
    %s113 = sphi 0, %s99
    %s119 = sphi 0, %s121
    %s122 = sphi 0, %s119
    %s123 = sphi 0, %s122
    %s139 = sphi 0, %s123
  $region4: #{ske_mixf.6} parent=0 // loop_header_branch
    %13 = sbr.rel (%p11) target = $region8
  $region5: #{ske_mixf.6} parent=0 // loop_body
    %s15 = ssub.s32 %s10, 1
    %s16 = ssub.s32 %s10, 2
    %s17 = sadd.s32 %s10, 1
    %s18 = ssub.s32 %s10, %s17
    %p19 = scmp.eq.s32.totalorder %s18, 0
    %s21 = sadd.s32 %s20, 1
    %s22 = scalar_select %p19, %s20, %s21
    %p25 = pneg %p19
    %p26 = scmp.eq.s32.totalorder %s10, 1
    %p27 = por %p25, %p26
    %p28 = scmp.ne.s32.totalorder %s20, %s23
    %p29 = scmp.eq.s32.totalorder %s10, 0
    %p30 = por %p28, %p29
    %p31 = scmp.ne.s32.totalorder %s20, %s23
    %p32 = scmp.eq.s32.totalorder %s15, 1
    %p33 = por %p31, %p32
    %p34 = scmp.ne.s32.totalorder %s23, %s24
    %p35 = scmp.eq.s32.totalorder %s15, 0
    %p36 = por %p34, %p35
    %p37 = scmp.ne.s32.totalorder %s23, %s24
    %p38 = scmp.eq.s32.totalorder %s16, 1
    %p39 = por %p37, %p38
    %p41 = scmp.ne.s32.totalorder %s24, %s40
    %p42 = scmp.eq.s32.totalorder %s16, 0
    %p43 = por %p41, %p42
    %s44 = ssub.s32 %s10, %s17
    %p45 = scmp.eq.s32.totalorder %s44, 0
    %s47 = sadd.s32 %s46, 1
    %s48 = scalar_select %p45, %s46, %s47
    %p51 = pneg %p45
    %p52 = scmp.eq.s32.totalorder %s10, 1
    %p53 = por %p51, %p52
    %p54 = scmp.ne.s32.totalorder %s46, %s49
    %p55 = scmp.eq.s32.totalorder %s10, 0
    %p56 = por %p54, %p55
    %p57 = scmp.ne.s32.totalorder %s46, %s49
    %p58 = scmp.eq.s32.totalorder %s15, 1
    %p59 = por %p57, %p58
    %p60 = scmp.ne.s32.totalorder %s49, %s50
    %p61 = scmp.eq.s32.totalorder %s15, 0
    %p62 = por %p60, %p61
    %p63 = scmp.ne.s32.totalorder %s49, %s50
    %p64 = scmp.eq.s32.totalorder %s16, 1
    %p65 = por %p63, %p64
    %p67 = scmp.ne.s32.totalorder %s50, %s66
    %p68 = scmp.eq.s32.totalorder %s16, 0
    %p69 = por %p67, %p68
    %s70 = ssub.s32 %s10, %s17
    %p71 = scmp.eq.s32.totalorder %s70, 0
    %s73 = sadd.s32 %s72, 1
    %s74 = scalar_select %p71, %s72, %s73
    %p77 = pneg %p71
    %p78 = scmp.eq.s32.totalorder %s10, 1
    %p79 = por %p77, %p78
    %p80 = scmp.ne.s32.totalorder %s72, %s75
    %p81 = scmp.eq.s32.totalorder %s10, 0
    %p82 = por %p80, %p81
    %p83 = scmp.ne.s32.totalorder %s72, %s75
    %p84 = scmp.eq.s32.totalorder %s15, 1
    %p85 = por %p83, %p84
    %p86 = scmp.ne.s32.totalorder %s75, %s76
    %p87 = scmp.eq.s32.totalorder %s15, 0
    %p88 = por %p86, %p87
    %p89 = scmp.ne.s32.totalorder %s75, %s76
    %p90 = scmp.eq.s32.totalorder %s16, 1
    %p91 = por %p89, %p90
    %p93 = scmp.ne.s32.totalorder %s76, %s92
    %p94 = scmp.eq.s32.totalorder %s16, 0
    %p95 = por %p93, %p94
    %s97 = sadd.s32 %s96, 1
    %p100 = scmp.eq.s32.totalorder %s10, 1
    %p101 = scmp.ne.s32.totalorder %s96, %s98
    %p102 = scmp.eq.s32.totalorder %s10, 0
    %p103 = por %p101, %p102
    %p104 = scmp.ne.s32.totalorder %s96, %s98
    %p105 = scmp.eq.s32.totalorder %s15, 1
    %p106 = por %p104, %p105
    %p107 = scmp.ne.s32.totalorder %s98, %s99
    %p108 = scmp.eq.s32.totalorder %s15, 0
    %p109 = por %p107, %p108
    %p110 = scmp.ne.s32.totalorder %s98, %s99
    %p111 = scmp.eq.s32.totalorder %s16, 1
    %p112 = por %p110, %p111
    %p114 = scmp.ne.s32.totalorder %s99, %s113
    %p115 = scmp.eq.s32.totalorder %s16, 0
    %p116 = por %p114, %p115
    %s117 = ssub.s32 %s10, %s17
    %p118 = scmp.eq.s32.totalorder %s117, 0
    %s120 = sadd.s32 %s119, 1
    %s121 = scalar_select %p118, %s119, %s120
    %p124 = pneg %p118
    %p125 = scmp.eq.s32.totalorder %s10, 1
    %p126 = por %p124, %p125
    %p127 = scmp.ne.s32.totalorder %s119, %s122
    %p128 = scmp.eq.s32.totalorder %s10, 0
    %p129 = por %p127, %p128
    %p130 = scmp.ne.s32.totalorder %s119, %s122
    %p131 = scmp.eq.s32.totalorder %s15, 1
    %p132 = por %p130, %p131
    %p133 = scmp.ne.s32.totalorder %s122, %s123
    %p134 = scmp.eq.s32.totalorder %s15, 0
    %p135 = por %p133, %p134
    %p136 = scmp.ne.s32.totalorder %s122, %s123
    %p137 = scmp.eq.s32.totalorder %s16, 1
    %p138 = por %p136, %p137
    %p140 = scmp.ne.s32.totalorder %s123, %s139
    %p141 = scmp.eq.s32.totalorder %s16, 0
    %p142 = por %p140, %p141
    %p143 = scmp.le.s32.totalorder 1, %s10
    %p144 = scmp.lt.s32.totalorder %s10, 3
    %p145 = pnand %p143, %p144
    %p146 = pneg %p145
    // Predicated region
    $region9: #{ske_mixf.6} parent=5 // pred_check
      _
    $region10: #{ske_mixf.6} parent=5 // pred_check_branch
      %148 = sbr.rel (%p145) target = $region12
    $region11: #{ske_mixf.6} parent=5 // pred_region
      %s149 = ssub.s32 %s10, 1
      // Predicated region
      $region13: #{ske_mixf.6} parent=11 // pred_check
        %p150 = pneg %p109
      $region14: #{ske_mixf.6} parent=11 // pred_check_branch
        %152 = sbr.rel (%p150) target = $region16
      $region15: #{ske_mixf.6} parent=11 // pred_region
        _
      $region16: #{ske_mixf.6} parent=11 // pred_fallthru
        _
    $region12: #{ske_mixf.6} parent=5 // pred_fallthru
      _
    %p153 = scmp.lt.s32.totalorder %s10, 2
    // Predicated region
    $region17: #{ske_mixf.6} parent=5 // pred_check
      %p154 = pneg %p153
    $region18: #{ske_mixf.6} parent=5 // pred_check_branch
      %156 = sbr.rel (%p154) target = $region20
    $region19: #{ske_mixf.6} parent=5 // pred_region
      // Predicated region
      $region21: #{ske_mixf.6} parent=19 // pred_check
        %p157 = pneg %p30
      $region22: #{ske_mixf.6} parent=19 // pred_check_branch
        %159 = sbr.rel (%p157) target = $region24
      $region23: #{ske_mixf.6} parent=19 // pred_region
        %p160 = scmp.lt.s32.totalorder %s10, 1
        %s161 = scalar_select %p160, %s10, 1
        %s162 = smul.addr %s161, 40
        %s163 = smul.addr %s162, 4
        %s164 = scalar_lea.vmem %s0, %s163
      $region24: #{ske_mixf.6} parent=19 // pred_fallthru
        _
      // Predicated region
      $region25: #{ske_mixf.6} parent=19 // pred_check
        %p165 = pneg %p56
      $region26: #{ske_mixf.6} parent=19 // pred_check_branch
        %167 = sbr.rel (%p165) target = $region28
      $region27: #{ske_mixf.6} parent=19 // pred_region
        %p168 = scmp.lt.s32.totalorder %s10, 1
        %s169 = scalar_select %p168, %s10, 1
        %s170 = smul.addr %s169, 48
        %s171 = smul.addr %s170, 8
        %s172 = scalar_lea.vmem %s1, %s171
      $region28: #{ske_mixf.6} parent=19 // pred_fallthru
        _
      // Predicated region
      $region29: #{ske_mixf.6} parent=19 // pred_check
        %p173 = pneg %p82
      $region30: #{ske_mixf.6} parent=19 // pred_check_branch
        %175 = sbr.rel (%p173) target = $region32
      $region31: #{ske_mixf.6} parent=19 // pred_region
        %p176 = scmp.lt.s32.totalorder %s10, 1
        %s177 = scalar_select %p176, %s10, 1
        %s178 = smul.addr %s177, 36
        %s179 = smul.addr %s178, 8
        %s180 = scalar_lea.vmem %s2, %s179
      $region32: #{ske_mixf.6} parent=19 // pred_fallthru
        _
    $region20: #{ske_mixf.6} parent=5 // pred_fallthru
      _
    %p181 = scmp.le.s32.totalorder 1, %s10
    %p182 = scmp.lt.s32.totalorder %s10, 3
    %p183 = pnand %p181, %p182
    %p184 = pneg %p183
    // Predicated region
    $region33: #{ske_mixf.6} parent=5 // pred_check
      _
    $region34: #{ske_mixf.6} parent=5 // pred_check_branch
      %186 = sbr.rel (%p183) target = $region36
    $region35: #{ske_mixf.6} parent=5 // pred_region
      %s187 = ssub.s32 %s10, 1
      %p188 = scmp.lt.s32.totalorder %s15, 1
      %s189 = scalar_select %p188, %s15, 1
      %s190 = smul.addr %s189, 40
      %s191 = smul.addr %s190, 4
      %s192 = scalar_lea.vmem %s0, %s191
      %p193 = pneg %p36
      %p194 = pneg %p33
      %p195 = scmp.lt.s32.totalorder %s15, 1
      %s196 = scalar_select %p195, %s15, 1
      %s197 = smul.addr %s196, 48
      %s198 = smul.addr %s197, 8
      %s199 = scalar_lea.vmem %s1, %s198
      %p200 = pneg %p62
      %p201 = pneg %p59
      %p202 = scmp.lt.s32.totalorder %s15, 1
      %s203 = scalar_select %p202, %s15, 1
      %s204 = smul.addr %s203, 36
      %s205 = smul.addr %s204, 8
      %s206 = scalar_lea.vmem %s2, %s205
      %p207 = pneg %p88
      %p208 = pneg %p85
      %p209 = pneg %p109
      %p210 = pneg %p106
      %p211 = pneg %p135
      %p212 = pneg %p132
      %p213 = scmp.lt.s32.totalorder %s15, 1
      %s214 = scalar_select %p213, %s15, 1
      %s215 = smul.addr %s214, 40
      %s216 = smul.addr %s215, 8
      %s217 = scalar_lea.vmem %s4, %s216
      %p218 = scmp.lt.s32.totalorder %s15, 1
      %s219 = scalar_select %p218, %s15, 1
      %s220 = smul.addr %s219, 40
      %s221 = smul.addr %s220, 4
      %s222 = scalar_lea.vmem %s0, %s221
      %p223 = scmp.lt.s32.totalorder %s15, 1
      %s224 = scalar_select %p223, %s15, 1
      %s225 = smul.addr %s224, 48
      %s226 = smul.addr %s225, 8
      %s227 = scalar_lea.vmem %s1, %s226
      %p228 = scmp.lt.s32.totalorder %s15, 1
      %s229 = scalar_select %p228, %s15, 1
      %s230 = smul.addr %s229, 36
      %s231 = smul.addr %s230, 8
      %s232 = scalar_lea.vmem %s2, %s231
      %p233 = scmp.lt.s32.totalorder %s15, 1
      %s234 = scalar_select %p233, %s15, 1
      %s235 = smul.addr %s234, 40
      %s236 = smul.addr %s235, 8
      %s237 = scalar_lea.vmem %s4, %s236
      %v239 = vld [vmem:[%s232] sm:$0xff]
      %v240 = vld [vmem:[%s232 + $0x8] sm:$0xff]
      %v241 = vld [vmem:[%s232 + $0x10] sm:$0xff]
      %v242 = vld [vmem:[%s232 + $0x18] sm:$0x1]
      %vm243 = vcmask 203776
      %v244 = vsel %vm243, %v239, -inf
      %245 = vmax.xlane.f32.xlu0 %v244
      %v246 = vpop.xlane.xlu0 %245
      %v247 = vsel %vm243, %v240, -inf
      %248 = vmax.xlane.f32.xlu0 %v247
      %v249 = vpop.xlane.xlu0 %248
      %v250 = vsel %vm243, %v241, -inf
      %251 = vmax.xlane.f32.xlu0 %v250
      %v252 = vpop.xlane.xlu0 %251
      %vm253 = vcmask 196608
      %v254 = vsel %vm253, %v242, -inf
      %255 = vmax.xlane.f32.xlu0 %v254
      %v256 = vpop.xlane.xlu0 %255
      %v257 = vsub.f32 %v239, %v246
      %v258 = vsub.f32 %v240, %v249
      %v259 = vsub.f32 %v241, %v252
      %v260 = vsub.f32 %v242, %v256
      %v261 = vmul.f32 %v257, 1.442695
      %v262 = vpow.pop %v261
      %v263 = vmul.f32 %v258, 1.442695
      %v264 = vpow.pop %v263
      %v265 = vmul.f32 %v259, 1.442695
      %v266 = vpow.pop %v265
      %v267 = vmul.f32 %v260, 1.442695
      %v268 = vpow.pop %v267
      %v269 = vsel %vm243, %v262, 0.0
      %270 = vadd.xlane.f32.xlu0 %v269
      %v271 = vpop.xlane.xlu0 %270
      %v272 = vsel %vm243, %v264, 0.0
      %273 = vadd.xlane.f32.xlu0 %v272
      %v274 = vpop.xlane.xlu0 %273
      %v275 = vsel %vm243, %v266, 0.0
      %276 = vadd.xlane.f32.xlu0 %v275
      %v277 = vpop.xlane.xlu0 %276
      %v278 = vsel %vm253, %v268, 0.0
      %279 = vadd.xlane.f32.xlu0 %v278
      %v280 = vpop.xlane.xlu0 %279
      %v281 = vrcp.pop %v271
      %v282 = vmul.f32 %v262, %v281
      %v283 = vrcp.pop %v274
      %v284 = vmul.f32 %v264, %v283
      %v285 = vrcp.pop %v277
      %v286 = vmul.f32 %v266, %v285
      %v287 = vrcp.pop %v280
      %v288 = vmul.f32 %v268, %v287
      %s289 = scalar_lea.vmem %s232, 32
      %v290 = vld [vmem:[%s289] sm:$0xff]
      %v291 = vld [vmem:[%s289 + $0x8] sm:$0xff]
      %v292 = vld [vmem:[%s289 + $0x10] sm:$0xff]
      %v293 = vld [vmem:[%s289 + $0x18] sm:$0x1]
      %v294 = vsel %vm243, %v290, -inf
      %295 = vmax.xlane.f32.xlu0 %v294
      %v296 = vpop.xlane.xlu0 %295
      %v297 = vsel %vm243, %v291, -inf
      %298 = vmax.xlane.f32.xlu0 %v297
      %v299 = vpop.xlane.xlu0 %298
      %v300 = vsel %vm243, %v292, -inf
      %301 = vmax.xlane.f32.xlu0 %v300
      %v302 = vpop.xlane.xlu0 %301
      %v303 = vsel %vm253, %v293, -inf
      %304 = vmax.xlane.f32.xlu0 %v303
      %v305 = vpop.xlane.xlu0 %304
      %v306 = vsub.f32 %v290, %v296
      %v307 = vsub.f32 %v291, %v299
      %v308 = vsub.f32 %v292, %v302
      %v309 = vsub.f32 %v293, %v305
      %v310 = vmul.f32 %v306, 1.442695
      %v311 = vpow.pop %v310
      %v312 = vmul.f32 %v307, 1.442695
      %v313 = vpow.pop %v312
      %v314 = vmul.f32 %v308, 1.442695
      %v315 = vpow.pop %v314
      %v316 = vmul.f32 %v309, 1.442695
      %v317 = vpow.pop %v316
      %v318 = vsel %vm243, %v311, 0.0
      %319 = vadd.xlane.f32.xlu0 %v318
      %v320 = vpop.xlane.xlu0 %319
      %v321 = vsel %vm243, %v313, 0.0
      %322 = vadd.xlane.f32.xlu0 %v321
      %v323 = vpop.xlane.xlu0 %322
      %v324 = vsel %vm243, %v315, 0.0
      %325 = vadd.xlane.f32.xlu0 %v324
      %v326 = vpop.xlane.xlu0 %325
      %v327 = vsel %vm253, %v317, 0.0
      %328 = vadd.xlane.f32.xlu0 %v327
      %v329 = vpop.xlane.xlu0 %328
      %v330 = vrcp.pop %v320
      %v331 = vmul.f32 %v311, %v330
      %v332 = vrcp.pop %v323
      %v333 = vmul.f32 %v313, %v332
      %v334 = vrcp.pop %v326
      %v335 = vmul.f32 %v315, %v334
      %v336 = vrcp.pop %v329
      %v337 = vmul.f32 %v317, %v336
      %s338 = scalar_lea.vmem %s232, 64
      %v339 = vld [vmem:[%s338] sm:$0xff]
      %v340 = vld [vmem:[%s338 + $0x8] sm:$0xff]
      %v341 = vld [vmem:[%s338 + $0x10] sm:$0xff]
      %v342 = vld [vmem:[%s338 + $0x18] sm:$0x1]
      %v343 = vsel %vm243, %v339, -inf
      %344 = vmax.xlane.f32.xlu0 %v343
      %v345 = vpop.xlane.xlu0 %344
      %v346 = vsel %vm243, %v340, -inf
      %347 = vmax.xlane.f32.xlu0 %v346
      %v348 = vpop.xlane.xlu0 %347
      %v349 = vsel %vm243, %v341, -inf
      %350 = vmax.xlane.f32.xlu0 %v349
      %v351 = vpop.xlane.xlu0 %350
      %v352 = vsel %vm253, %v342, -inf
      %353 = vmax.xlane.f32.xlu0 %v352
      %v354 = vpop.xlane.xlu0 %353
      %v355 = vsub.f32 %v339, %v345
      %v356 = vsub.f32 %v340, %v348
      %v357 = vsub.f32 %v341, %v351
      %v358 = vsub.f32 %v342, %v354
      %v359 = vmul.f32 %v355, 1.442695
      %v360 = vpow.pop %v359
      %v361 = vmul.f32 %v356, 1.442695
      %v362 = vpow.pop %v361
      %v363 = vmul.f32 %v357, 1.442695
      %v364 = vpow.pop %v363
      %v365 = vmul.f32 %v358, 1.442695
      %v366 = vpow.pop %v365
      %v367 = vsel %vm243, %v360, 0.0
      %368 = vadd.xlane.f32.xlu0 %v367
      %v369 = vpop.xlane.xlu0 %368
      %v370 = vsel %vm243, %v362, 0.0
      %371 = vadd.xlane.f32.xlu0 %v370
      %v372 = vpop.xlane.xlu0 %371
      %v373 = vsel %vm243, %v364, 0.0
      %374 = vadd.xlane.f32.xlu0 %v373
      %v375 = vpop.xlane.xlu0 %374
      %v376 = vsel %vm253, %v366, 0.0
      %377 = vadd.xlane.f32.xlu0 %v376
      %v378 = vpop.xlane.xlu0 %377
      %v379 = vrcp.pop %v369
      %v380 = vmul.f32 %v360, %v379
      %v381 = vrcp.pop %v372
      %v382 = vmul.f32 %v362, %v381
      %v383 = vrcp.pop %v375
      %v384 = vmul.f32 %v364, %v383
      %v385 = vrcp.pop %v378
      %v386 = vmul.f32 %v366, %v385
      %s387 = scalar_lea.vmem %s232, 96
      %v388 = vld [vmem:[%s387] sm:$0xff]
      %v389 = vld [vmem:[%s387 + $0x8] sm:$0xff]
      %v390 = vld [vmem:[%s387 + $0x10] sm:$0xff]
      %v391 = vld [vmem:[%s387 + $0x18] sm:$0x1]
      %v392 = vsel %vm243, %v388, -inf
      %393 = vmax.xlane.f32.xlu0 %v392
      %v394 = vpop.xlane.xlu0 %393
      %v395 = vsel %vm243, %v389, -inf
      %396 = vmax.xlane.f32.xlu0 %v395
      %v397 = vpop.xlane.xlu0 %396
      %v398 = vsel %vm243, %v390, -inf
      %399 = vmax.xlane.f32.xlu0 %v398
      %v400 = vpop.xlane.xlu0 %399
      %v401 = vsel %vm253, %v391, -inf
      %402 = vmax.xlane.f32.xlu0 %v401
      %v403 = vpop.xlane.xlu0 %402
      %v404 = vsub.f32 %v388, %v394
      %v405 = vsub.f32 %v389, %v397
      %v406 = vsub.f32 %v390, %v400
      %v407 = vsub.f32 %v391, %v403
      %v408 = vmul.f32 %v404, 1.442695
      %v409 = vpow.pop %v408
      %v410 = vmul.f32 %v405, 1.442695
      %v411 = vpow.pop %v410
      %v412 = vmul.f32 %v406, 1.442695
      %v413 = vpow.pop %v412
      %v414 = vmul.f32 %v407, 1.442695
      %v415 = vpow.pop %v414
      %v416 = vsel %vm243, %v409, 0.0
      %417 = vadd.xlane.f32.xlu0 %v416
      %v418 = vpop.xlane.xlu0 %417
      %v419 = vsel %vm243, %v411, 0.0
      %420 = vadd.xlane.f32.xlu0 %v419
      %v421 = vpop.xlane.xlu0 %420
      %v422 = vsel %vm243, %v413, 0.0
      %423 = vadd.xlane.f32.xlu0 %v422
      %v424 = vpop.xlane.xlu0 %423
      %v425 = vsel %vm253, %v415, 0.0
      %426 = vadd.xlane.f32.xlu0 %v425
      %v427 = vpop.xlane.xlu0 %426
      %v428 = vrcp.pop %v418
      %v429 = vmul.f32 %v409, %v428
      %v430 = vrcp.pop %v421
      %v431 = vmul.f32 %v411, %v430
      %v432 = vrcp.pop %v424
      %v433 = vmul.f32 %v413, %v432
      %v434 = vrcp.pop %v427
      %v435 = vmul.f32 %v415, %v434
      %s436 = scalar_lea.vmem %s232, 128
      %v437 = vld [vmem:[%s436] sm:$0xff]
      %v438 = vld [vmem:[%s436 + $0x8] sm:$0xff]
      %v439 = vld [vmem:[%s436 + $0x10] sm:$0xff]
      %v440 = vld [vmem:[%s436 + $0x18] sm:$0x1]
      %v441 = vsel %vm243, %v437, -inf
      %442 = vmax.xlane.f32.xlu0 %v441
      %v443 = vpop.xlane.xlu0 %442
      %v444 = vsel %vm243, %v438, -inf
      %445 = vmax.xlane.f32.xlu0 %v444
      %v446 = vpop.xlane.xlu0 %445
      %v447 = vsel %vm243, %v439, -inf
      %448 = vmax.xlane.f32.xlu0 %v447
      %v449 = vpop.xlane.xlu0 %448
      %v450 = vsel %vm253, %v440, -inf
      %451 = vmax.xlane.f32.xlu0 %v450
      %v452 = vpop.xlane.xlu0 %451
      %v453 = vsub.f32 %v437, %v443
      %v454 = vsub.f32 %v438, %v446
      %v455 = vsub.f32 %v439, %v449
      %v456 = vsub.f32 %v440, %v452
      %v457 = vmul.f32 %v453, 1.442695
      %v458 = vpow.pop %v457
      %v459 = vmul.f32 %v454, 1.442695
      %v460 = vpow.pop %v459
      %v461 = vmul.f32 %v455, 1.442695
      %v462 = vpow.pop %v461
      %v463 = vmul.f32 %v456, 1.442695
      %v464 = vpow.pop %v463
      %v465 = vsel %vm243, %v458, 0.0
      %466 = vadd.xlane.f32.xlu0 %v465
      %v467 = vpop.xlane.xlu0 %466
      %v468 = vsel %vm243, %v460, 0.0
      %469 = vadd.xlane.f32.xlu0 %v468
      %v470 = vpop.xlane.xlu0 %469
      %v471 = vsel %vm243, %v462, 0.0
      %472 = vadd.xlane.f32.xlu0 %v471
      %v473 = vpop.xlane.xlu0 %472
      %v474 = vsel %vm253, %v464, 0.0
      %475 = vadd.xlane.f32.xlu0 %v474
      %v476 = vpop.xlane.xlu0 %475
      %v477 = vrcp.pop %v467
      %v478 = vmul.f32 %v458, %v477
      %v479 = vrcp.pop %v470
      %v480 = vmul.f32 %v460, %v479
      %v481 = vrcp.pop %v473
      %v482 = vmul.f32 %v462, %v481
      %v483 = vrcp.pop %v476
      %v484 = vmul.f32 %v464, %v483
      %s485 = scalar_lea.vmem %s232, 160
      %v486 = vld [vmem:[%s485] sm:$0xff]
      %v487 = vld [vmem:[%s485 + $0x8] sm:$0xff]
      %v488 = vld [vmem:[%s485 + $0x10] sm:$0xff]
      %v489 = vld [vmem:[%s485 + $0x18] sm:$0x1]
      %v490 = vsel %vm243, %v486, -inf
      %491 = vmax.xlane.f32.xlu0 %v490
      %v492 = vpop.xlane.xlu0 %491
      %v493 = vsel %vm243, %v487, -inf
      %494 = vmax.xlane.f32.xlu0 %v493
      %v495 = vpop.xlane.xlu0 %494
      %v496 = vsel %vm243, %v488, -inf
      %497 = vmax.xlane.f32.xlu0 %v496
      %v498 = vpop.xlane.xlu0 %497
      %v499 = vsel %vm253, %v489, -inf
      %500 = vmax.xlane.f32.xlu0 %v499
      %v501 = vpop.xlane.xlu0 %500
      %v502 = vsub.f32 %v486, %v492
      %v503 = vsub.f32 %v487, %v495
      %v504 = vsub.f32 %v488, %v498
      %v505 = vsub.f32 %v489, %v501
      %v506 = vmul.f32 %v502, 1.442695
      %v507 = vpow.pop %v506
      %v508 = vmul.f32 %v503, 1.442695
      %v509 = vpow.pop %v508
      %v510 = vmul.f32 %v504, 1.442695
      %v511 = vpow.pop %v510
      %v512 = vmul.f32 %v505, 1.442695
      %v513 = vpow.pop %v512
      %v514 = vsel %vm243, %v507, 0.0
      %515 = vadd.xlane.f32.xlu0 %v514
      %v516 = vpop.xlane.xlu0 %515
      %v517 = vsel %vm243, %v509, 0.0
      %518 = vadd.xlane.f32.xlu0 %v517
      %v519 = vpop.xlane.xlu0 %518
      %v520 = vsel %vm243, %v511, 0.0
      %521 = vadd.xlane.f32.xlu0 %v520
      %v522 = vpop.xlane.xlu0 %521
      %v523 = vsel %vm253, %v513, 0.0
      %524 = vadd.xlane.f32.xlu0 %v523
      %v525 = vpop.xlane.xlu0 %524
      %v526 = vrcp.pop %v516
      %v527 = vmul.f32 %v507, %v526
      %v528 = vrcp.pop %v519
      %v529 = vmul.f32 %v509, %v528
      %v530 = vrcp.pop %v522
      %v531 = vmul.f32 %v511, %v530
      %v532 = vrcp.pop %v525
      %v533 = vmul.f32 %v513, %v532
      %s534 = scalar_lea.vmem %s232, 192
      %v535 = vld [vmem:[%s534] sm:$0xff]
      %v536 = vld [vmem:[%s534 + $0x8] sm:$0xff]
      %v537 = vld [vmem:[%s534 + $0x10] sm:$0xff]
      %v538 = vld [vmem:[%s534 + $0x18] sm:$0x1]
      %v539 = vsel %vm243, %v535, -inf
      %540 = vmax.xlane.f32.xlu0 %v539
      %v541 = vpop.xlane.xlu0 %540
      %v542 = vsel %vm243, %v536, -inf
      %543 = vmax.xlane.f32.xlu0 %v542
      %v544 = vpop.xlane.xlu0 %543
      %v545 = vsel %vm243, %v537, -inf
      %546 = vmax.xlane.f32.xlu0 %v545
      %v547 = vpop.xlane.xlu0 %546
      %v548 = vsel %vm253, %v538, -inf
      %549 = vmax.xlane.f32.xlu0 %v548
      %v550 = vpop.xlane.xlu0 %549
      %v551 = vsub.f32 %v535, %v541
      %v552 = vsub.f32 %v536, %v544
      %v553 = vsub.f32 %v537, %v547
      %v554 = vsub.f32 %v538, %v550
      %v555 = vmul.f32 %v551, 1.442695
      %v556 = vpow.pop %v555
      %v557 = vmul.f32 %v552, 1.442695
      %v558 = vpow.pop %v557
      %v559 = vmul.f32 %v553, 1.442695
      %v560 = vpow.pop %v559
      %v561 = vmul.f32 %v554, 1.442695
      %v562 = vpow.pop %v561
      %v563 = vsel %vm243, %v556, 0.0
      %564 = vadd.xlane.f32.xlu0 %v563
      %v565 = vpop.xlane.xlu0 %564
      %v566 = vsel %vm243, %v558, 0.0
      %567 = vadd.xlane.f32.xlu0 %v566
      %v568 = vpop.xlane.xlu0 %567
      %v569 = vsel %vm243, %v560, 0.0
      %570 = vadd.xlane.f32.xlu0 %v569
      %v571 = vpop.xlane.xlu0 %570
      %v572 = vsel %vm253, %v562, 0.0
      %573 = vadd.xlane.f32.xlu0 %v572
      %v574 = vpop.xlane.xlu0 %573
      %v575 = vrcp.pop %v565
      %v576 = vmul.f32 %v556, %v575
      %v577 = vrcp.pop %v568
      %v578 = vmul.f32 %v558, %v577
      %v579 = vrcp.pop %v571
      %v580 = vmul.f32 %v560, %v579
      %v581 = vrcp.pop %v574
      %v582 = vmul.f32 %v562, %v581
      %s583 = scalar_lea.vmem %s232, 224
      %v584 = vld [vmem:[%s583] sm:$0xff]
      %v585 = vld [vmem:[%s583 + $0x8] sm:$0xff]
      %v586 = vld [vmem:[%s583 + $0x10] sm:$0xff]
      %v587 = vld [vmem:[%s583 + $0x18] sm:$0x1]
      %v588 = vsel %vm243, %v584, -inf
      %589 = vmax.xlane.f32.xlu0 %v588
      %v590 = vpop.xlane.xlu0 %589
      %v591 = vsel %vm243, %v585, -inf
      %592 = vmax.xlane.f32.xlu0 %v591
      %v593 = vpop.xlane.xlu0 %592
      %v594 = vsel %vm243, %v586, -inf
      %595 = vmax.xlane.f32.xlu0 %v594
      %v596 = vpop.xlane.xlu0 %595
      %v597 = vsel %vm253, %v587, -inf
      %598 = vmax.xlane.f32.xlu0 %v597
      %v599 = vpop.xlane.xlu0 %598
      %v600 = vsub.f32 %v584, %v590
      %v601 = vsub.f32 %v585, %v593
      %v602 = vsub.f32 %v586, %v596
      %v603 = vsub.f32 %v587, %v599
      %v604 = vmul.f32 %v600, 1.442695
      %v605 = vpow.pop %v604
      %v606 = vmul.f32 %v601, 1.442695
      %v607 = vpow.pop %v606
      %v608 = vmul.f32 %v602, 1.442695
      %v609 = vpow.pop %v608
      %v610 = vmul.f32 %v603, 1.442695
      %v611 = vpow.pop %v610
      %v612 = vsel %vm243, %v605, 0.0
      %613 = vadd.xlane.f32.xlu0 %v612
      %v614 = vpop.xlane.xlu0 %613
      %v615 = vsel %vm243, %v607, 0.0
      %616 = vadd.xlane.f32.xlu0 %v615
      %v617 = vpop.xlane.xlu0 %616
      %v618 = vsel %vm243, %v609, 0.0
      %619 = vadd.xlane.f32.xlu0 %v618
      %v620 = vpop.xlane.xlu0 %619
      %v621 = vsel %vm253, %v611, 0.0
      %622 = vadd.xlane.f32.xlu0 %v621
      %v623 = vpop.xlane.xlu0 %622
      %v624 = vrcp.pop %v614
      %v625 = vmul.f32 %v605, %v624
      %v626 = vrcp.pop %v617
      %v627 = vmul.f32 %v607, %v626
      %v628 = vrcp.pop %v620
      %v629 = vmul.f32 %v609, %v628
      %v630 = vrcp.pop %v623
      %v631 = vmul.f32 %v611, %v630
      %s632 = scalar_lea.vmem %s232, 256
      %v633 = vld [vmem:[%s632] sm:$0xff]
      %v634 = vld [vmem:[%s632 + $0x8] sm:$0xff]
      %v635 = vld [vmem:[%s632 + $0x10] sm:$0xff]
      %v636 = vld [vmem:[%s632 + $0x18] sm:$0x1]
      %v637 = vsel %vm243, %v633, -inf
      %638 = vmax.xlane.f32.xlu0 %v637
      %v639 = vpop.xlane.xlu0 %638
      %v640 = vsel %vm243, %v634, -inf
      %641 = vmax.xlane.f32.xlu0 %v640
      %v642 = vpop.xlane.xlu0 %641
      %v643 = vsel %vm243, %v635, -inf
      %644 = vmax.xlane.f32.xlu0 %v643
      %v645 = vpop.xlane.xlu0 %644
      %v646 = vsel %vm253, %v636, -inf
      %647 = vmax.xlane.f32.xlu0 %v646
      %v648 = vpop.xlane.xlu0 %647
      %v649 = vsub.f32 %v633, %v639
      %v650 = vsub.f32 %v634, %v642
      %v651 = vsub.f32 %v635, %v645
      %v652 = vsub.f32 %v636, %v648
      %v653 = vmul.f32 %v649, 1.442695
      %v654 = vpow.pop %v653
      %v655 = vmul.f32 %v650, 1.442695
      %v656 = vpow.pop %v655
      %v657 = vmul.f32 %v651, 1.442695
      %v658 = vpow.pop %v657
      %v659 = vmul.f32 %v652, 1.442695
      %v660 = vpow.pop %v659
      %v661 = vsel %vm243, %v654, 0.0
      %662 = vadd.xlane.f32.xlu0 %v661
      %v663 = vpop.xlane.xlu0 %662
      %v664 = vsel %vm243, %v656, 0.0
      %665 = vadd.xlane.f32.xlu0 %v664
      %v666 = vpop.xlane.xlu0 %665
      %v667 = vsel %vm243, %v658, 0.0
      %668 = vadd.xlane.f32.xlu0 %v667
      %v669 = vpop.xlane.xlu0 %668
      %v670 = vsel %vm253, %v660, 0.0
      %671 = vadd.xlane.f32.xlu0 %v670
      %v672 = vpop.xlane.xlu0 %671
      %v673 = vrcp.pop %v663
      %v674 = vmul.f32 %v654, %v673
      %v675 = vrcp.pop %v666
      %v676 = vmul.f32 %v656, %v675
      %v677 = vrcp.pop %v669
      %v678 = vmul.f32 %v658, %v677
      %v679 = vrcp.pop %v672
      %v680 = vmul.f32 %v660, %v679
      %v681 = vld [vmem:[%s227] sm:$0xff]
      %v682 = vld [vmem:[%s227 + $0x8] sm:$0xff]
      %v683 = vld [vmem:[%s227 + $0x10] sm:$0xff]
      %v684 = vld [vmem:[%s227 + $0x18] sm:$0x1]
      %v685 = vsel %vm243, %v681, -inf
      %686 = vmax.xlane.f32.xlu0 %v685
      %v687 = vpop.xlane.xlu0 %686
      %v688 = vsel %vm243, %v682, -inf
      %689 = vmax.xlane.f32.xlu0 %v688
      %v690 = vpop.xlane.xlu0 %689
      %v691 = vsel %vm243, %v683, -inf
      %692 = vmax.xlane.f32.xlu0 %v691
      %v693 = vpop.xlane.xlu0 %692
      %v694 = vsel %vm253, %v684, -inf
      %695 = vmax.xlane.f32.xlu0 %v694
      %v696 = vpop.xlane.xlu0 %695
      %v697 = vsub.f32 %v681, %v687
      %v698 = vsub.f32 %v682, %v690
      %v699 = vsub.f32 %v683, %v693
      %v700 = vsub.f32 %v684, %v696
      %v701 = vmul.f32 %v697, 1.442695
      %v702 = vpow.pop %v701
      %v703 = vmul.f32 %v698, 1.442695
      %v704 = vpow.pop %v703
      %v705 = vmul.f32 %v699, 1.442695
      %v706 = vpow.pop %v705
      %v707 = vmul.f32 %v700, 1.442695
      %v708 = vpow.pop %v707
      %v709 = vsel %vm243, %v702, 0.0
      %710 = vadd.xlane.f32.xlu0 %v709
      %v711 = vpop.xlane.xlu0 %710
      %v712 = vsel %vm243, %v704, 0.0
      %713 = vadd.xlane.f32.xlu0 %v712
      %v714 = vpop.xlane.xlu0 %713
      %v715 = vsel %vm243, %v706, 0.0
      %716 = vadd.xlane.f32.xlu0 %v715
      %v717 = vpop.xlane.xlu0 %716
      %v718 = vsel %vm253, %v708, 0.0
      %719 = vadd.xlane.f32.xlu0 %v718
      %v720 = vpop.xlane.xlu0 %719
      %v721 = vrcp.pop %v711
      %v722 = vmul.f32 %v702, %v721
      %v723 = vrcp.pop %v714
      %v724 = vmul.f32 %v704, %v723
      %v725 = vrcp.pop %v717
      %v726 = vmul.f32 %v706, %v725
      %v727 = vrcp.pop %v720
      %v728 = vmul.f32 %v708, %v727
      %v729 = vmul.f32 %v722, 0.25
      %v730 = vmul.f32 %v724, 0.25
      %v731 = vmul.f32 %v726, 0.25
      %v732 = vmul.f32 %v728, 0.25
      %v733 = vld [vmem:[%s3] sm:$0xff]
      %v734 = vld [vmem:[%s3 + $0x8] sm:$0xff]
      %v735 = vld [vmem:[%s3 + $0x10] sm:$0xff]
      %v736 = vld [vmem:[%s3 + $0x18] sm:$0x1]
      %v737 = vadd.f32 %v729, %v733
      %v738 = vadd.f32 %v730, %v734
      %v739 = vadd.f32 %v731, %v735
      %v740 = vadd.f32 %v732, %v736
      %v741 = vmul.f32 %v282, 0.125
      %v742 = vmul.f32 %v284, 0.125
      %v743 = vmul.f32 %v286, 0.125
      %v744 = vmul.f32 %v288, 0.125
      %v745 = vadd.f32 %v737, %v741
      %v746 = vadd.f32 %v738, %v742
      %v747 = vadd.f32 %v739, %v743
      %v748 = vadd.f32 %v740, %v744
      %s749 = scalar_lea.vmem %s227, 128
      %v750 = vld [vmem:[%s749] sm:$0xff]
      %v751 = vld [vmem:[%s749 + $0x8] sm:$0xff]
      %v752 = vld [vmem:[%s749 + $0x10] sm:$0xff]
      %v753 = vld [vmem:[%s749 + $0x18] sm:$0x1]
      %v754 = vsel %vm243, %v750, -inf
      %755 = vmax.xlane.f32.xlu0 %v754
      %v756 = vpop.xlane.xlu0 %755
      %v757 = vsel %vm243, %v751, -inf
      %758 = vmax.xlane.f32.xlu0 %v757
      %v759 = vpop.xlane.xlu0 %758
      %v760 = vsel %vm243, %v752, -inf
      %761 = vmax.xlane.f32.xlu0 %v760
      %v762 = vpop.xlane.xlu0 %761
      %v763 = vsel %vm253, %v753, -inf
      %764 = vmax.xlane.f32.xlu0 %v763
      %v765 = vpop.xlane.xlu0 %764
      %v766 = vsub.f32 %v750, %v756
      %v767 = vsub.f32 %v751, %v759
      %v768 = vsub.f32 %v752, %v762
      %v769 = vsub.f32 %v753, %v765
      %v770 = vmul.f32 %v766, 1.442695
      %v771 = vpow.pop %v770
      %v772 = vmul.f32 %v767, 1.442695
      %v773 = vpow.pop %v772
      %v774 = vmul.f32 %v768, 1.442695
      %v775 = vpow.pop %v774
      %v776 = vmul.f32 %v769, 1.442695
      %v777 = vpow.pop %v776
      %v778 = vsel %vm243, %v771, 0.0
      %779 = vadd.xlane.f32.xlu0 %v778
      %v780 = vpop.xlane.xlu0 %779
      %v781 = vsel %vm243, %v773, 0.0
      %782 = vadd.xlane.f32.xlu0 %v781
      %v783 = vpop.xlane.xlu0 %782
      %v784 = vsel %vm243, %v775, 0.0
      %785 = vadd.xlane.f32.xlu0 %v784
      %v786 = vpop.xlane.xlu0 %785
      %v787 = vsel %vm253, %v777, 0.0
      %788 = vadd.xlane.f32.xlu0 %v787
      %v789 = vpop.xlane.xlu0 %788
      %v790 = vrcp.pop %v780
      %v791 = vmul.f32 %v771, %v790
      %v792 = vrcp.pop %v783
      %v793 = vmul.f32 %v773, %v792
      %v794 = vrcp.pop %v786
      %v795 = vmul.f32 %v775, %v794
      %v796 = vrcp.pop %v789
      %v797 = vmul.f32 %v777, %v796
      %v798 = vmul.f32 %v791, 0.25
      %v799 = vmul.f32 %v793, 0.25
      %v800 = vmul.f32 %v795, 0.25
      %v801 = vmul.f32 %v797, 0.25
      %s802 = scalar_lea.vmem %s3, 32
      %v803 = vld [vmem:[%s802] sm:$0xff]
      %v804 = vld [vmem:[%s802 + $0x8] sm:$0xff]
      %v805 = vld [vmem:[%s802 + $0x10] sm:$0xff]
      %v806 = vld [vmem:[%s802 + $0x18] sm:$0x1]
      %v807 = vadd.f32 %v798, %v803
      %v808 = vadd.f32 %v799, %v804
      %v809 = vadd.f32 %v800, %v805
      %v810 = vadd.f32 %v801, %v806
      %v811 = vmul.f32 %v429, 0.125
      %v812 = vmul.f32 %v431, 0.125
      %v813 = vmul.f32 %v433, 0.125
      %v814 = vmul.f32 %v435, 0.125
      %v815 = vadd.f32 %v807, %v811
      %v816 = vadd.f32 %v808, %v812
      %v817 = vadd.f32 %v809, %v813
      %v818 = vadd.f32 %v810, %v814
      %s819 = scalar_lea.vmem %s227, 256
      %v820 = vld [vmem:[%s819] sm:$0xff]
      %v821 = vld [vmem:[%s819 + $0x8] sm:$0xff]
      %v822 = vld [vmem:[%s819 + $0x10] sm:$0xff]
      %v823 = vld [vmem:[%s819 + $0x18] sm:$0x1]
      %v824 = vsel %vm243, %v820, -inf
      %825 = vmax.xlane.f32.xlu0 %v824
      %v826 = vpop.xlane.xlu0 %825
      %v827 = vsel %vm243, %v821, -inf
      %828 = vmax.xlane.f32.xlu0 %v827
      %v829 = vpop.xlane.xlu0 %828
      %v830 = vsel %vm243, %v822, -inf
      %831 = vmax.xlane.f32.xlu0 %v830
      %v832 = vpop.xlane.xlu0 %831
      %v833 = vsel %vm253, %v823, -inf
      %834 = vmax.xlane.f32.xlu0 %v833
      %v835 = vpop.xlane.xlu0 %834
      %v836 = vsub.f32 %v820, %v826
      %v837 = vsub.f32 %v821, %v829
      %v838 = vsub.f32 %v822, %v832
      %v839 = vsub.f32 %v823, %v835
      %v840 = vmul.f32 %v836, 1.442695
      %v841 = vpow.pop %v840
      %v842 = vmul.f32 %v837, 1.442695
      %v843 = vpow.pop %v842
      %v844 = vmul.f32 %v838, 1.442695
      %v845 = vpow.pop %v844
      %v846 = vmul.f32 %v839, 1.442695
      %v847 = vpow.pop %v846
      %v848 = vsel %vm243, %v841, 0.0
      %849 = vadd.xlane.f32.xlu0 %v848
      %v850 = vpop.xlane.xlu0 %849
      %v851 = vsel %vm243, %v843, 0.0
      %852 = vadd.xlane.f32.xlu0 %v851
      %v853 = vpop.xlane.xlu0 %852
      %v854 = vsel %vm243, %v845, 0.0
      %855 = vadd.xlane.f32.xlu0 %v854
      %v856 = vpop.xlane.xlu0 %855
      %v857 = vsel %vm253, %v847, 0.0
      %858 = vadd.xlane.f32.xlu0 %v857
      %v859 = vpop.xlane.xlu0 %858
      %v860 = vrcp.pop %v850
      %v861 = vmul.f32 %v841, %v860
      %v862 = vrcp.pop %v853
      %v863 = vmul.f32 %v843, %v862
      %v864 = vrcp.pop %v856
      %v865 = vmul.f32 %v845, %v864
      %v866 = vrcp.pop %v859
      %v867 = vmul.f32 %v847, %v866
      %v868 = vmul.f32 %v861, 0.25
      %v869 = vmul.f32 %v863, 0.25
      %v870 = vmul.f32 %v865, 0.25
      %v871 = vmul.f32 %v867, 0.25
      %s872 = scalar_lea.vmem %s3, 64
      %v873 = vld [vmem:[%s872] sm:$0xff]
      %v874 = vld [vmem:[%s872 + $0x8] sm:$0xff]
      %v875 = vld [vmem:[%s872 + $0x10] sm:$0xff]
      %v876 = vld [vmem:[%s872 + $0x18] sm:$0x1]
      %v877 = vadd.f32 %v868, %v873
      %v878 = vadd.f32 %v869, %v874
      %v879 = vadd.f32 %v870, %v875
      %v880 = vadd.f32 %v871, %v876
      %v881 = vmul.f32 %v576, 0.125
      %v882 = vmul.f32 %v578, 0.125
      %v883 = vmul.f32 %v580, 0.125
      %v884 = vmul.f32 %v582, 0.125
      %v885 = vadd.f32 %v877, %v881
      %v886 = vadd.f32 %v878, %v882
      %v887 = vadd.f32 %v879, %v883
      %v888 = vadd.f32 %v880, %v884
      %vm893 = vcmask 1040384
      %v894 = vrot.slane %v815, 7
      %v895 = vrot.slane %v816, 7
      %v896 = vsel %vm893, %v894, %v895
      %v897 = vrot.slane %v817, 7
      %v898 = vsel %vm893, %v895, %v897
      %v899 = vrot.slane %v818, 7
      %v900 = vsel %vm893, %v897, %v899
      %vm909 = vcmask 1041408
      %v910 = vrot.slane %v885, 6
      %v911 = vrot.slane %v886, 6
      %v912 = vsel %vm909, %v910, %v911
      %v913 = vrot.slane %v887, 6
      %v914 = vsel %vm909, %v911, %v913
      %v915 = vrot.slane %v888, 6
      %v916 = vsel %vm909, %v913, %v915
      %v921 = vsel %vm893, %v748, %v894
      %v922 = vsel %vm909, %v900, %v910
      %v923 = vpack.c.bf16 %v746, %v745
      %v924 = vpack.c.bf16 %v921, %v747
      %v925 = vpack.c.bf16 %v898, %v896
      %v926 = vpack.c.bf16 %v912, %v922
      %v927 = vpack.c.bf16 %v916, %v914
      %v928 = vld [vmem:[%s222] sm:$0xf]
      %v929 = vld [vmem:[%s222 + $0x4] sm:$0xf]
      %v930 = vld [vmem:[%s222 + $0x8] sm:$0xf]
      %v931 = vld [vmem:[%s222 + $0xc] sm:$0xf]
      %v932 = vld [vmem:[%s222 + $0x10] sm:$0xf]
      %v933 = vld [vmem:[%s222 + $0x14] sm:$0xf]
      %v934 = vld [vmem:[%s222 + $0x18] sm:$0xf]
      %v935 = vld [vmem:[%s222 + $0x1c] sm:$0xf]
      %v936 = vld [vmem:[%s222 + $0x20] sm:$0xf]
      %v937 = vld [vmem:[%s222 + $0x24] sm:$0xf]
      %v948 = vunpack.c.l.b16 %v928
      %v949 = vunpack.c.l.b16 %v929
      %v950 = vunpack.c.l.b16 %v930
      %v951 = vunpack.c.l.b16 %v931
      %v952 = vunpack.c.l.b16 %v932
      %v953 = vunpack.c.l.b16 %v933
      %v954 = vunpack.c.l.b16 %v934
      %v955 = vunpack.c.l.b16 %v935
      %v956 = vunpack.c.l.b16 %v936
      %v957 = vunpack.c.l.b16 %v937
      %v958 = vpack.c.b16 %v949, %v948
      %v959 = vpack.c.b16 %v951, %v950
      %v960 = vpack.c.b16 %v953, %v952
      %v961 = vpack.c.b16 %v955, %v954
      %v962 = vpack.c.b16 %v957, %v956
      %vm963 = vcmask 613376
      %v965 = vsel %vm963, %v958, 0
      %v968 = vsel %vm963, %v959, 0
      %v971 = vsel %vm963, %v960, 0
      %v974 = vsel %vm963, %v961, 0
      %v977 = vsel %vm963, %v962, 0
      %vm979 = vcmask 1044480
      %vm980 = vcmask 1045504
      %v981 = vsel %vm979, 4294967295, 65535
      %v982 = vsel %vm980, %v981, 0
      %v984 = vand.u32 %v927, %v982
      %986 = vmatprep.subr.bf16.mxu0 0
      %987 = vmatpush1.bf16.msra.mxu0 %v923
      %988 = vmatprep.subr.bf16.mxu0 0
      %989 = vmatpush1.bf16.msra.mxu0 %v924
      %990 = vmatprep.subr.bf16.mxu0 0
      %991 = vmatpush1.bf16.msra.mxu0 %v925
      %992 = vmatprep.subr.bf16.mxu0 0
      %993 = vmatpush1.bf16.msra.mxu0 %v926
      %994 = vmatprep.subr.bf16.mxu0 0
      %995 = vmatpush1.bf16.msra.mxu0 %v984
      %996 = vmatprep.subr.bf16.mxu0 0
      %997 = vmatpush1.bf16.msra.mxu0 0
      %998 = vmatprep.subr.bf16.mxu0 0
      %999 = vmatpush1.bf16.msra.mxu0 0
      %1000 = vmatprep.subr.bf16.mxu0 0
      %1001 = vmatpush1.bf16.msra.mxu0 0
      %1002 = vmatprep.subr.bf16.mxu0 0
      %1003 = vmatpush1.bf16.msra.mxu0 0
      %1004 = vmatprep.subr.bf16.mxu0 0
      %1005 = vmatpush1.bf16.msra.mxu0 0
      %1006 = vmatprep.subr.bf16.mxu0 0
      %1007 = vmatpush1.bf16.msra.mxu0 0
      %1008 = vmatprep.subr.bf16.mxu0 0
      %1009 = vmatpush1.bf16.msra.mxu0 0
      %1010 = vmatprep.subr.bf16.mxu0 0
      %1011 = vmatpush1.bf16.msra.mxu0 0
      %1012 = vmatprep.subr.bf16.mxu0 0
      %1013 = vmatpush1.bf16.msra.mxu0 0
      %1014 = vmatprep.subr.bf16.mxu0 0
      %1015 = vmatpush1.bf16.msra.mxu0 0
      %1016 = vmatprep.subr.bf16.mxu0 0
      %1017 = vmatpush1.bf16.msra.mxu0 0
      %1018 = vmatprep.mubr.bf16.mxu0 0
      %1019 = vmatmul.mubr.bf16.gmra.mrb[0].mxu0 %v965
      %v1020 = vpop.f32.mrb[0].mxu0
      %v1021 = vadd.f32 0.0, %v1020
      %v1022 = vpop.f32.mrb[0].mxu0
      %v1023 = vpop.f32.mrb[0].mxu0
      %v1024 = vadd.f32 0.0, %v1023
      %v1025 = vpop.f32.mrb[0].mxu0
      %1026 = vmatprep.mubr.bf16.mxu0 0
      %1027 = vmatmul.mubr.bf16.gmra.mrb[0].mxu0 %v968
      %v1028 = vpop.f32.mrb[0].mxu0
      %v1029 = vadd.f32 0.0, %v1028
      %v1030 = vpop.f32.mrb[0].mxu0
      %v1031 = vpop.f32.mrb[0].mxu0
      %v1032 = vadd.f32 0.0, %v1031
      %v1033 = vpop.f32.mrb[0].mxu0
      %1034 = vmatprep.mubr.bf16.mxu0 0
      %1035 = vmatmul.mubr.bf16.gmra.mrb[0].mxu0 %v971
      %v1036 = vpop.f32.mrb[0].mxu0
      %v1037 = vadd.f32 0.0, %v1036
      %v1038 = vpop.f32.mrb[0].mxu0
      %v1039 = vpop.f32.mrb[0].mxu0
      %v1040 = vadd.f32 0.0, %v1039
      %v1041 = vpop.f32.mrb[0].mxu0
      %1042 = vmatprep.mubr.bf16.mxu0 0
      %1043 = vmatmul.mubr.bf16.gmra.mrb[0].mxu0 %v974
      %v1044 = vpop.f32.mrb[0].mxu0
      %v1045 = vadd.f32 0.0, %v1044
      %v1046 = vpop.f32.mrb[0].mxu0
      %v1047 = vpop.f32.mrb[0].mxu0
      %v1048 = vadd.f32 0.0, %v1047
      %v1049 = vpop.f32.mrb[0].mxu0
      %1050 = vmatprep.mubr.bf16.mxu0 0
      %1051 = vmatmul.mubr.bf16.gmra.mrb[0].mxu0 %v977
      %v1052 = vpop.f32.mrb[0].mxu0
      %v1053 = vadd.f32 0.0, %v1052
      %v1054 = vpop.f32.mrb[0].mxu0
      %v1055 = vpop.f32.mrb[0].mxu0
      %v1056 = vadd.f32 0.0, %v1055
      %v1057 = vpop.f32.mrb[0].mxu0
      %1058 = vdwg.mxu0
      %1059 = vst.msk [vmem:[%s237] sm:$0xff] %vm243, %v1021
      %1060 = vst.msk [vmem:[%s237 + $0x8] sm:$0xff] %vm243, %v1024
      %1061 = vst.msk [vmem:[%s237 + $0x10] sm:$0xff] %vm243, %v1029
      %1062 = vst.msk [vmem:[%s237 + $0x18] sm:$0xff] %vm243, %v1032
      %1063 = vst.msk [vmem:[%s237 + $0x20] sm:$0xff] %vm243, %v1037
      %1064 = vst.msk [vmem:[%s237 + $0x28] sm:$0xff] %vm243, %v1040
      %1065 = vst.msk [vmem:[%s237 + $0x30] sm:$0xff] %vm243, %v1045
      %1066 = vst.msk [vmem:[%s237 + $0x38] sm:$0xff] %vm243, %v1048
      %1067 = vst.msk [vmem:[%s237 + $0x40] sm:$0xff] %vm243, %v1053
      %1068 = vst.msk [vmem:[%s237 + $0x48] sm:$0xff] %vm243, %v1056
      %s1069 = scalar_lea.vmem %s227, 32
      %v1070 = vld [vmem:[%s1069] sm:$0xff]
      %v1071 = vld [vmem:[%s1069 + $0x8] sm:$0xff]
      %v1072 = vld [vmem:[%s1069 + $0x10] sm:$0xff]
      %v1073 = vld [vmem:[%s1069 + $0x18] sm:$0x1]
      %v1074 = vsel %vm243, %v1070, -inf
      %1075 = vmax.xlane.f32.xlu0 %v1074
      %v1076 = vpop.xlane.xlu0 %1075
      %v1077 = vsel %vm243, %v1071, -inf
      %1078 = vmax.xlane.f32.xlu0 %v1077
      %v1079 = vpop.xlane.xlu0 %1078
      %v1080 = vsel %vm243, %v1072, -inf
      %1081 = vmax.xlane.f32.xlu0 %v1080
      %v1082 = vpop.xlane.xlu0 %1081
      %v1083 = vsel %vm253, %v1073, -inf
      %1084 = vmax.xlane.f32.xlu0 %v1083
      %v1085 = vpop.xlane.xlu0 %1084
      %v1086 = vsub.f32 %v1070, %v1076
      %v1087 = vsub.f32 %v1071, %v1079
      %v1088 = vsub.f32 %v1072, %v1082
      %v1089 = vsub.f32 %v1073, %v1085
      %v1090 = vmul.f32 %v1086, 1.442695
      %v1091 = vpow.pop %v1090
      %v1092 = vmul.f32 %v1087, 1.442695
      %v1093 = vpow.pop %v1092
      %v1094 = vmul.f32 %v1088, 1.442695
      %v1095 = vpow.pop %v1094
      %v1096 = vmul.f32 %v1089, 1.442695
      %v1097 = vpow.pop %v1096
      %v1098 = vsel %vm243, %v1091, 0.0
      %1099 = vadd.xlane.f32.xlu0 %v1098
      %v1100 = vpop.xlane.xlu0 %1099
      %v1101 = vsel %vm243, %v1093, 0.0
      %1102 = vadd.xlane.f32.xlu0 %v1101
      %v1103 = vpop.xlane.xlu0 %1102
      %v1104 = vsel %vm243, %v1095, 0.0
      %1105 = vadd.xlane.f32.xlu0 %v1104
      %v1106 = vpop.xlane.xlu0 %1105
      %v1107 = vsel %vm253, %v1097, 0.0
      %1108 = vadd.xlane.f32.xlu0 %v1107
      %v1109 = vpop.xlane.xlu0 %1108
      %v1110 = vrcp.pop %v1100
      %v1111 = vmul.f32 %v1091, %v1110
      %v1112 = vrcp.pop %v1103
      %v1113 = vmul.f32 %v1093, %v1112
      %v1114 = vrcp.pop %v1106
      %v1115 = vmul.f32 %v1095, %v1114
      %v1116 = vrcp.pop %v1109
      %v1117 = vmul.f32 %v1097, %v1116
      %v1118 = vmul.f32 %v1111, 0.25
      %v1119 = vmul.f32 %v1113, 0.25
      %v1120 = vmul.f32 %v1115, 0.25
      %v1121 = vmul.f32 %v1117, 0.25
      %v1122 = vld [vmem:[%s3] sm:$0xff]
      %v1123 = vld [vmem:[%s3 + $0x8] sm:$0xff]
      %v1124 = vld [vmem:[%s3 + $0x10] sm:$0xff]
      %v1125 = vld [vmem:[%s3 + $0x18] sm:$0x1]
      %v1126 = vadd.f32 %v1118, %v1122
      %v1127 = vadd.f32 %v1119, %v1123
      %v1128 = vadd.f32 %v1120, %v1124
      %v1129 = vadd.f32 %v1121, %v1125
      %v1130 = vadd.f32 %v1126, %v741
      %v1131 = vadd.f32 %v1127, %v742
      %v1132 = vadd.f32 %v1128, %v743
      %v1133 = vadd.f32 %v1129, %v744
      %v1134 = vmul.f32 %v331, 0.125
      %v1135 = vmul.f32 %v333, 0.125
      %v1136 = vmul.f32 %v335, 0.125
      %v1137 = vmul.f32 %v337, 0.125
      %v1138 = vadd.f32 %v1130, %v1134
      %v1139 = vadd.f32 %v1131, %v1135
      %v1140 = vadd.f32 %v1132, %v1136
      %v1141 = vadd.f32 %v1133, %v1137
      %s1142 = scalar_lea.vmem %s227, 160
      %v1143 = vld [vmem:[%s1142] sm:$0xff]
      %v1144 = vld [vmem:[%s1142 + $0x8] sm:$0xff]
      %v1145 = vld [vmem:[%s1142 + $0x10] sm:$0xff]
      %v1146 = vld [vmem:[%s1142 + $0x18] sm:$0x1]
      %v1147 = vsel %vm243, %v1143, -inf
      %1148 = vmax.xlane.f32.xlu0 %v1147
      %v1149 = vpop.xlane.xlu0 %1148
      %v1150 = vsel %vm243, %v1144, -inf
      %1151 = vmax.xlane.f32.xlu0 %v1150
      %v1152 = vpop.xlane.xlu0 %1151
      %v1153 = vsel %vm243, %v1145, -inf
      %1154 = vmax.xlane.f32.xlu0 %v1153
      %v1155 = vpop.xlane.xlu0 %1154
      %v1156 = vsel %vm253, %v1146, -inf
      %1157 = vmax.xlane.f32.xlu0 %v1156
      %v1158 = vpop.xlane.xlu0 %1157
      %v1159 = vsub.f32 %v1143, %v1149
      %v1160 = vsub.f32 %v1144, %v1152
      %v1161 = vsub.f32 %v1145, %v1155
      %v1162 = vsub.f32 %v1146, %v1158
      %v1163 = vmul.f32 %v1159, 1.442695
      %v1164 = vpow.pop %v1163
      %v1165 = vmul.f32 %v1160, 1.442695
      %v1166 = vpow.pop %v1165
      %v1167 = vmul.f32 %v1161, 1.442695
      %v1168 = vpow.pop %v1167
      %v1169 = vmul.f32 %v1162, 1.442695
      %v1170 = vpow.pop %v1169
      %v1171 = vsel %vm243, %v1164, 0.0
      %1172 = vadd.xlane.f32.xlu0 %v1171
      %v1173 = vpop.xlane.xlu0 %1172
      %v1174 = vsel %vm243, %v1166, 0.0
      %1175 = vadd.xlane.f32.xlu0 %v1174
      %v1176 = vpop.xlane.xlu0 %1175
      %v1177 = vsel %vm243, %v1168, 0.0
      %1178 = vadd.xlane.f32.xlu0 %v1177
      %v1179 = vpop.xlane.xlu0 %1178
      %v1180 = vsel %vm253, %v1170, 0.0
      %1181 = vadd.xlane.f32.xlu0 %v1180
      %v1182 = vpop.xlane.xlu0 %1181
      %v1183 = vrcp.pop %v1173
      %v1184 = vmul.f32 %v1164, %v1183
      %v1185 = vrcp.pop %v1176
      %v1186 = vmul.f32 %v1166, %v1185
      %v1187 = vrcp.pop %v1179
      %v1188 = vmul.f32 %v1168, %v1187
      %v1189 = vrcp.pop %v1182
      %v1190 = vmul.f32 %v1170, %v1189
      %v1191 = vmul.f32 %v1184, 0.25
      %v1192 = vmul.f32 %v1186, 0.25
      %v1193 = vmul.f32 %v1188, 0.25
      %v1194 = vmul.f32 %v1190, 0.25
      %v1195 = vld [vmem:[%s802] sm:$0xff]
      %v1196 = vld [vmem:[%s802 + $0x8] sm:$0xff]
      %v1197 = vld [vmem:[%s802 + $0x10] sm:$0xff]
      %v1198 = vld [vmem:[%s802 + $0x18] sm:$0x1]
      %v1199 = vadd.f32 %v1191, %v1195
      %v1200 = vadd.f32 %v1192, %v1196
      %v1201 = vadd.f32 %v1193, %v1197
      %v1202 = vadd.f32 %v1194, %v1198
      %v1203 = vadd.f32 %v1199, %v811
      %v1204 = vadd.f32 %v1200, %v812
      %v1205 = vadd.f32 %v1201, %v813
      %v1206 = vadd.f32 %v1202, %v814
      %v1207 = vmul.f32 %v478, 0.125
      %v1208 = vmul.f32 %v480, 0.125
      %v1209 = vmul.f32 %v482, 0.125
      %v1210 = vmul.f32 %v484, 0.125
      %v1211 = vadd.f32 %v1203, %v1207
      %v1212 = vadd.f32 %v1204, %v1208
      %v1213 = vadd.f32 %v1205, %v1209
      %v1214 = vadd.f32 %v1206, %v1210
      %s1215 = scalar_lea.vmem %s227, 288
      %v1216 = vld [vmem:[%s1215] sm:$0xff]
      %v1217 = vld [vmem:[%s1215 + $0x8] sm:$0xff]
      %v1218 = vld [vmem:[%s1215 + $0x10] sm:$0xff]
      %v1219 = vld [vmem:[%s1215 + $0x18] sm:$0x1]
      %v1220 = vsel %vm243, %v1216, -inf
      %1221 = vmax.xlane.f32.xlu0 %v1220
      %v1222 = vpop.xlane.xlu0 %1221
      %v1223 = vsel %vm243, %v1217, -inf
      %1224 = vmax.xlane.f32.xlu0 %v1223
      %v1225 = vpop.xlane.xlu0 %1224
      %v1226 = vsel %vm243, %v1218, -inf
      %1227 = vmax.xlane.f32.xlu0 %v1226
      %v1228 = vpop.xlane.xlu0 %1227
      %v1229 = vsel %vm253, %v1219, -inf
      %1230 = vmax.xlane.f32.xlu0 %v1229
      %v1231 = vpop.xlane.xlu0 %1230
      %v1232 = vsub.f32 %v1216, %v1222
      %v1233 = vsub.f32 %v1217, %v1225
      %v1234 = vsub.f32 %v1218, %v1228
      %v1235 = vsub.f32 %v1219, %v1231
      %v1236 = vmul.f32 %v1232, 1.442695
      %v1237 = vpow.pop %v1236
      %v1238 = vmul.f32 %v1233, 1.442695
      %v1239 = vpow.pop %v1238
      %v1240 = vmul.f32 %v1234, 1.442695
      %v1241 = vpow.pop %v1240
      %v1242 = vmul.f32 %v1235, 1.442695
      %v1243 = vpow.pop %v1242
      %v1244 = vsel %vm243, %v1237, 0.0
      %1245 = vadd.xlane.f32.xlu0 %v1244
      %v1246 = vpop.xlane.xlu0 %1245
      %v1247 = vsel %vm243, %v1239, 0.0
      %1248 = vadd.xlane.f32.xlu0 %v1247
      %v1249 = vpop.xlane.xlu0 %1248
      %v1250 = vsel %vm243, %v1241, 0.0
      %1251 = vadd.xlane.f32.xlu0 %v1250
      %v1252 = vpop.xlane.xlu0 %1251
      %v1253 = vsel %vm253, %v1243, 0.0
      %1254 = vadd.xlane.f32.xlu0 %v1253
      %v1255 = vpop.xlane.xlu0 %1254
      %v1256 = vrcp.pop %v1246
      %v1257 = vmul.f32 %v1237, %v1256
      %v1258 = vrcp.pop %v1249
      %v1259 = vmul.f32 %v1239, %v1258
      %v1260 = vrcp.pop %v1252
      %v1261 = vmul.f32 %v1241, %v1260
      %v1262 = vrcp.pop %v1255
      %v1263 = vmul.f32 %v1243, %v1262
      %v1264 = vmul.f32 %v1257, 0.25
      %v1265 = vmul.f32 %v1259, 0.25
      %v1266 = vmul.f32 %v1261, 0.25
      %v1267 = vmul.f32 %v1263, 0.25
      %v1268 = vld [vmem:[%s872] sm:$0xff]
      %v1269 = vld [vmem:[%s872 + $0x8] sm:$0xff]
      %v1270 = vld [vmem:[%s872 + $0x10] sm:$0xff]
      %v1271 = vld [vmem:[%s872 + $0x18] sm:$0x1]
      %v1272 = vadd.f32 %v1264, %v1268
      %v1273 = vadd.f32 %v1265, %v1269
      %v1274 = vadd.f32 %v1266, %v1270
      %v1275 = vadd.f32 %v1267, %v1271
      %v1276 = vadd.f32 %v1272, %v881
      %v1277 = vadd.f32 %v1273, %v882
      %v1278 = vadd.f32 %v1274, %v883
      %v1279 = vadd.f32 %v1275, %v884
      %v1280 = vmul.f32 %v625, 0.125
      %v1281 = vmul.f32 %v627, 0.125
      %v1282 = vmul.f32 %v629, 0.125
      %v1283 = vmul.f32 %v631, 0.125
      %v1284 = vadd.f32 %v1276, %v1280
      %v1285 = vadd.f32 %v1277, %v1281
      %v1286 = vadd.f32 %v1278, %v1282
      %v1287 = vadd.f32 %v1279, %v1283
      %v1292 = vrot.slane %v1211, 7
      %v1293 = vrot.slane %v1212, 7
      %v1294 = vsel %vm893, %v1292, %v1293
      %v1295 = vrot.slane %v1213, 7
      %v1296 = vsel %vm893, %v1293, %v1295
      %v1297 = vrot.slane %v1214, 7
      %v1298 = vsel %vm893, %v1295, %v1297
      %v1307 = vrot.slane %v1284, 6
      %v1308 = vrot.slane %v1285, 6
      %v1309 = vsel %vm909, %v1307, %v1308
      %v1310 = vrot.slane %v1286, 6
      %v1311 = vsel %vm909, %v1308, %v1310
      %v1312 = vrot.slane %v1287, 6
      %v1313 = vsel %vm909, %v1310, %v1312
      %v1318 = vsel %vm893, %v1141, %v1292
      %v1319 = vsel %vm909, %v1298, %v1307
      %v1320 = vpack.c.bf16 %v1139, %v1138
      %v1321 = vpack.c.bf16 %v1318, %v1140
      %v1322 = vpack.c.bf16 %v1296, %v1294
      %v1323 = vpack.c.bf16 %v1309, %v1319
      %v1324 = vpack.c.bf16 %v1313, %v1311
      %s1325 = scalar_lea.vmem %s222, 40
      %v1326 = vld [vmem:[%s1325] sm:$0xf]
      %v1327 = vld [vmem:[%s1325 + $0x4] sm:$0xf]
      %v1328 = vld [vmem:[%s1325 + $0x8] sm:$0xf]
      %v1329 = vld [vmem:[%s1325 + $0xc] sm:$0xf]
      %v1330 = vld [vmem:[%s1325 + $0x10] sm:$0xf]
      %v1331 = vld [vmem:[%s1325 + $0x14] sm:$0xf]
      %v1332 = vld [vmem:[%s1325 + $0x18] sm:$0xf]
      %v1333 = vld [vmem:[%s1325 + $0x1c] sm:$0xf]
      %v1334 = vld [vmem:[%s1325 + $0x20] sm:$0xf]
      %v1335 = vld [vmem:[%s1325 + $0x24] sm:$0xf]
      %v1346 = vunpack.c.l.b16 %v1326
      %v1347 = vunpack.c.l.b16 %v1327
      %v1348 = vunpack.c.l.b16 %v1328
      %v1349 = vunpack.c.l.b16 %v1329
      %v1350 = vunpack.c.l.b16 %v1330
      %v1351 = vunpack.c.l.b16 %v1331
      %v1352 = vunpack.c.l.b16 %v1332
      %v1353 = vunpack.c.l.b16 %v1333
      %v1354 = vunpack.c.l.b16 %v1334
      %v1355 = vunpack.c.l.b16 %v1335
      %v1356 = vpack.c.b16 %v1347, %v1346
      %v1357 = vpack.c.b16 %v1349, %v1348
      %v1358 = vpack.c.b16 %v1351, %v1350
      %v1359 = vpack.c.b16 %v1353, %v1352
      %v1360 = vpack.c.b16 %v1355, %v1354
      %v1362 = vsel %vm963, %v1356, 0
      %v1365 = vsel %vm963, %v1357, 0
      %v1368 = vsel %vm963, %v1358, 0
      %v1371 = vsel %vm963, %v1359, 0
      %v1374 = vsel %vm963, %v1360, 0
      %v1377 = vand.u32 %v1324, %v982
      %1379 = vmatprep.subr.bf16.mxu0 0
      %1380 = vmatpush1.bf16.msra.mxu0 %v1320
      %1381 = vmatprep.subr.bf16.mxu0 0
      %1382 = vmatpush1.bf16.msra.mxu0 %v1321
      %1383 = vmatprep.subr.bf16.mxu0 0
      %1384 = vmatpush1.bf16.msra.mxu0 %v1322
      %1385 = vmatprep.subr.bf16.mxu0 0
      %1386 = vmatpush1.bf16.msra.mxu0 %v1323
      %1387 = vmatprep.subr.bf16.mxu0 0
      %1388 = vmatpush1.bf16.msra.mxu0 %v1377
      %1389 = vmatprep.subr.bf16.mxu0 0
      %1390 = vmatpush1.bf16.msra.mxu0 0
      %1391 = vmatprep.subr.bf16.mxu0 0
      %1392 = vmatpush1.bf16.msra.mxu0 0
      %1393 = vmatprep.subr.bf16.mxu0 0
      %1394 = vmatpush1.bf16.msra.mxu0 0
      %1395 = vmatprep.subr.bf16.mxu0 0
      %1396 = vmatpush1.bf16.msra.mxu0 0
      %1397 = vmatprep.subr.bf16.mxu0 0
      %1398 = vmatpush1.bf16.msra.mxu0 0
      %1399 = vmatprep.subr.bf16.mxu0 0
      %1400 = vmatpush1.bf16.msra.mxu0 0
      %1401 = vmatprep.subr.bf16.mxu0 0
      %1402 = vmatpush1.bf16.msra.mxu0 0
      %1403 = vmatprep.subr.bf16.mxu0 0
      %1404 = vmatpush1.bf16.msra.mxu0 0
      %1405 = vmatprep.subr.bf16.mxu0 0
      %1406 = vmatpush1.bf16.msra.mxu0 0
      %1407 = vmatprep.subr.bf16.mxu0 0
      %1408 = vmatpush1.bf16.msra.mxu0 0
      %1409 = vmatprep.subr.bf16.mxu0 0
      %1410 = vmatpush1.bf16.msra.mxu0 0
      %1411 = vmatprep.mubr.bf16.mxu0 0
      %1412 = vmatmul.mubr.bf16.gmra.mrb[0].mxu0 %v1362
      %v1413 = vpop.f32.mrb[0].mxu0
      %v1414 = vadd.f32 0.0, %v1413
      %v1415 = vpop.f32.mrb[0].mxu0
      %v1416 = vpop.f32.mrb[0].mxu0
      %v1417 = vadd.f32 0.0, %v1416
      %v1418 = vpop.f32.mrb[0].mxu0
      %1419 = vmatprep.mubr.bf16.mxu0 0
      %1420 = vmatmul.mubr.bf16.gmra.mrb[0].mxu0 %v1365
      %v1421 = vpop.f32.mrb[0].mxu0
      %v1422 = vadd.f32 0.0, %v1421
      %v1423 = vpop.f32.mrb[0].mxu0
      %v1424 = vpop.f32.mrb[0].mxu0
      %v1425 = vadd.f32 0.0, %v1424
      %v1426 = vpop.f32.mrb[0].mxu0
      %1427 = vmatprep.mubr.bf16.mxu0 0
      %1428 = vmatmul.mubr.bf16.gmra.mrb[0].mxu0 %v1368
      %v1429 = vpop.f32.mrb[0].mxu0
      %v1430 = vadd.f32 0.0, %v1429
      %v1431 = vpop.f32.mrb[0].mxu0
      %v1432 = vpop.f32.mrb[0].mxu0
      %v1433 = vadd.f32 0.0, %v1432
      %v1434 = vpop.f32.mrb[0].mxu0
      %1435 = vmatprep.mubr.bf16.mxu0 0
      %1436 = vmatmul.mubr.bf16.gmra.mrb[0].mxu0 %v1371
      %v1437 = vpop.f32.mrb[0].mxu0
      %v1438 = vadd.f32 0.0, %v1437
      %v1439 = vpop.f32.mrb[0].mxu0
      %v1440 = vpop.f32.mrb[0].mxu0
      %v1441 = vadd.f32 0.0, %v1440
      %v1442 = vpop.f32.mrb[0].mxu0
      %1443 = vmatprep.mubr.bf16.mxu0 0
      %1444 = vmatmul.mubr.bf16.gmra.mrb[0].mxu0 %v1374
      %v1445 = vpop.f32.mrb[0].mxu0
      %v1446 = vadd.f32 0.0, %v1445
      %v1447 = vpop.f32.mrb[0].mxu0
      %v1448 = vpop.f32.mrb[0].mxu0
      %v1449 = vadd.f32 0.0, %v1448
      %v1450 = vpop.f32.mrb[0].mxu0
      %1451 = vdwg.mxu0
      %s1452 = scalar_lea.vmem %s237, 80
      %1453 = vst.msk [vmem:[%s1452] sm:$0xff] %vm243, %v1414
      %1454 = vst.msk [vmem:[%s1452 + $0x8] sm:$0xff] %vm243, %v1417
      %1455 = vst.msk [vmem:[%s1452 + $0x10] sm:$0xff] %vm243, %v1422
      %1456 = vst.msk [vmem:[%s1452 + $0x18] sm:$0xff] %vm243, %v1425
      %1457 = vst.msk [vmem:[%s1452 + $0x20] sm:$0xff] %vm243, %v1430
      %1458 = vst.msk [vmem:[%s1452 + $0x28] sm:$0xff] %vm243, %v1433
      %1459 = vst.msk [vmem:[%s1452 + $0x30] sm:$0xff] %vm243, %v1438
      %1460 = vst.msk [vmem:[%s1452 + $0x38] sm:$0xff] %vm243, %v1441
      %1461 = vst.msk [vmem:[%s1452 + $0x40] sm:$0xff] %vm243, %v1446
      %1462 = vst.msk [vmem:[%s1452 + $0x48] sm:$0xff] %vm243, %v1449
      %s1463 = scalar_lea.vmem %s227, 64
      %v1464 = vld [vmem:[%s1463] sm:$0xff]
      %v1465 = vld [vmem:[%s1463 + $0x8] sm:$0xff]
      %v1466 = vld [vmem:[%s1463 + $0x10] sm:$0xff]
      %v1467 = vld [vmem:[%s1463 + $0x18] sm:$0x1]
      %v1468 = vsel %vm243, %v1464, -inf
      %1469 = vmax.xlane.f32.xlu0 %v1468
      %v1470 = vpop.xlane.xlu0 %1469
      %v1471 = vsel %vm243, %v1465, -inf
      %1472 = vmax.xlane.f32.xlu0 %v1471
      %v1473 = vpop.xlane.xlu0 %1472
      %v1474 = vsel %vm243, %v1466, -inf
      %1475 = vmax.xlane.f32.xlu0 %v1474
      %v1476 = vpop.xlane.xlu0 %1475
      %v1477 = vsel %vm253, %v1467, -inf
      %1478 = vmax.xlane.f32.xlu0 %v1477
      %v1479 = vpop.xlane.xlu0 %1478
      %v1480 = vsub.f32 %v1464, %v1470
      %v1481 = vsub.f32 %v1465, %v1473
      %v1482 = vsub.f32 %v1466, %v1476
      %v1483 = vsub.f32 %v1467, %v1479
      %v1484 = vmul.f32 %v1480, 1.442695
      %v1485 = vpow.pop %v1484
      %v1486 = vmul.f32 %v1481, 1.442695
      %v1487 = vpow.pop %v1486
      %v1488 = vmul.f32 %v1482, 1.442695
      %v1489 = vpow.pop %v1488
      %v1490 = vmul.f32 %v1483, 1.442695
      %v1491 = vpow.pop %v1490
      %v1492 = vsel %vm243, %v1485, 0.0
      %1493 = vadd.xlane.f32.xlu0 %v1492
      %v1494 = vpop.xlane.xlu0 %1493
      %v1495 = vsel %vm243, %v1487, 0.0
      %1496 = vadd.xlane.f32.xlu0 %v1495
      %v1497 = vpop.xlane.xlu0 %1496
      %v1498 = vsel %vm243, %v1489, 0.0
      %1499 = vadd.xlane.f32.xlu0 %v1498
      %v1500 = vpop.xlane.xlu0 %1499
      %v1501 = vsel %vm253, %v1491, 0.0
      %1502 = vadd.xlane.f32.xlu0 %v1501
      %v1503 = vpop.xlane.xlu0 %1502
      %v1504 = vrcp.pop %v1494
      %v1505 = vmul.f32 %v1485, %v1504
      %v1506 = vrcp.pop %v1497
      %v1507 = vmul.f32 %v1487, %v1506
      %v1508 = vrcp.pop %v1500
      %v1509 = vmul.f32 %v1489, %v1508
      %v1510 = vrcp.pop %v1503
      %v1511 = vmul.f32 %v1491, %v1510
      %v1512 = vmul.f32 %v1505, 0.25
      %v1513 = vmul.f32 %v1507, 0.25
      %v1514 = vmul.f32 %v1509, 0.25
      %v1515 = vmul.f32 %v1511, 0.25
      %v1516 = vld [vmem:[%s3] sm:$0xff]
      %v1517 = vld [vmem:[%s3 + $0x8] sm:$0xff]
      %v1518 = vld [vmem:[%s3 + $0x10] sm:$0xff]
      %v1519 = vld [vmem:[%s3 + $0x18] sm:$0x1]
      %v1520 = vadd.f32 %v1512, %v1516
      %v1521 = vadd.f32 %v1513, %v1517
      %v1522 = vadd.f32 %v1514, %v1518
      %v1523 = vadd.f32 %v1515, %v1519
      %v1524 = vadd.f32 %v1520, %v1134
      %v1525 = vadd.f32 %v1521, %v1135
      %v1526 = vadd.f32 %v1522, %v1136
      %v1527 = vadd.f32 %v1523, %v1137
      %v1528 = vmul.f32 %v380, 0.125
      %v1529 = vmul.f32 %v382, 0.125
      %v1530 = vmul.f32 %v384, 0.125
      %v1531 = vmul.f32 %v386, 0.125
      %v1532 = vadd.f32 %v1524, %v1528
      %v1533 = vadd.f32 %v1525, %v1529
      %v1534 = vadd.f32 %v1526, %v1530
      %v1535 = vadd.f32 %v1527, %v1531
      %s1536 = scalar_lea.vmem %s227, 192
      %v1537 = vld [vmem:[%s1536] sm:$0xff]
      %v1538 = vld [vmem:[%s1536 + $0x8] sm:$0xff]
      %v1539 = vld [vmem:[%s1536 + $0x10] sm:$0xff]
      %v1540 = vld [vmem:[%s1536 + $0x18] sm:$0x1]
      %v1541 = vsel %vm243, %v1537, -inf
      %1542 = vmax.xlane.f32.xlu0 %v1541
      %v1543 = vpop.xlane.xlu0 %1542
      %v1544 = vsel %vm243, %v1538, -inf
      %1545 = vmax.xlane.f32.xlu0 %v1544
      %v1546 = vpop.xlane.xlu0 %1545
      %v1547 = vsel %vm243, %v1539, -inf
      %1548 = vmax.xlane.f32.xlu0 %v1547
      %v1549 = vpop.xlane.xlu0 %1548
      %v1550 = vsel %vm253, %v1540, -inf
      %1551 = vmax.xlane.f32.xlu0 %v1550
      %v1552 = vpop.xlane.xlu0 %1551
      %v1553 = vsub.f32 %v1537, %v1543
      %v1554 = vsub.f32 %v1538, %v1546
      %v1555 = vsub.f32 %v1539, %v1549
      %v1556 = vsub.f32 %v1540, %v1552
      %v1557 = vmul.f32 %v1553, 1.442695
      %v1558 = vpow.pop %v1557
      %v1559 = vmul.f32 %v1554, 1.442695
      %v1560 = vpow.pop %v1559
      %v1561 = vmul.f32 %v1555, 1.442695
      %v1562 = vpow.pop %v1561
      %v1563 = vmul.f32 %v1556, 1.442695
      %v1564 = vpow.pop %v1563
      %v1565 = vsel %vm243, %v1558, 0.0
      %1566 = vadd.xlane.f32.xlu0 %v1565
      %v1567 = vpop.xlane.xlu0 %1566
      %v1568 = vsel %vm243, %v1560, 0.0
      %1569 = vadd.xlane.f32.xlu0 %v1568
      %v1570 = vpop.xlane.xlu0 %1569
      %v1571 = vsel %vm243, %v1562, 0.0
      %1572 = vadd.xlane.f32.xlu0 %v1571
      %v1573 = vpop.xlane.xlu0 %1572
      %v1574 = vsel %vm253, %v1564, 0.0
      %1575 = vadd.xlane.f32.xlu0 %v1574
      %v1576 = vpop.xlane.xlu0 %1575
      %v1577 = vrcp.pop %v1567
      %v1578 = vmul.f32 %v1558, %v1577
      %v1579 = vrcp.pop %v1570
      %v1580 = vmul.f32 %v1560, %v1579
      %v1581 = vrcp.pop %v1573
      %v1582 = vmul.f32 %v1562, %v1581
      %v1583 = vrcp.pop %v1576
      %v1584 = vmul.f32 %v1564, %v1583
      %v1585 = vmul.f32 %v1578, 0.25
      %v1586 = vmul.f32 %v1580, 0.25
      %v1587 = vmul.f32 %v1582, 0.25
      %v1588 = vmul.f32 %v1584, 0.25
      %v1589 = vld [vmem:[%s802] sm:$0xff]
      %v1590 = vld [vmem:[%s802 + $0x8] sm:$0xff]
      %v1591 = vld [vmem:[%s802 + $0x10] sm:$0xff]
      %v1592 = vld [vmem:[%s802 + $0x18] sm:$0x1]
      %v1593 = vadd.f32 %v1585, %v1589
      %v1594 = vadd.f32 %v1586, %v1590
      %v1595 = vadd.f32 %v1587, %v1591
      %v1596 = vadd.f32 %v1588, %v1592
      %v1597 = vadd.f32 %v1593, %v1207
      %v1598 = vadd.f32 %v1594, %v1208
      %v1599 = vadd.f32 %v1595, %v1209
      %v1600 = vadd.f32 %v1596, %v1210
      %v1601 = vmul.f32 %v527, 0.125
      %v1602 = vmul.f32 %v529, 0.125
      %v1603 = vmul.f32 %v531, 0.125
      %v1604 = vmul.f32 %v533, 0.125
      %v1605 = vadd.f32 %v1597, %v1601
      %v1606 = vadd.f32 %v1598, %v1602
      %v1607 = vadd.f32 %v1599, %v1603
      %v1608 = vadd.f32 %v1600, %v1604
      %s1609 = scalar_lea.vmem %s227, 320
      %v1610 = vld [vmem:[%s1609] sm:$0xff]
      %v1611 = vld [vmem:[%s1609 + $0x8] sm:$0xff]
      %v1612 = vld [vmem:[%s1609 + $0x10] sm:$0xff]
      %v1613 = vld [vmem:[%s1609 + $0x18] sm:$0x1]
      %v1614 = vsel %vm243, %v1610, -inf
      %1615 = vmax.xlane.f32.xlu0 %v1614
      %v1616 = vpop.xlane.xlu0 %1615
      %v1617 = vsel %vm243, %v1611, -inf
      %1618 = vmax.xlane.f32.xlu0 %v1617
      %v1619 = vpop.xlane.xlu0 %1618
      %v1620 = vsel %vm243, %v1612, -inf
      %1621 = vmax.xlane.f32.xlu0 %v1620
      %v1622 = vpop.xlane.xlu0 %1621
      %v1623 = vsel %vm253, %v1613, -inf
      %1624 = vmax.xlane.f32.xlu0 %v1623
      %v1625 = vpop.xlane.xlu0 %1624
      %v1626 = vsub.f32 %v1610, %v1616
      %v1627 = vsub.f32 %v1611, %v1619
      %v1628 = vsub.f32 %v1612, %v1622
      %v1629 = vsub.f32 %v1613, %v1625
      %v1630 = vmul.f32 %v1626, 1.442695
      %v1631 = vpow.pop %v1630
      %v1632 = vmul.f32 %v1627, 1.442695
      %v1633 = vpow.pop %v1632
      %v1634 = vmul.f32 %v1628, 1.442695
      %v1635 = vpow.pop %v1634
      %v1636 = vmul.f32 %v1629, 1.442695
      %v1637 = vpow.pop %v1636
      %v1638 = vsel %vm243, %v1631, 0.0
      %1639 = vadd.xlane.f32.xlu0 %v1638
      %v1640 = vpop.xlane.xlu0 %1639
      %v1641 = vsel %vm243, %v1633, 0.0
      %1642 = vadd.xlane.f32.xlu0 %v1641
      %v1643 = vpop.xlane.xlu0 %1642
      %v1644 = vsel %vm243, %v1635, 0.0
      %1645 = vadd.xlane.f32.xlu0 %v1644
      %v1646 = vpop.xlane.xlu0 %1645
      %v1647 = vsel %vm253, %v1637, 0.0
      %1648 = vadd.xlane.f32.xlu0 %v1647
      %v1649 = vpop.xlane.xlu0 %1648
      %v1650 = vrcp.pop %v1640
      %v1651 = vmul.f32 %v1631, %v1650
      %v1652 = vrcp.pop %v1643
      %v1653 = vmul.f32 %v1633, %v1652
      %v1654 = vrcp.pop %v1646
      %v1655 = vmul.f32 %v1635, %v1654
      %v1656 = vrcp.pop %v1649
      %v1657 = vmul.f32 %v1637, %v1656
      %v1658 = vmul.f32 %v1651, 0.25
      %v1659 = vmul.f32 %v1653, 0.25
      %v1660 = vmul.f32 %v1655, 0.25
      %v1661 = vmul.f32 %v1657, 0.25
      %v1662 = vld [vmem:[%s872] sm:$0xff]
      %v1663 = vld [vmem:[%s872 + $0x8] sm:$0xff]
      %v1664 = vld [vmem:[%s872 + $0x10] sm:$0xff]
      %v1665 = vld [vmem:[%s872 + $0x18] sm:$0x1]
      %v1666 = vadd.f32 %v1658, %v1662
      %v1667 = vadd.f32 %v1659, %v1663
      %v1668 = vadd.f32 %v1660, %v1664
      %v1669 = vadd.f32 %v1661, %v1665
      %v1670 = vadd.f32 %v1666, %v1280
      %v1671 = vadd.f32 %v1667, %v1281
      %v1672 = vadd.f32 %v1668, %v1282
      %v1673 = vadd.f32 %v1669, %v1283
      %v1674 = vmul.f32 %v674, 0.125
      %v1675 = vmul.f32 %v676, 0.125
      %v1676 = vmul.f32 %v678, 0.125
      %v1677 = vmul.f32 %v680, 0.125
      %v1678 = vadd.f32 %v1670, %v1674
      %v1679 = vadd.f32 %v1671, %v1675
      %v1680 = vadd.f32 %v1672, %v1676
      %v1681 = vadd.f32 %v1673, %v1677
      %v1686 = vrot.slane %v1605, 7
      %v1687 = vrot.slane %v1606, 7
      %v1688 = vsel %vm893, %v1686, %v1687
      %v1689 = vrot.slane %v1607, 7
      %v1690 = vsel %vm893, %v1687, %v1689
      %v1691 = vrot.slane %v1608, 7
      %v1692 = vsel %vm893, %v1689, %v1691
      %v1701 = vrot.slane %v1678, 6
      %v1702 = vrot.slane %v1679, 6
      %v1703 = vsel %vm909, %v1701, %v1702
      %v1704 = vrot.slane %v1680, 6
      %v1705 = vsel %vm909, %v1702, %v1704
      %v1706 = vrot.slane %v1681, 6
      %v1707 = vsel %vm909, %v1704, %v1706
      %v1712 = vsel %vm893, %v1535, %v1686
      %v1713 = vsel %vm909, %v1692, %v1701
      %v1714 = vpack.c.bf16 %v1533, %v1532
      %v1715 = vpack.c.bf16 %v1712, %v1534
      %v1716 = vpack.c.bf16 %v1690, %v1688
      %v1717 = vpack.c.bf16 %v1703, %v1713
      %v1718 = vpack.c.bf16 %v1707, %v1705
      %s1719 = scalar_lea.vmem %s222, 80
      %v1720 = vld [vmem:[%s1719] sm:$0xf]
      %v1721 = vld [vmem:[%s1719 + $0x4] sm:$0xf]
      %v1722 = vld [vmem:[%s1719 + $0x8] sm:$0xf]
      %v1723 = vld [vmem:[%s1719 + $0xc] sm:$0xf]
      %v1724 = vld [vmem:[%s1719 + $0x10] sm:$0xf]
      %v1725 = vld [vmem:[%s1719 + $0x14] sm:$0xf]
      %v1726 = vld [vmem:[%s1719 + $0x18] sm:$0xf]
      %v1727 = vld [vmem:[%s1719 + $0x1c] sm:$0xf]
      %v1728 = vld [vmem:[%s1719 + $0x20] sm:$0xf]
      %v1729 = vld [vmem:[%s1719 + $0x24] sm:$0xf]
      %v1740 = vunpack.c.l.b16 %v1720
      %v1741 = vunpack.c.l.b16 %v1721
      %v1742 = vunpack.c.l.b16 %v1722
      %v1743 = vunpack.c.l.b16 %v1723
      %v1744 = vunpack.c.l.b16 %v1724
      %v1745 = vunpack.c.l.b16 %v1725
      %v1746 = vunpack.c.l.b16 %v1726
      %v1747 = vunpack.c.l.b16 %v1727
      %v1748 = vunpack.c.l.b16 %v1728
      %v1749 = vunpack.c.l.b16 %v1729
      %v1750 = vpack.c.b16 %v1741, %v1740
      %v1751 = vpack.c.b16 %v1743, %v1742
      %v1752 = vpack.c.b16 %v1745, %v1744
      %v1753 = vpack.c.b16 %v1747, %v1746
      %v1754 = vpack.c.b16 %v1749, %v1748
      %v1756 = vsel %vm963, %v1750, 0
      %v1759 = vsel %vm963, %v1751, 0
      %v1762 = vsel %vm963, %v1752, 0
      %v1765 = vsel %vm963, %v1753, 0
      %v1768 = vsel %vm963, %v1754, 0
      %v1771 = vand.u32 %v1718, %v982
      %1773 = vmatprep.subr.bf16.mxu0 0
      %1774 = vmatpush1.bf16.msra.mxu0 %v1714
      %1775 = vmatprep.subr.bf16.mxu0 0
      %1776 = vmatpush1.bf16.msra.mxu0 %v1715
      %1777 = vmatprep.subr.bf16.mxu0 0
      %1778 = vmatpush1.bf16.msra.mxu0 %v1716
      %1779 = vmatprep.subr.bf16.mxu0 0
      %1780 = vmatpush1.bf16.msra.mxu0 %v1717
      %1781 = vmatprep.subr.bf16.mxu0 0
      %1782 = vmatpush1.bf16.msra.mxu0 %v1771
      %1783 = vmatprep.subr.bf16.mxu0 0
      %1784 = vmatpush1.bf16.msra.mxu0 0
      %1785 = vmatprep.subr.bf16.mxu0 0
      %1786 = vmatpush1.bf16.msra.mxu0 0
      %1787 = vmatprep.subr.bf16.mxu0 0
      %1788 = vmatpush1.bf16.msra.mxu0 0
      %1789 = vmatprep.subr.bf16.mxu0 0
      %1790 = vmatpush1.bf16.msra.mxu0 0
      %1791 = vmatprep.subr.bf16.mxu0 0
      %1792 = vmatpush1.bf16.msra.mxu0 0
      %1793 = vmatprep.subr.bf16.mxu0 0
      %1794 = vmatpush1.bf16.msra.mxu0 0
      %1795 = vmatprep.subr.bf16.mxu0 0
      %1796 = vmatpush1.bf16.msra.mxu0 0
      %1797 = vmatprep.subr.bf16.mxu0 0
      %1798 = vmatpush1.bf16.msra.mxu0 0
      %1799 = vmatprep.subr.bf16.mxu0 0
      %1800 = vmatpush1.bf16.msra.mxu0 0
      %1801 = vmatprep.subr.bf16.mxu0 0
      %1802 = vmatpush1.bf16.msra.mxu0 0
      %1803 = vmatprep.subr.bf16.mxu0 0
      %1804 = vmatpush1.bf16.msra.mxu0 0
      %1805 = vmatprep.mubr.bf16.mxu0 0
      %1806 = vmatmul.mubr.bf16.gmra.mrb[0].mxu0 %v1756
      %v1807 = vpop.f32.mrb[0].mxu0
      %v1808 = vadd.f32 0.0, %v1807
      %v1809 = vpop.f32.mrb[0].mxu0
      %v1810 = vpop.f32.mrb[0].mxu0
      %v1811 = vadd.f32 0.0, %v1810
      %v1812 = vpop.f32.mrb[0].mxu0
      %1813 = vmatprep.mubr.bf16.mxu0 0
      %1814 = vmatmul.mubr.bf16.gmra.mrb[0].mxu0 %v1759
      %v1815 = vpop.f32.mrb[0].mxu0
      %v1816 = vadd.f32 0.0, %v1815
      %v1817 = vpop.f32.mrb[0].mxu0
      %v1818 = vpop.f32.mrb[0].mxu0
      %v1819 = vadd.f32 0.0, %v1818
      %v1820 = vpop.f32.mrb[0].mxu0
      %1821 = vmatprep.mubr.bf16.mxu0 0
      %1822 = vmatmul.mubr.bf16.gmra.mrb[0].mxu0 %v1762
      %v1823 = vpop.f32.mrb[0].mxu0
      %v1824 = vadd.f32 0.0, %v1823
      %v1825 = vpop.f32.mrb[0].mxu0
      %v1826 = vpop.f32.mrb[0].mxu0
      %v1827 = vadd.f32 0.0, %v1826
      %v1828 = vpop.f32.mrb[0].mxu0
      %1829 = vmatprep.mubr.bf16.mxu0 0
      %1830 = vmatmul.mubr.bf16.gmra.mrb[0].mxu0 %v1765
      %v1831 = vpop.f32.mrb[0].mxu0
      %v1832 = vadd.f32 0.0, %v1831
      %v1833 = vpop.f32.mrb[0].mxu0
      %v1834 = vpop.f32.mrb[0].mxu0
      %v1835 = vadd.f32 0.0, %v1834
      %v1836 = vpop.f32.mrb[0].mxu0
      %1837 = vmatprep.mubr.bf16.mxu0 0
      %1838 = vmatmul.mubr.bf16.gmra.mrb[0].mxu0 %v1768
      %v1839 = vpop.f32.mrb[0].mxu0
      %v1840 = vadd.f32 0.0, %v1839
      %v1841 = vpop.f32.mrb[0].mxu0
      %v1842 = vpop.f32.mrb[0].mxu0
      %v1843 = vadd.f32 0.0, %v1842
      %v1844 = vpop.f32.mrb[0].mxu0
      %1845 = vdwg.mxu0
      %s1846 = scalar_lea.vmem %s237, 160
      %1847 = vst.msk [vmem:[%s1846] sm:$0xff] %vm243, %v1808
      %1848 = vst.msk [vmem:[%s1846 + $0x8] sm:$0xff] %vm243, %v1811
      %1849 = vst.msk [vmem:[%s1846 + $0x10] sm:$0xff] %vm243, %v1816
      %1850 = vst.msk [vmem:[%s1846 + $0x18] sm:$0xff] %vm243, %v1819
      %1851 = vst.msk [vmem:[%s1846 + $0x20] sm:$0xff] %vm243, %v1824
      %1852 = vst.msk [vmem:[%s1846 + $0x28] sm:$0xff] %vm243, %v1827
      %1853 = vst.msk [vmem:[%s1846 + $0x30] sm:$0xff] %vm243, %v1832
      %1854 = vst.msk [vmem:[%s1846 + $0x38] sm:$0xff] %vm243, %v1835
      %1855 = vst.msk [vmem:[%s1846 + $0x40] sm:$0xff] %vm243, %v1840
      %1856 = vst.msk [vmem:[%s1846 + $0x48] sm:$0xff] %vm243, %v1843
      %s1857 = scalar_lea.vmem %s227, 96
      %v1858 = vld [vmem:[%s1857] sm:$0xff]
      %v1859 = vld [vmem:[%s1857 + $0x8] sm:$0xff]
      %v1860 = vld [vmem:[%s1857 + $0x10] sm:$0xff]
      %v1861 = vld [vmem:[%s1857 + $0x18] sm:$0x1]
      %v1862 = vsel %vm243, %v1858, -inf
      %1863 = vmax.xlane.f32.xlu0 %v1862
      %v1864 = vpop.xlane.xlu0 %1863
      %v1865 = vsel %vm243, %v1859, -inf
      %1866 = vmax.xlane.f32.xlu0 %v1865
      %v1867 = vpop.xlane.xlu0 %1866
      %v1868 = vsel %vm243, %v1860, -inf
      %1869 = vmax.xlane.f32.xlu0 %v1868
      %v1870 = vpop.xlane.xlu0 %1869
      %v1871 = vsel %vm253, %v1861, -inf
      %1872 = vmax.xlane.f32.xlu0 %v1871
      %v1873 = vpop.xlane.xlu0 %1872
      %v1874 = vsub.f32 %v1858, %v1864
      %v1875 = vsub.f32 %v1859, %v1867
      %v1876 = vsub.f32 %v1860, %v1870
      %v1877 = vsub.f32 %v1861, %v1873
      %v1878 = vmul.f32 %v1874, 1.442695
      %v1879 = vpow.pop %v1878
      %v1880 = vmul.f32 %v1875, 1.442695
      %v1881 = vpow.pop %v1880
      %v1882 = vmul.f32 %v1876, 1.442695
      %v1883 = vpow.pop %v1882
      %v1884 = vmul.f32 %v1877, 1.442695
      %v1885 = vpow.pop %v1884
      %v1886 = vsel %vm243, %v1879, 0.0
      %1887 = vadd.xlane.f32.xlu0 %v1886
      %v1888 = vpop.xlane.xlu0 %1887
      %v1889 = vsel %vm243, %v1881, 0.0
      %1890 = vadd.xlane.f32.xlu0 %v1889
      %v1891 = vpop.xlane.xlu0 %1890
      %v1892 = vsel %vm243, %v1883, 0.0
      %1893 = vadd.xlane.f32.xlu0 %v1892
      %v1894 = vpop.xlane.xlu0 %1893
      %v1895 = vsel %vm253, %v1885, 0.0
      %1896 = vadd.xlane.f32.xlu0 %v1895
      %v1897 = vpop.xlane.xlu0 %1896
      %v1898 = vrcp.pop %v1888
      %v1899 = vmul.f32 %v1879, %v1898
      %v1900 = vrcp.pop %v1891
      %v1901 = vmul.f32 %v1881, %v1900
      %v1902 = vrcp.pop %v1894
      %v1903 = vmul.f32 %v1883, %v1902
      %v1904 = vrcp.pop %v1897
      %v1905 = vmul.f32 %v1885, %v1904
      %v1906 = vmul.f32 %v1899, 0.25
      %v1907 = vmul.f32 %v1901, 0.25
      %v1908 = vmul.f32 %v1903, 0.25
      %v1909 = vmul.f32 %v1905, 0.25
      %v1910 = vld [vmem:[%s3] sm:$0xff]
      %v1911 = vld [vmem:[%s3 + $0x8] sm:$0xff]
      %v1912 = vld [vmem:[%s3 + $0x10] sm:$0xff]
      %v1913 = vld [vmem:[%s3 + $0x18] sm:$0x1]
      %v1914 = vadd.f32 %v1906, %v1910
      %v1915 = vadd.f32 %v1907, %v1911
      %v1916 = vadd.f32 %v1908, %v1912
      %v1917 = vadd.f32 %v1909, %v1913
      %v1918 = vadd.f32 %v1914, %v1528
      %v1919 = vadd.f32 %v1915, %v1529
      %v1920 = vadd.f32 %v1916, %v1530
      %v1921 = vadd.f32 %v1917, %v1531
      %s1922 = scalar_lea.vmem %s227, 224
      %v1923 = vld [vmem:[%s1922] sm:$0xff]
      %v1924 = vld [vmem:[%s1922 + $0x8] sm:$0xff]
      %v1925 = vld [vmem:[%s1922 + $0x10] sm:$0xff]
      %v1926 = vld [vmem:[%s1922 + $0x18] sm:$0x1]
      %v1927 = vsel %vm243, %v1923, -inf
      %1928 = vmax.xlane.f32.xlu0 %v1927
      %v1929 = vpop.xlane.xlu0 %1928
      %v1930 = vsel %vm243, %v1924, -inf
      %1931 = vmax.xlane.f32.xlu0 %v1930
      %v1932 = vpop.xlane.xlu0 %1931
      %v1933 = vsel %vm243, %v1925, -inf
      %1934 = vmax.xlane.f32.xlu0 %v1933
      %v1935 = vpop.xlane.xlu0 %1934
      %v1936 = vsel %vm253, %v1926, -inf
      %1937 = vmax.xlane.f32.xlu0 %v1936
      %v1938 = vpop.xlane.xlu0 %1937
      %v1939 = vsub.f32 %v1923, %v1929
      %v1940 = vsub.f32 %v1924, %v1932
      %v1941 = vsub.f32 %v1925, %v1935
      %v1942 = vsub.f32 %v1926, %v1938
      %v1943 = vmul.f32 %v1939, 1.442695
      %v1944 = vpow.pop %v1943
      %v1945 = vmul.f32 %v1940, 1.442695
      %v1946 = vpow.pop %v1945
      %v1947 = vmul.f32 %v1941, 1.442695
      %v1948 = vpow.pop %v1947
      %v1949 = vmul.f32 %v1942, 1.442695
      %v1950 = vpow.pop %v1949
      %v1951 = vsel %vm243, %v1944, 0.0
      %1952 = vadd.xlane.f32.xlu0 %v1951
      %v1953 = vpop.xlane.xlu0 %1952
      %v1954 = vsel %vm243, %v1946, 0.0
      %1955 = vadd.xlane.f32.xlu0 %v1954
      %v1956 = vpop.xlane.xlu0 %1955
      %v1957 = vsel %vm243, %v1948, 0.0
      %1958 = vadd.xlane.f32.xlu0 %v1957
      %v1959 = vpop.xlane.xlu0 %1958
      %v1960 = vsel %vm253, %v1950, 0.0
      %1961 = vadd.xlane.f32.xlu0 %v1960
      %v1962 = vpop.xlane.xlu0 %1961
      %v1963 = vrcp.pop %v1953
      %v1964 = vmul.f32 %v1944, %v1963
      %v1965 = vrcp.pop %v1956
      %v1966 = vmul.f32 %v1946, %v1965
      %v1967 = vrcp.pop %v1959
      %v1968 = vmul.f32 %v1948, %v1967
      %v1969 = vrcp.pop %v1962
      %v1970 = vmul.f32 %v1950, %v1969
      %v1971 = vmul.f32 %v1964, 0.25
      %v1972 = vmul.f32 %v1966, 0.25
      %v1973 = vmul.f32 %v1968, 0.25
      %v1974 = vmul.f32 %v1970, 0.25
      %v1975 = vld [vmem:[%s802] sm:$0xff]
      %v1976 = vld [vmem:[%s802 + $0x8] sm:$0xff]
      %v1977 = vld [vmem:[%s802 + $0x10] sm:$0xff]
      %v1978 = vld [vmem:[%s802 + $0x18] sm:$0x1]
      %v1979 = vadd.f32 %v1971, %v1975
      %v1980 = vadd.f32 %v1972, %v1976
      %v1981 = vadd.f32 %v1973, %v1977
      %v1982 = vadd.f32 %v1974, %v1978
      %v1983 = vadd.f32 %v1979, %v1601
      %v1984 = vadd.f32 %v1980, %v1602
      %v1985 = vadd.f32 %v1981, %v1603
      %v1986 = vadd.f32 %v1982, %v1604
      %s1987 = scalar_lea.vmem %s227, 352
      %v1988 = vld [vmem:[%s1987] sm:$0xff]
      %v1989 = vld [vmem:[%s1987 + $0x8] sm:$0xff]
      %v1990 = vld [vmem:[%s1987 + $0x10] sm:$0xff]
      %v1991 = vld [vmem:[%s1987 + $0x18] sm:$0x1]
      %v1992 = vsel %vm243, %v1988, -inf
      %1993 = vmax.xlane.f32.xlu0 %v1992
      %v1994 = vpop.xlane.xlu0 %1993
      %v1995 = vsel %vm243, %v1989, -inf
      %1996 = vmax.xlane.f32.xlu0 %v1995
      %v1997 = vpop.xlane.xlu0 %1996
      %v1998 = vsel %vm243, %v1990, -inf
      %1999 = vmax.xlane.f32.xlu0 %v1998
      %v2000 = vpop.xlane.xlu0 %1999
      %v2001 = vsel %vm253, %v1991, -inf
      %2002 = vmax.xlane.f32.xlu0 %v2001
      %v2003 = vpop.xlane.xlu0 %2002
      %v2004 = vsub.f32 %v1988, %v1994
      %v2005 = vsub.f32 %v1989, %v1997
      %v2006 = vsub.f32 %v1990, %v2000
      %v2007 = vsub.f32 %v1991, %v2003
      %v2008 = vmul.f32 %v2004, 1.442695
      %v2009 = vpow.pop %v2008
      %v2010 = vmul.f32 %v2005, 1.442695
      %v2011 = vpow.pop %v2010
      %v2012 = vmul.f32 %v2006, 1.442695
      %v2013 = vpow.pop %v2012
      %v2014 = vmul.f32 %v2007, 1.442695
      %v2015 = vpow.pop %v2014
      %v2016 = vsel %vm243, %v2009, 0.0
      %2017 = vadd.xlane.f32.xlu0 %v2016
      %v2018 = vpop.xlane.xlu0 %2017
      %v2019 = vsel %vm243, %v2011, 0.0
      %2020 = vadd.xlane.f32.xlu0 %v2019
      %v2021 = vpop.xlane.xlu0 %2020
      %v2022 = vsel %vm243, %v2013, 0.0
      %2023 = vadd.xlane.f32.xlu0 %v2022
      %v2024 = vpop.xlane.xlu0 %2023
      %v2025 = vsel %vm253, %v2015, 0.0
      %2026 = vadd.xlane.f32.xlu0 %v2025
      %v2027 = vpop.xlane.xlu0 %2026
      %v2028 = vrcp.pop %v2018
      %v2029 = vmul.f32 %v2009, %v2028
      %v2030 = vrcp.pop %v2021
      %v2031 = vmul.f32 %v2011, %v2030
      %v2032 = vrcp.pop %v2024
      %v2033 = vmul.f32 %v2013, %v2032
      %v2034 = vrcp.pop %v2027
      %v2035 = vmul.f32 %v2015, %v2034
      %v2036 = vmul.f32 %v2029, 0.25
      %v2037 = vmul.f32 %v2031, 0.25
      %v2038 = vmul.f32 %v2033, 0.25
      %v2039 = vmul.f32 %v2035, 0.25
      %v2040 = vld [vmem:[%s872] sm:$0xff]
      %v2041 = vld [vmem:[%s872 + $0x8] sm:$0xff]
      %v2042 = vld [vmem:[%s872 + $0x10] sm:$0xff]
      %v2043 = vld [vmem:[%s872 + $0x18] sm:$0x1]
      %v2044 = vadd.f32 %v2036, %v2040
      %v2045 = vadd.f32 %v2037, %v2041
      %v2046 = vadd.f32 %v2038, %v2042
      %v2047 = vadd.f32 %v2039, %v2043
      %v2048 = vadd.f32 %v2044, %v1674
      %v2049 = vadd.f32 %v2045, %v1675
      %v2050 = vadd.f32 %v2046, %v1676
      %v2051 = vadd.f32 %v2047, %v1677
      %v2056 = vrot.slane %v1983, 7
      %v2057 = vrot.slane %v1984, 7
      %v2058 = vsel %vm893, %v2056, %v2057
      %v2059 = vrot.slane %v1985, 7
      %v2060 = vsel %vm893, %v2057, %v2059
      %v2061 = vrot.slane %v1986, 7
      %v2062 = vsel %vm893, %v2059, %v2061
      %v2071 = vrot.slane %v2048, 6
      %v2072 = vrot.slane %v2049, 6
      %v2073 = vsel %vm909, %v2071, %v2072
      %v2074 = vrot.slane %v2050, 6
      %v2075 = vsel %vm909, %v2072, %v2074
      %v2076 = vrot.slane %v2051, 6
      %v2077 = vsel %vm909, %v2074, %v2076
      %v2082 = vsel %vm893, %v1921, %v2056
      %v2083 = vsel %vm909, %v2062, %v2071
      %v2084 = vpack.c.bf16 %v1919, %v1918
      %v2085 = vpack.c.bf16 %v2082, %v1920
      %v2086 = vpack.c.bf16 %v2060, %v2058
      %v2087 = vpack.c.bf16 %v2073, %v2083
      %v2088 = vpack.c.bf16 %v2077, %v2075
      %s2089 = scalar_lea.vmem %s222, 120
      %v2090 = vld [vmem:[%s2089] sm:$0xf]
      %v2091 = vld [vmem:[%s2089 + $0x4] sm:$0xf]
      %v2092 = vld [vmem:[%s2089 + $0x8] sm:$0xf]
      %v2093 = vld [vmem:[%s2089 + $0xc] sm:$0xf]
      %v2094 = vld [vmem:[%s2089 + $0x10] sm:$0xf]
      %v2095 = vld [vmem:[%s2089 + $0x14] sm:$0xf]
      %v2096 = vld [vmem:[%s2089 + $0x18] sm:$0xf]
      %v2097 = vld [vmem:[%s2089 + $0x1c] sm:$0xf]
      %v2098 = vld [vmem:[%s2089 + $0x20] sm:$0xf]
      %v2099 = vld [vmem:[%s2089 + $0x24] sm:$0xf]
      %v2110 = vunpack.c.l.b16 %v2090
      %v2111 = vunpack.c.l.b16 %v2091
      %v2112 = vunpack.c.l.b16 %v2092
      %v2113 = vunpack.c.l.b16 %v2093
      %v2114 = vunpack.c.l.b16 %v2094
      %v2115 = vunpack.c.l.b16 %v2095
      %v2116 = vunpack.c.l.b16 %v2096
      %v2117 = vunpack.c.l.b16 %v2097
      %v2118 = vunpack.c.l.b16 %v2098
      %v2119 = vunpack.c.l.b16 %v2099
      %v2120 = vpack.c.b16 %v2111, %v2110
      %v2121 = vpack.c.b16 %v2113, %v2112
      %v2122 = vpack.c.b16 %v2115, %v2114
      %v2123 = vpack.c.b16 %v2117, %v2116
      %v2124 = vpack.c.b16 %v2119, %v2118
      %v2126 = vsel %vm963, %v2120, 0
      %v2129 = vsel %vm963, %v2121, 0
      %v2132 = vsel %vm963, %v2122, 0
      %v2135 = vsel %vm963, %v2123, 0
      %v2138 = vsel %vm963, %v2124, 0
      %v2141 = vand.u32 %v2088, %v982
      %2143 = vmatprep.subr.bf16.mxu0 0
      %2144 = vmatpush1.bf16.msra.mxu0 %v2084
      %2145 = vmatprep.subr.bf16.mxu0 0
      %2146 = vmatpush1.bf16.msra.mxu0 %v2085
      %2147 = vmatprep.subr.bf16.mxu0 0
      %2148 = vmatpush1.bf16.msra.mxu0 %v2086
      %2149 = vmatprep.subr.bf16.mxu0 0
      %2150 = vmatpush1.bf16.msra.mxu0 %v2087
      %2151 = vmatprep.subr.bf16.mxu0 0
      %2152 = vmatpush1.bf16.msra.mxu0 %v2141
      %2153 = vmatprep.subr.bf16.mxu0 0
      %2154 = vmatpush1.bf16.msra.mxu0 0
      %2155 = vmatprep.subr.bf16.mxu0 0
      %2156 = vmatpush1.bf16.msra.mxu0 0
      %2157 = vmatprep.subr.bf16.mxu0 0
      %2158 = vmatpush1.bf16.msra.mxu0 0
      %2159 = vmatprep.subr.bf16.mxu0 0
      %2160 = vmatpush1.bf16.msra.mxu0 0
      %2161 = vmatprep.subr.bf16.mxu0 0
      %2162 = vmatpush1.bf16.msra.mxu0 0
      %2163 = vmatprep.subr.bf16.mxu0 0
      %2164 = vmatpush1.bf16.msra.mxu0 0
      %2165 = vmatprep.subr.bf16.mxu0 0
      %2166 = vmatpush1.bf16.msra.mxu0 0
      %2167 = vmatprep.subr.bf16.mxu0 0
      %2168 = vmatpush1.bf16.msra.mxu0 0
      %2169 = vmatprep.subr.bf16.mxu0 0
      %2170 = vmatpush1.bf16.msra.mxu0 0
      %2171 = vmatprep.subr.bf16.mxu0 0
      %2172 = vmatpush1.bf16.msra.mxu0 0
      %2173 = vmatprep.subr.bf16.mxu0 0
      %2174 = vmatpush1.bf16.msra.mxu0 0
      %2175 = vmatprep.mubr.bf16.mxu0 0
      %2176 = vmatmul.mubr.bf16.gmra.mrb[0].mxu0 %v2126
      %v2177 = vpop.f32.mrb[0].mxu0
      %v2178 = vadd.f32 0.0, %v2177
      %v2179 = vpop.f32.mrb[0].mxu0
      %v2180 = vpop.f32.mrb[0].mxu0
      %v2181 = vadd.f32 0.0, %v2180
      %v2182 = vpop.f32.mrb[0].mxu0
      %2183 = vmatprep.mubr.bf16.mxu0 0
      %2184 = vmatmul.mubr.bf16.gmra.mrb[0].mxu0 %v2129
      %v2185 = vpop.f32.mrb[0].mxu0
      %v2186 = vadd.f32 0.0, %v2185
      %v2187 = vpop.f32.mrb[0].mxu0
      %v2188 = vpop.f32.mrb[0].mxu0
      %v2189 = vadd.f32 0.0, %v2188
      %v2190 = vpop.f32.mrb[0].mxu0
      %2191 = vmatprep.mubr.bf16.mxu0 0
      %2192 = vmatmul.mubr.bf16.gmra.mrb[0].mxu0 %v2132
      %v2193 = vpop.f32.mrb[0].mxu0
      %v2194 = vadd.f32 0.0, %v2193
      %v2195 = vpop.f32.mrb[0].mxu0
      %v2196 = vpop.f32.mrb[0].mxu0
      %v2197 = vadd.f32 0.0, %v2196
      %v2198 = vpop.f32.mrb[0].mxu0
      %2199 = vmatprep.mubr.bf16.mxu0 0
      %2200 = vmatmul.mubr.bf16.gmra.mrb[0].mxu0 %v2135
      %v2201 = vpop.f32.mrb[0].mxu0
      %v2202 = vadd.f32 0.0, %v2201
      %v2203 = vpop.f32.mrb[0].mxu0
      %v2204 = vpop.f32.mrb[0].mxu0
      %v2205 = vadd.f32 0.0, %v2204
      %v2206 = vpop.f32.mrb[0].mxu0
      %2207 = vmatprep.mubr.bf16.mxu0 0
      %2208 = vmatmul.mubr.bf16.gmra.mrb[0].mxu0 %v2138
      %v2209 = vpop.f32.mrb[0].mxu0
      %v2210 = vadd.f32 0.0, %v2209
      %v2211 = vpop.f32.mrb[0].mxu0
      %v2212 = vpop.f32.mrb[0].mxu0
      %v2213 = vadd.f32 0.0, %v2212
      %v2214 = vpop.f32.mrb[0].mxu0
      %2215 = vdwg.mxu0
      %s2216 = scalar_lea.vmem %s237, 240
      %2217 = vst.msk [vmem:[%s2216] sm:$0xff] %vm243, %v2178
      %2218 = vst.msk [vmem:[%s2216 + $0x8] sm:$0xff] %vm243, %v2181
      %2219 = vst.msk [vmem:[%s2216 + $0x10] sm:$0xff] %vm243, %v2186
      %2220 = vst.msk [vmem:[%s2216 + $0x18] sm:$0xff] %vm243, %v2189
      %2221 = vst.msk [vmem:[%s2216 + $0x20] sm:$0xff] %vm243, %v2194
      %2222 = vst.msk [vmem:[%s2216 + $0x28] sm:$0xff] %vm243, %v2197
      %2223 = vst.msk [vmem:[%s2216 + $0x30] sm:$0xff] %vm243, %v2202
      %2224 = vst.msk [vmem:[%s2216 + $0x38] sm:$0xff] %vm243, %v2205
      %2225 = vst.msk [vmem:[%s2216 + $0x40] sm:$0xff] %vm243, %v2210
      %2226 = vst.msk [vmem:[%s2216 + $0x48] sm:$0xff] %vm243, %v2213
      %p2227 = scmp.lt.s32.totalorder %s15, 1
      %s2228 = scalar_select %p2227, %s15, 1
      %s2229 = smul.addr %s2228, 40
      %s2230 = smul.addr %s2229, 8
      %s2231 = scalar_lea.vmem %s4, %s2230
      // Predicated region
      $region37: #{ske_mixf.6} parent=35 // pred_check
        %p2232 = pneg %p132
      $region38: #{ske_mixf.6} parent=35 // pred_check_branch
        %2234 = sbr.rel (%p2232) target = $region40
      $region39: #{ske_mixf.6} parent=35 // pred_region
        _
      $region40: #{ske_mixf.6} parent=35 // pred_fallthru
        _
    $region36: #{ske_mixf.6} parent=5 // pred_fallthru
      _
    %p2235 = scmp.le.s32.totalorder 2, %s10
    // Predicated region
    $region41: #{ske_mixf.6} parent=5 // pred_check
      %p2236 = pneg %p2235
    $region42: #{ske_mixf.6} parent=5 // pred_check_branch
      %2238 = sbr.rel (%p2236) target = $region44
    $region43: #{ske_mixf.6} parent=5 // pred_region
      %s2239 = ssub.s32 %s10, 2
      // Predicated region
      $region45: #{ske_mixf.6} parent=43 // pred_check
        %p2240 = pneg %p138
      $region46: #{ske_mixf.6} parent=43 // pred_check_branch
        %2242 = sbr.rel (%p2240) target = $region48
      $region47: #{ske_mixf.6} parent=43 // pred_region
        %p2243 = scmp.lt.s32.totalorder %s16, 1
        %s2244 = scalar_select %p2243, %s16, 1
        %s2245 = smul.addr %s2244, 40
        %s2246 = smul.addr %s2245, 8
        %s2247 = scalar_lea.vmem %s4, %s2246
      $region48: #{ske_mixf.6} parent=43 // pred_fallthru
        _
    $region44: #{ske_mixf.6} parent=5 // pred_fallthru
      _
  $region6: #{ske_mixf.6} parent=0 // loop_footer
    %s14 = sadd.s32 1, %s10
  $region7: #{ske_mixf.6} parent=0 // loop_footer_branch
    %9 = sbr.rel target = $region3
  $region8: #{ske_mixf.6} parent=0 // loop_exit
    _

// kernel: ske_mixf.7
$region0: #{ske_mixf.7}
  #allocation0 [shape = 'u32[]', space=smem, size = 0x4, offset = 0x4, fixed_abs, tag = 'smem constant byte address 0x4 - core index']
  #allocation1 [shape = 'u32[144,128]{1,0:T(1,128)}', space=vmem, size = 0x12000, scoped, tag = 'internal scratch']
  %s0 = inlined_call_operand.vmem [shape: bf16[512,40], index: 0, kind: input, shape index: {}]
  %s1 = inlined_call_operand.vmem [shape: bf16[40,128], index: 1, kind: input, shape index: {}]
  %s2 = inlined_call_operand.vmem [shape: f32[3,128], index: 2, kind: input, shape index: {}]
  %s3 = inlined_call_operand.vmem [shape: f32[512,128], index: 3, kind: output, shape index: {}]
  %s4 = sld [smem:[#allocation0]]
  $region45: #{ske_mixf.7} parent=0
    _
  %s6 = ssub.s32 1, %s4
  %s7 = scalar_select 0, %s6, %s4
  loop: start=0, step=1, limit=4
  $region2: #{ske_mixf.7} parent=0 // loop_pre_header
    _
  $region3: #{ske_mixf.7} parent=0 // loop_header
    %s9 = sphi 0, %s13
    %p10 = scmp.ge.s32.totalorder %s9, 4
    %s19 = sphi 0, %s21
    %s22 = sphi 0, %s19
    %s23 = sphi 0, %s22
    %s39 = sphi 0, %s23
    %s43 = sphi 0, %s43
    %s45 = sphi 0, %s43
    %s46 = sphi 0, %s45
    %s60 = sphi 0, %s46
    %s64 = sphi 0, %s64
    %s66 = sphi 0, %s64
    %s67 = sphi 0, %s66
    %s81 = sphi 0, %s67
    %s87 = sphi 0, %s89
    %s90 = sphi 0, %s87
    %s91 = sphi 0, %s90
    %s107 = sphi 0, %s91
  $region4: #{ske_mixf.7} parent=0 // loop_header_branch
    %12 = sbr.rel (%p10) target = $region8
  $region5: #{ske_mixf.7} parent=0 // loop_body
    %s14 = ssub.s32 %s9, 1
    %s15 = ssub.s32 %s9, 2
    %s16 = sadd.s32 %s9, 1
    %s17 = ssub.s32 %s9, %s16
    %p18 = scmp.eq.s32.totalorder %s17, 0
    %s20 = sadd.s32 %s19, 1
    %s21 = scalar_select %p18, %s19, %s20
    %p24 = pneg %p18
    %p25 = scmp.eq.s32.totalorder %s9, 1
    %p26 = por %p24, %p25
    %p27 = scmp.ne.s32.totalorder %s19, %s22
    %p28 = scmp.eq.s32.totalorder %s9, 0
    %p29 = por %p27, %p28
    %p30 = scmp.ne.s32.totalorder %s19, %s22
    %p31 = scmp.eq.s32.totalorder %s14, 1
    %p32 = por %p30, %p31
    %p33 = scmp.ne.s32.totalorder %s22, %s23
    %p34 = scmp.eq.s32.totalorder %s14, 0
    %p35 = por %p33, %p34
    %p36 = scmp.ne.s32.totalorder %s22, %s23
    %p37 = scmp.eq.s32.totalorder %s15, 1
    %p38 = por %p36, %p37
    %p40 = scmp.ne.s32.totalorder %s23, %s39
    %p41 = scmp.eq.s32.totalorder %s15, 0
    %p42 = por %p40, %p41
    %s44 = sadd.s32 %s43, 1
    %p47 = scmp.eq.s32.totalorder %s9, 1
    %p48 = scmp.ne.s32.totalorder %s43, %s45
    %p49 = scmp.eq.s32.totalorder %s9, 0
    %p50 = por %p48, %p49
    %p51 = scmp.ne.s32.totalorder %s43, %s45
    %p52 = scmp.eq.s32.totalorder %s14, 1
    %p53 = por %p51, %p52
    %p54 = scmp.ne.s32.totalorder %s45, %s46
    %p55 = scmp.eq.s32.totalorder %s14, 0
    %p56 = por %p54, %p55
    %p57 = scmp.ne.s32.totalorder %s45, %s46
    %p58 = scmp.eq.s32.totalorder %s15, 1
    %p59 = por %p57, %p58
    %p61 = scmp.ne.s32.totalorder %s46, %s60
    %p62 = scmp.eq.s32.totalorder %s15, 0
    %p63 = por %p61, %p62
    %s65 = sadd.s32 %s64, 1
    %p68 = scmp.eq.s32.totalorder %s9, 1
    %p69 = scmp.ne.s32.totalorder %s64, %s66
    %p70 = scmp.eq.s32.totalorder %s9, 0
    %p71 = por %p69, %p70
    %p72 = scmp.ne.s32.totalorder %s64, %s66
    %p73 = scmp.eq.s32.totalorder %s14, 1
    %p74 = por %p72, %p73
    %p75 = scmp.ne.s32.totalorder %s66, %s67
    %p76 = scmp.eq.s32.totalorder %s14, 0
    %p77 = por %p75, %p76
    %p78 = scmp.ne.s32.totalorder %s66, %s67
    %p79 = scmp.eq.s32.totalorder %s15, 1
    %p80 = por %p78, %p79
    %p82 = scmp.ne.s32.totalorder %s67, %s81
    %p83 = scmp.eq.s32.totalorder %s15, 0
    %p84 = por %p82, %p83
    %s85 = ssub.s32 %s9, %s16
    %p86 = scmp.eq.s32.totalorder %s85, 0
    %s88 = sadd.s32 %s87, 1
    %s89 = scalar_select %p86, %s87, %s88
    %p92 = pneg %p86
    %p93 = scmp.eq.s32.totalorder %s9, 1
    %p94 = por %p92, %p93
    %p95 = scmp.ne.s32.totalorder %s87, %s90
    %p96 = scmp.eq.s32.totalorder %s9, 0
    %p97 = por %p95, %p96
    %p98 = scmp.ne.s32.totalorder %s87, %s90
    %p99 = scmp.eq.s32.totalorder %s14, 1
    %p100 = por %p98, %p99
    %p101 = scmp.ne.s32.totalorder %s90, %s91
    %p102 = scmp.eq.s32.totalorder %s14, 0
    %p103 = por %p101, %p102
    %p104 = scmp.ne.s32.totalorder %s90, %s91
    %p105 = scmp.eq.s32.totalorder %s15, 1
    %p106 = por %p104, %p105
    %p108 = scmp.ne.s32.totalorder %s91, %s107
    %p109 = scmp.eq.s32.totalorder %s15, 0
    %p110 = por %p108, %p109
    %p111 = scmp.le.s32.totalorder 1, %s9
    %p112 = scmp.lt.s32.totalorder %s9, 3
    %p113 = pnand %p111, %p112
    %p114 = pneg %p113
    // Predicated region
    $region9: #{ske_mixf.7} parent=5 // pred_check
      _
    $region10: #{ske_mixf.7} parent=5 // pred_check_branch
      %116 = sbr.rel (%p113) target = $region12
    $region11: #{ske_mixf.7} parent=5 // pred_region
      %s117 = ssub.s32 %s9, 1
      // Predicated region
      $region13: #{ske_mixf.7} parent=11 // pred_check
        %p118 = pneg %p56
      $region14: #{ske_mixf.7} parent=11 // pred_check_branch
        %120 = sbr.rel (%p118) target = $region16
      $region15: #{ske_mixf.7} parent=11 // pred_region
        _
      $region16: #{ske_mixf.7} parent=11 // pred_fallthru
        _
      // Predicated region
      $region17: #{ske_mixf.7} parent=11 // pred_check
        %p121 = pneg %p77
      $region18: #{ske_mixf.7} parent=11 // pred_check_branch
        %123 = sbr.rel (%p121) target = $region20
      $region19: #{ske_mixf.7} parent=11 // pred_region
        _
      $region20: #{ske_mixf.7} parent=11 // pred_fallthru
        _
    $region12: #{ske_mixf.7} parent=5 // pred_fallthru
      _
    %p124 = scmp.lt.s32.totalorder %s9, 2
    // Predicated region
    $region21: #{ske_mixf.7} parent=5 // pred_check
      %p125 = pneg %p124
    $region22: #{ske_mixf.7} parent=5 // pred_check_branch
      %127 = sbr.rel (%p125) target = $region24
    $region23: #{ske_mixf.7} parent=5 // pred_region
      // Predicated region
      $region25: #{ske_mixf.7} parent=23 // pred_check
        %p128 = pneg %p29
      $region26: #{ske_mixf.7} parent=23 // pred_check_branch
        %130 = sbr.rel (%p128) target = $region28
      $region27: #{ske_mixf.7} parent=23 // pred_region
        %s131 = smul.u32 32, %s9
        %p132 = scmp.lt.s32.totalorder %s131, 63
        %s133 = scalar_select %p132, %s131, 63
        %s134 = smul.addr %s133, 4
        %s135 = scalar_lea.vmem %s0, %s134
        %s136 = smul.u32 32, %s9
      $region28: #{ske_mixf.7} parent=23 // pred_fallthru
        _
    $region24: #{ske_mixf.7} parent=5 // pred_fallthru
      _
    %p137 = scmp.le.s32.totalorder 1, %s9
    %p138 = scmp.lt.s32.totalorder %s9, 3
    %p139 = pnand %p137, %p138
    %p140 = pneg %p139
    // Predicated region
    $region29: #{ske_mixf.7} parent=5 // pred_check
      _
    $region30: #{ske_mixf.7} parent=5 // pred_check_branch
      %142 = sbr.rel (%p139) target = $region32
    $region31: #{ske_mixf.7} parent=5 // pred_region
      %s143 = ssub.s32 %s9, 1
      %s144 = smul.u32 32, %s14
      %p145 = scmp.lt.s32.totalorder %s144, 63
      %s146 = scalar_select %p145, %s144, 63
      %s147 = smul.addr %s146, 4
      %s148 = scalar_lea.vmem %s0, %s147
      %p149 = pneg %p35
      %p150 = pneg %p32
      %p151 = pneg %p56
      %p152 = pneg %p53
      %p153 = pneg %p77
      %p154 = pneg %p74
      %p155 = pneg %p103
      %p156 = pneg %p100
      %s157 = smul.u32 32, %s14
      %p158 = scmp.lt.s32.totalorder %s157, 63
      %s159 = scalar_select %p158, %s157, 63
      %s160 = smul.addr %s159, 8
      %s161 = scalar_lea.vmem %s3, %s160
      %s162 = smul.u32 32, %s14
      %p163 = scmp.lt.s32.totalorder %s162, 63
      %s164 = scalar_select %p163, %s162, 63
      %s165 = smul.addr %s164, 4
      %s166 = scalar_lea.vmem %s0, %s165
      %s167 = smul.u32 32, %s14
      %s168 = smul.u32 32, %s14
      %p169 = scmp.lt.s32.totalorder %s168, 63
      %s170 = scalar_select %p169, %s168, 63
      %s171 = smul.addr %s170, 8
      %s172 = scalar_lea.vmem %s3, %s171
      %s173 = smul.u32 32, %s14
      %v175 = vld [vmem:[%s2] sm:$0x1]
      %v176 = vld [vmem:[%s2 + $0x1] sm:$0x1]
      %v177 = vld [vmem:[%s2 + $0x2] sm:$0x1]
      %v178 = vld [vmem:[%s166] sm:$0xf]
      %v179 = vld [vmem:[%s166 + $0x4] sm:$0xf]
      %v180 = vld [vmem:[%s166 + $0x8] sm:$0xf]
      %v181 = vld [vmem:[%s166 + $0xc] sm:$0xf]
      %v182 = vld [vmem:[%s166 + $0x10] sm:$0xf]
      %v183 = vld [vmem:[%s166 + $0x14] sm:$0xf]
      %v184 = vld [vmem:[%s166 + $0x18] sm:$0xf]
      %v185 = vld [vmem:[%s166 + $0x1c] sm:$0xf]
      %v186 = vld [vmem:[%s166 + $0x20] sm:$0xf]
      %v187 = vld [vmem:[%s166 + $0x24] sm:$0xf]
      %v188 = vld [vmem:[%s166 + $0x28] sm:$0xf]
      %v189 = vld [vmem:[%s166 + $0x2c] sm:$0xf]
      %v190 = vld [vmem:[%s166 + $0x30] sm:$0xf]
      %v191 = vld [vmem:[%s166 + $0x34] sm:$0xf]
      %v192 = vld [vmem:[%s166 + $0x38] sm:$0xf]
      %v193 = vld [vmem:[%s166 + $0x3c] sm:$0xf]
      %v194 = vld [vmem:[%s166 + $0x40] sm:$0xf]
      %v195 = vld [vmem:[%s166 + $0x44] sm:$0xf]
      %v196 = vld [vmem:[%s166 + $0x48] sm:$0xf]
      %v197 = vld [vmem:[%s166 + $0x4c] sm:$0xf]
      %v198 = vld [vmem:[%s166 + $0x50] sm:$0xf]
      %v199 = vld [vmem:[%s166 + $0x54] sm:$0xf]
      %v200 = vld [vmem:[%s166 + $0x58] sm:$0xf]
      %v201 = vld [vmem:[%s166 + $0x5c] sm:$0xf]
      %v202 = vld [vmem:[%s166 + $0x60] sm:$0xf]
      %v203 = vld [vmem:[%s166 + $0x64] sm:$0xf]
      %v204 = vld [vmem:[%s166 + $0x68] sm:$0xf]
      %v205 = vld [vmem:[%s166 + $0x6c] sm:$0xf]
      %v206 = vld [vmem:[%s166 + $0x70] sm:$0xf]
      %v207 = vld [vmem:[%s166 + $0x74] sm:$0xf]
      %v208 = vld [vmem:[%s166 + $0x78] sm:$0xf]
      %v209 = vld [vmem:[%s166 + $0x7c] sm:$0xf]
      %v210 = vld [vmem:[%s1] sm:$0xf]
      %v211 = vld [vmem:[%s1 + $0x4] sm:$0xf]
      %v212 = vld [vmem:[%s1 + $0x8] sm:$0xf]
      %v213 = vld [vmem:[%s1 + $0xc] sm:$0xf]
      %v214 = vld [vmem:[%s1 + $0x10] sm:$0xf]
      %v247 = vunpack.c.l.b16 %v178
      %v248 = vunpack.c.l.b16 %v179
      %v249 = vunpack.c.l.b16 %v180
      %v250 = vunpack.c.l.b16 %v181
      %v251 = vunpack.c.l.b16 %v182
      %v252 = vunpack.c.l.b16 %v183
      %v253 = vunpack.c.l.b16 %v184
      %v254 = vunpack.c.l.b16 %v185
      %v255 = vunpack.c.l.b16 %v186
      %v256 = vunpack.c.l.b16 %v187
      %v257 = vunpack.c.l.b16 %v188
      %v258 = vunpack.c.l.b16 %v189
      %v259 = vunpack.c.l.b16 %v190
      %v260 = vunpack.c.l.b16 %v191
      %v261 = vunpack.c.l.b16 %v192
      %v262 = vunpack.c.l.b16 %v193
      %v263 = vunpack.c.l.b16 %v194
      %v264 = vunpack.c.l.b16 %v195
      %v265 = vunpack.c.l.b16 %v196
      %v266 = vunpack.c.l.b16 %v197
      %v267 = vunpack.c.l.b16 %v198
      %v268 = vunpack.c.l.b16 %v199
      %v269 = vunpack.c.l.b16 %v200
      %v270 = vunpack.c.l.b16 %v201
      %v271 = vunpack.c.l.b16 %v202
      %v272 = vunpack.c.l.b16 %v203
      %v273 = vunpack.c.l.b16 %v204
      %v274 = vunpack.c.l.b16 %v205
      %v275 = vunpack.c.l.b16 %v206
      %v276 = vunpack.c.l.b16 %v207
      %v277 = vunpack.c.l.b16 %v208
      %v278 = vunpack.c.l.b16 %v209
      %v279 = vpack.c.b16 %v248, %v247
      %v280 = vpack.c.b16 %v250, %v249
      %v281 = vpack.c.b16 %v252, %v251
      %v282 = vpack.c.b16 %v254, %v253
      %v283 = vpack.c.b16 %v256, %v255
      %v284 = vpack.c.b16 %v258, %v257
      %v285 = vpack.c.b16 %v260, %v259
      %v286 = vpack.c.b16 %v262, %v261
      %v287 = vpack.c.b16 %v264, %v263
      %v288 = vpack.c.b16 %v266, %v265
      %v289 = vpack.c.b16 %v268, %v267
      %v290 = vpack.c.b16 %v270, %v269
      %v291 = vpack.c.b16 %v272, %v271
      %v292 = vpack.c.b16 %v274, %v273
      %v293 = vpack.c.b16 %v276, %v275
      %v294 = vpack.c.b16 %v278, %v277
      %v300 = vunpack.c.l.b16 %v210
      %v301 = vunpack.c.l.b16 %v211
      %v302 = vunpack.c.l.b16 %v212
      %v303 = vunpack.c.l.b16 %v213
      %v304 = vunpack.c.l.b16 %v214
      %v305 = vpack.c.b16 %v301, %v300
      %v306 = vpack.c.b16 %v303, %v302
      %v307 = vpack.c.b16 %v304, %v304
      %vm310 = vcmask 326656
      %v312 = vsel %vm310, %v279, 0
      %v315 = vsel %vm310, %v280, 0
      %v318 = vsel %vm310, %v281, 0
      %v321 = vsel %vm310, %v282, 0
      %v324 = vsel %vm310, %v283, 0
      %v327 = vsel %vm310, %v284, 0
      %v330 = vsel %vm310, %v285, 0
      %v333 = vsel %vm310, %v286, 0
      %v336 = vsel %vm310, %v287, 0
      %v339 = vsel %vm310, %v288, 0
      %v342 = vsel %vm310, %v289, 0
      %v345 = vsel %vm310, %v290, 0
      %v348 = vsel %vm310, %v291, 0
      %v351 = vsel %vm310, %v292, 0
      %v354 = vsel %vm310, %v293, 0
      %v357 = vsel %vm310, %v294, 0
      %vm359 = vcmask 1043456
      %v361 = vsel %vm359, %v307, 0
      %363 = vmatprep.subr.bf16.mxu0 0
      %364 = vmatpush1.bf16.msra.mxu0 %v305
      %365 = vmatprep.subr.bf16.mxu0 0
      %366 = vmatpush1.bf16.msra.mxu0 %v306
      %367 = vmatprep.subr.bf16.mxu0 0
      %368 = vmatpush1.bf16.msra.mxu0 %v361
      %369 = vmatprep.subr.bf16.mxu0 0
      %370 = vmatpush1.bf16.msra.mxu0 0
      %371 = vmatprep.subr.bf16.mxu0 0
      %372 = vmatpush1.bf16.msra.mxu0 0
      %373 = vmatprep.subr.bf16.mxu0 0
      %374 = vmatpush1.bf16.msra.mxu0 0
      %375 = vmatprep.subr.bf16.mxu0 0
      %376 = vmatpush1.bf16.msra.mxu0 0
      %377 = vmatprep.subr.bf16.mxu0 0
      %378 = vmatpush1.bf16.msra.mxu0 0
      %379 = vmatprep.subr.bf16.mxu0 0
      %380 = vmatpush1.bf16.msra.mxu0 0
      %381 = vmatprep.subr.bf16.mxu0 0
      %382 = vmatpush1.bf16.msra.mxu0 0
      %383 = vmatprep.subr.bf16.mxu0 0
      %384 = vmatpush1.bf16.msra.mxu0 0
      %385 = vmatprep.subr.bf16.mxu0 0
      %386 = vmatpush1.bf16.msra.mxu0 0
      %387 = vmatprep.subr.bf16.mxu0 0
      %388 = vmatpush1.bf16.msra.mxu0 0
      %389 = vmatprep.subr.bf16.mxu0 0
      %390 = vmatpush1.bf16.msra.mxu0 0
      %391 = vmatprep.subr.bf16.mxu0 0
      %392 = vmatpush1.bf16.msra.mxu0 0
      %393 = vmatprep.subr.bf16.mxu0 0
      %394 = vmatpush1.bf16.msra.mxu0 0
      %395 = vmatprep.mubr.bf16.mxu0 0
      %396 = vmatmul.mubr.bf16.gmra.mrb[0].mxu0 %v312
      %v397 = vpop.f32.mrb[0].mxu0
      %v398 = vadd.f32 0.0, %v397
      %v399 = vpop.f32.mrb[0].mxu0
      %v400 = vpop.f32.mrb[0].mxu0
      %v401 = vadd.f32 0.0, %v400
      %v402 = vpop.f32.mrb[0].mxu0
      %403 = vmatprep.mubr.bf16.mxu0 0
      %404 = vmatmul.mubr.bf16.gmra.mrb[0].mxu0 %v315
      %v405 = vpop.f32.mrb[0].mxu0
      %v406 = vadd.f32 0.0, %v405
      %v407 = vpop.f32.mrb[0].mxu0
      %v408 = vpop.f32.mrb[0].mxu0
      %v409 = vadd.f32 0.0, %v408
      %v410 = vpop.f32.mrb[0].mxu0
      %411 = vmatprep.mubr.bf16.mxu0 0
      %412 = vmatmul.mubr.bf16.gmra.mrb[0].mxu0 %v318
      %v413 = vpop.f32.mrb[0].mxu0
      %v414 = vadd.f32 0.0, %v413
      %v415 = vpop.f32.mrb[0].mxu0
      %v416 = vpop.f32.mrb[0].mxu0
      %v417 = vadd.f32 0.0, %v416
      %v418 = vpop.f32.mrb[0].mxu0
      %419 = vmatprep.mubr.bf16.mxu0 0
      %420 = vmatmul.mubr.bf16.gmra.mrb[0].mxu0 %v321
      %v421 = vpop.f32.mrb[0].mxu0
      %v422 = vadd.f32 0.0, %v421
      %v423 = vpop.f32.mrb[0].mxu0
      %v424 = vpop.f32.mrb[0].mxu0
      %v425 = vadd.f32 0.0, %v424
      %v426 = vpop.f32.mrb[0].mxu0
      %427 = vmatprep.mubr.bf16.mxu0 0
      %428 = vmatmul.mubr.bf16.gmra.mrb[0].mxu0 %v324
      %v429 = vpop.f32.mrb[0].mxu0
      %v430 = vadd.f32 0.0, %v429
      %v431 = vpop.f32.mrb[0].mxu0
      %v432 = vpop.f32.mrb[0].mxu0
      %v433 = vadd.f32 0.0, %v432
      %v434 = vpop.f32.mrb[0].mxu0
      %435 = vmatprep.mubr.bf16.mxu0 0
      %436 = vmatmul.mubr.bf16.gmra.mrb[0].mxu0 %v327
      %v437 = vpop.f32.mrb[0].mxu0
      %v438 = vadd.f32 0.0, %v437
      %v439 = vpop.f32.mrb[0].mxu0
      %v440 = vpop.f32.mrb[0].mxu0
      %v441 = vadd.f32 0.0, %v440
      %v442 = vpop.f32.mrb[0].mxu0
      %443 = vmatprep.mubr.bf16.mxu0 0
      %444 = vmatmul.mubr.bf16.gmra.mrb[0].mxu0 %v330
      %v445 = vpop.f32.mrb[0].mxu0
      %v446 = vadd.f32 0.0, %v445
      %v447 = vpop.f32.mrb[0].mxu0
      %v448 = vpop.f32.mrb[0].mxu0
      %v449 = vadd.f32 0.0, %v448
      %v450 = vpop.f32.mrb[0].mxu0
      %451 = vmatprep.mubr.bf16.mxu0 0
      %452 = vmatmul.mubr.bf16.gmra.mrb[0].mxu0 %v333
      %v453 = vpop.f32.mrb[0].mxu0
      %v454 = vadd.f32 0.0, %v453
      %v455 = vpop.f32.mrb[0].mxu0
      %v456 = vpop.f32.mrb[0].mxu0
      %v457 = vadd.f32 0.0, %v456
      %v458 = vpop.f32.mrb[0].mxu0
      %459 = vmatprep.mubr.bf16.mxu0 0
      %460 = vmatmul.mubr.bf16.gmra.mrb[0].mxu0 %v336
      %v461 = vpop.f32.mrb[0].mxu0
      %v462 = vadd.f32 0.0, %v461
      %v463 = vpop.f32.mrb[0].mxu0
      %v464 = vpop.f32.mrb[0].mxu0
      %v465 = vadd.f32 0.0, %v464
      %v466 = vpop.f32.mrb[0].mxu0
      %467 = vmatprep.mubr.bf16.mxu0 0
      %468 = vmatmul.mubr.bf16.gmra.mrb[0].mxu0 %v339
      %v469 = vpop.f32.mrb[0].mxu0
      %v470 = vadd.f32 0.0, %v469
      %v471 = vpop.f32.mrb[0].mxu0
      %v472 = vpop.f32.mrb[0].mxu0
      %v473 = vadd.f32 0.0, %v472
      %v474 = vpop.f32.mrb[0].mxu0
      %475 = vmatprep.mubr.bf16.mxu0 0
      %476 = vmatmul.mubr.bf16.gmra.mrb[0].mxu0 %v342
      %v477 = vpop.f32.mrb[0].mxu0
      %v478 = vadd.f32 0.0, %v477
      %v479 = vpop.f32.mrb[0].mxu0
      %v480 = vpop.f32.mrb[0].mxu0
      %v481 = vadd.f32 0.0, %v480
      %v482 = vpop.f32.mrb[0].mxu0
      %483 = vmatprep.mubr.bf16.mxu0 0
      %484 = vmatmul.mubr.bf16.gmra.mrb[0].mxu0 %v345
      %v485 = vpop.f32.mrb[0].mxu0
      %v486 = vadd.f32 0.0, %v485
      %v487 = vpop.f32.mrb[0].mxu0
      %v488 = vpop.f32.mrb[0].mxu0
      %v489 = vadd.f32 0.0, %v488
      %v490 = vpop.f32.mrb[0].mxu0
      %491 = vmatprep.mubr.bf16.mxu0 0
      %492 = vmatmul.mubr.bf16.gmra.mrb[0].mxu0 %v348
      %v493 = vpop.f32.mrb[0].mxu0
      %v494 = vadd.f32 0.0, %v493
      %v495 = vpop.f32.mrb[0].mxu0
      %v496 = vpop.f32.mrb[0].mxu0
      %v497 = vadd.f32 0.0, %v496
      %v498 = vpop.f32.mrb[0].mxu0
      %499 = vmatprep.mubr.bf16.mxu0 0
      %500 = vmatmul.mubr.bf16.gmra.mrb[0].mxu0 %v351
      %v501 = vpop.f32.mrb[0].mxu0
      %v502 = vadd.f32 0.0, %v501
      %v503 = vpop.f32.mrb[0].mxu0
      %v504 = vpop.f32.mrb[0].mxu0
      %v505 = vadd.f32 0.0, %v504
      %v506 = vpop.f32.mrb[0].mxu0
      %507 = vmatprep.mubr.bf16.mxu0 0
      %508 = vmatmul.mubr.bf16.gmra.mrb[0].mxu0 %v354
      %v509 = vpop.f32.mrb[0].mxu0
      %v510 = vadd.f32 0.0, %v509
      %v511 = vpop.f32.mrb[0].mxu0
      %v512 = vpop.f32.mrb[0].mxu0
      %v513 = vadd.f32 0.0, %v512
      %v514 = vpop.f32.mrb[0].mxu0
      %515 = vmatprep.mubr.bf16.mxu0 0
      %516 = vmatmul.mubr.bf16.gmra.mrb[0].mxu0 %v357
      %v517 = vpop.f32.mrb[0].mxu0
      %v518 = vadd.f32 0.0, %v517
      %v519 = vpop.f32.mrb[0].mxu0
      %v520 = vpop.f32.mrb[0].mxu0
      %v521 = vadd.f32 0.0, %v520
      %v522 = vpop.f32.mrb[0].mxu0
      %523 = vdwg.mxu0
      %v524 = vlaneseq
      %v525 = vshrl.u32 %v524, 7
      %v526 = vsub.s32 0, %v525
      %v527 = vrot.slane %v175, %v526
      %v528 = vmul.f32 %v398, %v527
      %v529 = vmul.f32 %v401, %v527
      %v530 = vmul.f32 %v406, %v527
      %v531 = vmul.f32 %v409, %v527
      %v532 = vmul.f32 %v414, %v527
      %v533 = vmul.f32 %v417, %v527
      %v534 = vmul.f32 %v422, %v527
      %v535 = vmul.f32 %v425, %v527
      %v536 = vmul.f32 %v430, %v527
      %v537 = vmul.f32 %v433, %v527
      %v538 = vmul.f32 %v438, %v527
      %v539 = vmul.f32 %v441, %v527
      %v540 = vmul.f32 %v446, %v527
      %v541 = vmul.f32 %v449, %v527
      %v542 = vmul.f32 %v454, %v527
      %v543 = vmul.f32 %v457, %v527
      %v544 = vmul.f32 %v462, %v527
      %v545 = vmul.f32 %v465, %v527
      %v546 = vmul.f32 %v470, %v527
      %v547 = vmul.f32 %v473, %v527
      %v548 = vmul.f32 %v478, %v527
      %v549 = vmul.f32 %v481, %v527
      %v550 = vmul.f32 %v486, %v527
      %v551 = vmul.f32 %v489, %v527
      %v552 = vmul.f32 %v494, %v527
      %v553 = vmul.f32 %v497, %v527
      %v554 = vmul.f32 %v502, %v527
      %v555 = vmul.f32 %v505, %v527
      %v556 = vmul.f32 %v510, %v527
      %v557 = vmul.f32 %v513, %v527
      %v558 = vmul.f32 %v518, %v527
      %v559 = vmul.f32 %v521, %v527
      %v560 = vlaneseq
      %v561 = vshrl.u32 %v560, 7
      %v562 = vsub.s32 0, %v561
      %v563 = vrot.slane %v176, %v562
      %v564 = vadd.f32 %v528, %v563
      %v565 = vadd.f32 %v529, %v563
      %v566 = vadd.f32 %v530, %v563
      %v567 = vadd.f32 %v531, %v563
      %v568 = vadd.f32 %v532, %v563
      %v569 = vadd.f32 %v533, %v563
      %v570 = vadd.f32 %v534, %v563
      %v571 = vadd.f32 %v535, %v563
      %v572 = vadd.f32 %v536, %v563
      %v573 = vadd.f32 %v537, %v563
      %v574 = vadd.f32 %v538, %v563
      %v575 = vadd.f32 %v539, %v563
      %v576 = vadd.f32 %v540, %v563
      %v577 = vadd.f32 %v541, %v563
      %v578 = vadd.f32 %v542, %v563
      %v579 = vadd.f32 %v543, %v563
      %v580 = vadd.f32 %v544, %v563
      %v581 = vadd.f32 %v545, %v563
      %v582 = vadd.f32 %v546, %v563
      %v583 = vadd.f32 %v547, %v563
      %v584 = vadd.f32 %v548, %v563
      %v585 = vadd.f32 %v549, %v563
      %v586 = vadd.f32 %v550, %v563
      %v587 = vadd.f32 %v551, %v563
      %v588 = vadd.f32 %v552, %v563
      %v589 = vadd.f32 %v553, %v563
      %v590 = vadd.f32 %v554, %v563
      %v591 = vadd.f32 %v555, %v563
      %v592 = vadd.f32 %v556, %v563
      %v593 = vadd.f32 %v557, %v563
      %v594 = vadd.f32 %v558, %v563
      %v595 = vadd.f32 %v559, %v563
      %vm596 = vcmp.gt.f32.partialorder %v177, 0.0
      %v597 = vmax.f32 %v564, 0.0
      %v598 = vmax.f32 %v565, 0.0
      %v599 = vmax.f32 %v566, 0.0
      %v600 = vmax.f32 %v567, 0.0
      %v601 = vmax.f32 %v568, 0.0
      %v602 = vmax.f32 %v569, 0.0
      %v603 = vmax.f32 %v570, 0.0
      %v604 = vmax.f32 %v571, 0.0
      %v605 = vmax.f32 %v572, 0.0
      %v606 = vmax.f32 %v573, 0.0
      %v607 = vmax.f32 %v574, 0.0
      %v608 = vmax.f32 %v575, 0.0
      %v609 = vmax.f32 %v576, 0.0
      %v610 = vmax.f32 %v577, 0.0
      %v611 = vmax.f32 %v578, 0.0
      %v612 = vmax.f32 %v579, 0.0
      %v613 = vmax.f32 %v580, 0.0
      %v614 = vmax.f32 %v581, 0.0
      %v615 = vmax.f32 %v582, 0.0
      %v616 = vmax.f32 %v583, 0.0
      %v617 = vmax.f32 %v584, 0.0
      %v618 = vmax.f32 %v585, 0.0
      %v619 = vmax.f32 %v586, 0.0
      %v620 = vmax.f32 %v587, 0.0
      %v621 = vmax.f32 %v588, 0.0
      %v622 = vmax.f32 %v589, 0.0
      %v623 = vmax.f32 %v590, 0.0
      %v624 = vmax.f32 %v591, 0.0
      %v625 = vmax.f32 %v592, 0.0
      %v626 = vmax.f32 %v593, 0.0
      %v627 = vmax.f32 %v594, 0.0
      %v628 = vmax.f32 %v595, 0.0
      %v629 = vsel %vm596, 1, 0
      %v630 = vlaneseq
      %v631 = vshrl.u32 %v630, 7
      %v632 = vsub.s32 0, %v631
      %v633 = vrot.slane %v629, %v632
      %vm634 = vcmp.eq.s32.totalorder %v633, 1
      %v635 = vsel %vm634, %v597, %v564
      %v636 = vsel %vm634, %v598, %v565
      %v637 = vsel %vm634, %v599, %v566
      %v638 = vsel %vm634, %v600, %v567
      %v639 = vsel %vm634, %v601, %v568
      %v640 = vsel %vm634, %v602, %v569
      %v641 = vsel %vm634, %v603, %v570
      %v642 = vsel %vm634, %v604, %v571
      %v643 = vsel %vm634, %v605, %v572
      %v644 = vsel %vm634, %v606, %v573
      %v645 = vsel %vm634, %v607, %v574
      %v646 = vsel %vm634, %v608, %v575
      %v647 = vsel %vm634, %v609, %v576
      %v648 = vsel %vm634, %v610, %v577
      %v649 = vsel %vm634, %v611, %v578
      %v650 = vsel %vm634, %v612, %v579
      %v651 = vsel %vm634, %v613, %v580
      %v652 = vsel %vm634, %v614, %v581
      %v653 = vsel %vm634, %v615, %v582
      %v654 = vsel %vm634, %v616, %v583
      %v655 = vsel %vm634, %v617, %v584
      %v656 = vsel %vm634, %v618, %v585
      %v657 = vsel %vm634, %v619, %v586
      %v658 = vsel %vm634, %v620, %v587
      %v659 = vsel %vm634, %v621, %v588
      %v660 = vsel %vm634, %v622, %v589
      %v661 = vsel %vm634, %v623, %v590
      %v662 = vsel %vm634, %v624, %v591
      %v663 = vsel %vm634, %v625, %v592
      %v664 = vsel %vm634, %v626, %v593
      %v665 = vsel %vm634, %v627, %v594
      %v666 = vsel %vm634, %v628, %v595
      %667 = vst [vmem:[%s172] sm:$0xff] %v635
      %668 = vst [vmem:[%s172 + $0x8] sm:$0xff] %v636
      %669 = vst [vmem:[%s172 + $0x10] sm:$0xff] %v637
      %670 = vst [vmem:[%s172 + $0x18] sm:$0xff] %v638
      %671 = vst [vmem:[%s172 + $0x20] sm:$0xff] %v639
      %672 = vst [vmem:[%s172 + $0x28] sm:$0xff] %v640
      %673 = vst [vmem:[%s172 + $0x30] sm:$0xff] %v641
      %674 = vst [vmem:[%s172 + $0x38] sm:$0xff] %v642
      %675 = vst [vmem:[%s172 + $0x40] sm:$0xff] %v643
      %676 = vst [vmem:[%s172 + $0x48] sm:$0xff] %v644
      %677 = vst [vmem:[%s172 + $0x50] sm:$0xff] %v645
      %678 = vst [vmem:[%s172 + $0x58] sm:$0xff] %v646
      %679 = vst [vmem:[%s172 + $0x60] sm:$0xff] %v647
      %680 = vst [vmem:[%s172 + $0x68] sm:$0xff] %v648
      %681 = vst [vmem:[%s172 + $0x70] sm:$0xff] %v649
      %682 = vst [vmem:[%s172 + $0x78] sm:$0xff] %v650
      %683 = vst [vmem:[%s172 + $0x80] sm:$0xff] %v651
      %684 = vst [vmem:[%s172 + $0x88] sm:$0xff] %v652
      %685 = vst [vmem:[%s172 + $0x90] sm:$0xff] %v653
      %686 = vst [vmem:[%s172 + $0x98] sm:$0xff] %v654
      %687 = vst [vmem:[%s172 + $0xa0] sm:$0xff] %v655
      %688 = vst [vmem:[%s172 + $0xa8] sm:$0xff] %v656
      %689 = vst [vmem:[%s172 + $0xb0] sm:$0xff] %v657
      %690 = vst [vmem:[%s172 + $0xb8] sm:$0xff] %v658
      %691 = vst [vmem:[%s172 + $0xc0] sm:$0xff] %v659
      %692 = vst [vmem:[%s172 + $0xc8] sm:$0xff] %v660
      %693 = vst [vmem:[%s172 + $0xd0] sm:$0xff] %v661
      %694 = vst [vmem:[%s172 + $0xd8] sm:$0xff] %v662
      %695 = vst [vmem:[%s172 + $0xe0] sm:$0xff] %v663
      %696 = vst [vmem:[%s172 + $0xe8] sm:$0xff] %v664
      %697 = vst [vmem:[%s172 + $0xf0] sm:$0xff] %v665
      %698 = vst [vmem:[%s172 + $0xf8] sm:$0xff] %v666
      %s699 = smul.u32 32, %s14
      %p700 = scmp.lt.s32.totalorder %s699, 63
      %s701 = scalar_select %p700, %s699, 63
      %s702 = smul.addr %s701, 8
      %s703 = scalar_lea.vmem %s3, %s702
      // Predicated region
      $region33: #{ske_mixf.7} parent=31 // pred_check
        %p704 = pneg %p100
      $region34: #{ske_mixf.7} parent=31 // pred_check_branch
        %706 = sbr.rel (%p704) target = $region36
      $region35: #{ske_mixf.7} parent=31 // pred_region
        %s707 = smul.u32 32, %s14
      $region36: #{ske_mixf.7} parent=31 // pred_fallthru
        _
    $region32: #{ske_mixf.7} parent=5 // pred_fallthru
      _
    %p708 = scmp.le.s32.totalorder 2, %s9
    // Predicated region
    $region37: #{ske_mixf.7} parent=5 // pred_check
      %p709 = pneg %p708
    $region38: #{ske_mixf.7} parent=5 // pred_check_branch
      %711 = sbr.rel (%p709) target = $region40
    $region39: #{ske_mixf.7} parent=5 // pred_region
      %s712 = ssub.s32 %s9, 2
      // Predicated region
      $region41: #{ske_mixf.7} parent=39 // pred_check
        %p713 = pneg %p106
      $region42: #{ske_mixf.7} parent=39 // pred_check_branch
        %715 = sbr.rel (%p713) target = $region44
      $region43: #{ske_mixf.7} parent=39 // pred_region
        %s716 = smul.u32 32, %s15
        %p717 = scmp.lt.s32.totalorder %s716, 63
        %s718 = scalar_select %p717, %s716, 63
        %s719 = smul.addr %s718, 8
        %s720 = scalar_lea.vmem %s3, %s719
      $region44: #{ske_mixf.7} parent=39 // pred_fallthru
        _
    $region40: #{ske_mixf.7} parent=5 // pred_fallthru
      _
  $region6: #{ske_mixf.7} parent=0 // loop_footer
    %s13 = sadd.s32 1, %s9
  $region7: #{ske_mixf.7} parent=0 // loop_footer_branch
    %8 = sbr.rel target = $region3
  $region8: #{ske_mixf.7} parent=0 // loop_exit
    _

// kernel: ske_mixf.9
$region0: #{ske_mixf.9}
  #allocation0 [shape = 'u32[]', space=smem, size = 0x4, offset = 0x4, fixed_abs, tag = 'smem constant byte address 0x4 - core index']
  #allocation1 [shape = 'u32[144,128]{1,0:T(1,128)}', space=vmem, size = 0x12000, scoped, tag = 'internal scratch']
  %s0 = inlined_call_operand.vmem [shape: bf16[2,8,8], index: 0, kind: input, shape index: {}]
  %s1 = inlined_call_operand.vmem [shape: bf16[2,8,200], index: 1, kind: input, shape index: {}]
  %s2 = inlined_call_operand.vmem [shape: f32[2,8,200], index: 2, kind: output, shape index: {}]
  %s3 = sld [smem:[#allocation0]]
  $region41: #{ske_mixf.9} parent=0
    _
  %s5 = ssub.s32 1, %s3
  %s6 = scalar_select 0, %s5, %s3
  loop: start=0, step=1, limit=4
  $region2: #{ske_mixf.9} parent=0 // loop_pre_header
    _
  $region3: #{ske_mixf.9} parent=0 // loop_header
    %s8 = sphi 0, %s12
    %p9 = scmp.ge.s32.totalorder %s8, 4
    %s18 = sphi 0, %s20
    %s21 = sphi 0, %s18
    %s22 = sphi 0, %s21
    %s38 = sphi 0, %s22
    %s44 = sphi 0, %s46
    %s47 = sphi 0, %s44
    %s48 = sphi 0, %s47
    %s64 = sphi 0, %s48
    %s70 = sphi 0, %s72
    %s73 = sphi 0, %s70
    %s74 = sphi 0, %s73
    %s90 = sphi 0, %s74
  $region4: #{ske_mixf.9} parent=0 // loop_header_branch
    %11 = sbr.rel (%p9) target = $region8
  $region5: #{ske_mixf.9} parent=0 // loop_body
    %s13 = ssub.s32 %s8, 1
    %s14 = ssub.s32 %s8, 2
    %s15 = sadd.s32 %s8, 1
    %s16 = ssub.s32 %s8, %s15
    %p17 = scmp.eq.s32.totalorder %s16, 0
    %s19 = sadd.s32 %s18, 1
    %s20 = scalar_select %p17, %s18, %s19
    %p23 = pneg %p17
    %p24 = scmp.eq.s32.totalorder %s8, 1
    %p25 = por %p23, %p24
    %p26 = scmp.ne.s32.totalorder %s18, %s21
    %p27 = scmp.eq.s32.totalorder %s8, 0
    %p28 = por %p26, %p27
    %p29 = scmp.ne.s32.totalorder %s18, %s21
    %p30 = scmp.eq.s32.totalorder %s13, 1
    %p31 = por %p29, %p30
    %p32 = scmp.ne.s32.totalorder %s21, %s22
    %p33 = scmp.eq.s32.totalorder %s13, 0
    %p34 = por %p32, %p33
    %p35 = scmp.ne.s32.totalorder %s21, %s22
    %p36 = scmp.eq.s32.totalorder %s14, 1
    %p37 = por %p35, %p36
    %p39 = scmp.ne.s32.totalorder %s22, %s38
    %p40 = scmp.eq.s32.totalorder %s14, 0
    %p41 = por %p39, %p40
    %s42 = ssub.s32 %s8, %s15
    %p43 = scmp.eq.s32.totalorder %s42, 0
    %s45 = sadd.s32 %s44, 1
    %s46 = scalar_select %p43, %s44, %s45
    %p49 = pneg %p43
    %p50 = scmp.eq.s32.totalorder %s8, 1
    %p51 = por %p49, %p50
    %p52 = scmp.ne.s32.totalorder %s44, %s47
    %p53 = scmp.eq.s32.totalorder %s8, 0
    %p54 = por %p52, %p53
    %p55 = scmp.ne.s32.totalorder %s44, %s47
    %p56 = scmp.eq.s32.totalorder %s13, 1
    %p57 = por %p55, %p56
    %p58 = scmp.ne.s32.totalorder %s47, %s48
    %p59 = scmp.eq.s32.totalorder %s13, 0
    %p60 = por %p58, %p59
    %p61 = scmp.ne.s32.totalorder %s47, %s48
    %p62 = scmp.eq.s32.totalorder %s14, 1
    %p63 = por %p61, %p62
    %p65 = scmp.ne.s32.totalorder %s48, %s64
    %p66 = scmp.eq.s32.totalorder %s14, 0
    %p67 = por %p65, %p66
    %s68 = ssub.s32 %s8, %s15
    %p69 = scmp.eq.s32.totalorder %s68, 0
    %s71 = sadd.s32 %s70, 1
    %s72 = scalar_select %p69, %s70, %s71
    %p75 = pneg %p69
    %p76 = scmp.eq.s32.totalorder %s8, 1
    %p77 = por %p75, %p76
    %p78 = scmp.ne.s32.totalorder %s70, %s73
    %p79 = scmp.eq.s32.totalorder %s8, 0
    %p80 = por %p78, %p79
    %p81 = scmp.ne.s32.totalorder %s70, %s73
    %p82 = scmp.eq.s32.totalorder %s13, 1
    %p83 = por %p81, %p82
    %p84 = scmp.ne.s32.totalorder %s73, %s74
    %p85 = scmp.eq.s32.totalorder %s13, 0
    %p86 = por %p84, %p85
    %p87 = scmp.ne.s32.totalorder %s73, %s74
    %p88 = scmp.eq.s32.totalorder %s14, 1
    %p89 = por %p87, %p88
    %p91 = scmp.ne.s32.totalorder %s74, %s90
    %p92 = scmp.eq.s32.totalorder %s14, 0
    %p93 = por %p91, %p92
    %p94 = scmp.le.s32.totalorder 1, %s8
    %p95 = scmp.lt.s32.totalorder %s8, 3
    %p96 = pnand %p94, %p95
    %p97 = pneg %p96
    // Predicated region
    $region9: #{ske_mixf.9} parent=5 // pred_check
      _
    $region10: #{ske_mixf.9} parent=5 // pred_check_branch
      %99 = sbr.rel (%p96) target = $region12
    $region11: #{ske_mixf.9} parent=5 // pred_region
      %s100 = ssub.s32 %s8, 1
    $region12: #{ske_mixf.9} parent=5 // pred_fallthru
      _
    %p101 = scmp.lt.s32.totalorder %s8, 2
    // Predicated region
    $region13: #{ske_mixf.9} parent=5 // pred_check
      %p102 = pneg %p101
    $region14: #{ske_mixf.9} parent=5 // pred_check_branch
      %104 = sbr.rel (%p102) target = $region16
    $region15: #{ske_mixf.9} parent=5 // pred_region
      // Predicated region
      $region17: #{ske_mixf.9} parent=15 // pred_check
        %p105 = pneg %p28
      $region18: #{ske_mixf.9} parent=15 // pred_check_branch
        %107 = sbr.rel (%p105) target = $region20
      $region19: #{ske_mixf.9} parent=15 // pred_region
        %p108 = scmp.lt.s32.totalorder %s8, 1
        %s109 = scalar_select %p108, %s8, 1
        %s110 = smul.addr %s109, 4
        %s111 = scalar_lea.vmem %s0, %s110
      $region20: #{ske_mixf.9} parent=15 // pred_fallthru
        _
      // Predicated region
      $region21: #{ske_mixf.9} parent=15 // pred_check
        %p112 = pneg %p54
      $region22: #{ske_mixf.9} parent=15 // pred_check_branch
        %114 = sbr.rel (%p112) target = $region24
      $region23: #{ske_mixf.9} parent=15 // pred_region
        %p115 = scmp.lt.s32.totalorder %s8, 1
        %s116 = scalar_select %p115, %s8, 1
        %s117 = smul.addr %s116, 2
        %s118 = smul.addr %s117, 4
        %s119 = scalar_lea.vmem %s1, %s118
      $region24: #{ske_mixf.9} parent=15 // pred_fallthru
        _
    $region16: #{ske_mixf.9} parent=5 // pred_fallthru
      _
    %p120 = scmp.le.s32.totalorder 1, %s8
    %p121 = scmp.lt.s32.totalorder %s8, 3
    %p122 = pnand %p120, %p121
    %p123 = pneg %p122
    // Predicated region
    $region25: #{ske_mixf.9} parent=5 // pred_check
      _
    $region26: #{ske_mixf.9} parent=5 // pred_check_branch
      %125 = sbr.rel (%p122) target = $region28
    $region27: #{ske_mixf.9} parent=5 // pred_region
      %s126 = ssub.s32 %s8, 1
      %p127 = scmp.lt.s32.totalorder %s13, 1
      %s128 = scalar_select %p127, %s13, 1
      %s129 = smul.addr %s128, 4
      %s130 = scalar_lea.vmem %s0, %s129
      %p131 = pneg %p34
      %p132 = pneg %p31
      %p133 = scmp.lt.s32.totalorder %s13, 1
      %s134 = scalar_select %p133, %s13, 1
      %s135 = smul.addr %s134, 2
      %s136 = smul.addr %s135, 4
      %s137 = scalar_lea.vmem %s1, %s136
      %p138 = pneg %p60
      %p139 = pneg %p57
      %p140 = pneg %p86
      %p141 = pneg %p83
      %p142 = scmp.lt.s32.totalorder %s13, 1
      %s143 = scalar_select %p142, %s13, 1
      %s144 = smul.addr %s143, 2
      %s145 = smul.addr %s144, 8
      %s146 = scalar_lea.vmem %s2, %s145
      %p147 = scmp.lt.s32.totalorder %s13, 1
      %s148 = scalar_select %p147, %s13, 1
      %s149 = smul.addr %s148, 4
      %s150 = scalar_lea.vmem %s0, %s149
      %p151 = scmp.lt.s32.totalorder %s13, 1
      %s152 = scalar_select %p151, %s13, 1
      %s153 = smul.addr %s152, 2
      %s154 = smul.addr %s153, 4
      %s155 = scalar_lea.vmem %s1, %s154
      %p156 = scmp.lt.s32.totalorder %s13, 1
      %s157 = scalar_select %p156, %s13, 1
      %s158 = smul.addr %s157, 2
      %s159 = smul.addr %s158, 8
      %s160 = scalar_lea.vmem %s2, %s159
      %v162 = vld [vmem:[%s150] sm:$0xf]
      %v163 = vld [vmem:[%s155] sm:$0xff]
      %v165 = vunpack.c.l.b16 %v163
      %v166 = vunpack.c.h.b16 %v163
      %v167 = vpack.c.b16 %v165, %v165
      %v168 = vpack.c.b16 %v166, %v166
      %vm169 = vcmask 64512
      %v171 = vsel %vm169, %v162, 0
      %vm173 = vcmask 1043456
      %v175 = vsel %vm173, %v167, 0
      %v178 = vsel %vm173, %v168, 0
      %180 = vmatprep.subr.bf16.mxu0 %v178
      %181 = vmatpush1.bf16.msra.mxu0 %v175
      %182 = vmatprep.subr.bf16.mxu0 0
      %183 = vmatpush1.bf16.msra.mxu0 0
      %184 = vmatprep.subr.bf16.mxu0 0
      %185 = vmatpush1.bf16.msra.mxu0 0
      %186 = vmatprep.subr.bf16.mxu0 0
      %187 = vmatpush1.bf16.msra.mxu0 0
      %188 = vmatprep.subr.bf16.mxu0 0
      %189 = vmatpush1.bf16.msra.mxu0 0
      %190 = vmatprep.subr.bf16.mxu0 0
      %191 = vmatpush1.bf16.msra.mxu0 0
      %192 = vmatprep.subr.bf16.mxu0 0
      %193 = vmatpush1.bf16.msra.mxu0 0
      %194 = vmatprep.subr.bf16.mxu0 0
      %195 = vmatpush1.bf16.msra.mxu0 0
      %196 = vmatprep.subr.bf16.mxu0 0
      %197 = vmatpush1.bf16.msra.mxu0 0
      %198 = vmatprep.subr.bf16.mxu0 0
      %199 = vmatpush1.bf16.msra.mxu0 0
      %200 = vmatprep.subr.bf16.mxu0 0
      %201 = vmatpush1.bf16.msra.mxu0 0
      %202 = vmatprep.subr.bf16.mxu0 0
      %203 = vmatpush1.bf16.msra.mxu0 0
      %204 = vmatprep.subr.bf16.mxu0 0
      %205 = vmatpush1.bf16.msra.mxu0 0
      %206 = vmatprep.subr.bf16.mxu0 0
      %207 = vmatpush1.bf16.msra.mxu0 0
      %208 = vmatprep.subr.bf16.mxu0 0
      %209 = vmatpush1.bf16.msra.mxu0 0
      %210 = vmatprep.subr.bf16.mxu0 0
      %211 = vmatpush1.bf16.msra.mxu0 0
      %212 = vmatprep.mubr.bf16.mxu0 0
      %213 = vmatmul.mubr.bf16.gmra.mrb[0].mxu0 %v171
      %v214 = vpop.f32.mrb[0].mxu0
      %v215 = vadd.f32 0.0, %v214
      %v216 = vpop.f32.mrb[0].mxu0
      %v217 = vadd.f32 0.0, %v216
      %v218 = vpop.f32.mrb[0].mxu0
      %v219 = vpop.f32.mrb[0].mxu0
      %220 = vdwg.mxu0
      %221 = vst [vmem:[%s160] sm:$0xff] %v215
      %vm222 = vcmask 588800
      %223 = vst.msk [vmem:[%s160 + $0x8] sm:$0xff] %vm222, %v217
      %p224 = scmp.lt.s32.totalorder %s13, 1
      %s225 = scalar_select %p224, %s13, 1
      %s226 = smul.addr %s225, 2
      %s227 = smul.addr %s226, 8
      %s228 = scalar_lea.vmem %s2, %s227
      // Predicated region
      $region29: #{ske_mixf.9} parent=27 // pred_check
        %p229 = pneg %p83
      $region30: #{ske_mixf.9} parent=27 // pred_check_branch
        %231 = sbr.rel (%p229) target = $region32
      $region31: #{ske_mixf.9} parent=27 // pred_region
        _
      $region32: #{ske_mixf.9} parent=27 // pred_fallthru
        _
    $region28: #{ske_mixf.9} parent=5 // pred_fallthru
      _
    %p232 = scmp.le.s32.totalorder 2, %s8
    // Predicated region
    $region33: #{ske_mixf.9} parent=5 // pred_check
      %p233 = pneg %p232
    $region34: #{ske_mixf.9} parent=5 // pred_check_branch
      %235 = sbr.rel (%p233) target = $region36
    $region35: #{ske_mixf.9} parent=5 // pred_region
      %s236 = ssub.s32 %s8, 2
      // Predicated region
      $region37: #{ske_mixf.9} parent=35 // pred_check
        %p237 = pneg %p89
      $region38: #{ske_mixf.9} parent=35 // pred_check_branch
        %239 = sbr.rel (%p237) target = $region40
      $region39: #{ske_mixf.9} parent=35 // pred_region
        %p240 = scmp.lt.s32.totalorder %s14, 1
        %s241 = scalar_select %p240, %s14, 1
        %s242 = smul.addr %s241, 2
        %s243 = smul.addr %s242, 8
        %s244 = scalar_lea.vmem %s2, %s243
      $region40: #{ske_mixf.9} parent=35 // pred_fallthru
        _
    $region36: #{ske_mixf.9} parent=5 // pred_fallthru
      _
  $region6: #{ske_mixf.9} parent=0 // loop_footer
    %s12 = sadd.s32 1, %s8
  $region7: #{ske_mixf.9} parent=0 // loop_footer_branch
    %7 = sbr.rel target = $region3
  $region8: #{ske_mixf.9} parent=0 // loop_exit
    _

// kernel: ske_mixf.8
$region0: #{ske_mixf.8}
  #allocation0 [shape = 'u32[]', space=smem, size = 0x4, offset = 0x4, fixed_abs, tag = 'smem constant byte address 0x4 - core index']
  #allocation1 [shape = 'u32[144,128]{1,0:T(1,128)}', space=vmem, size = 0x12000, scoped, tag = 'internal scratch']
  %s0 = inlined_call_operand.vmem [shape: bf16[512,80], index: 0, kind: input, shape index: {}]
  %s1 = inlined_call_operand.vmem [shape: bf16[80,16], index: 1, kind: input, shape index: {}]
  %s2 = inlined_call_operand.vmem [shape: f32[3,16], index: 2, kind: input, shape index: {}]
  %s3 = inlined_call_operand.vmem [shape: f32[512,16], index: 3, kind: output, shape index: {}]
  %s4 = sld [smem:[#allocation0]]
  $region45: #{ske_mixf.8} parent=0
    _
  %s6 = ssub.s32 1, %s4
  %s7 = scalar_select 0, %s6, %s4
  loop: start=0, step=1, limit=4
  $region2: #{ske_mixf.8} parent=0 // loop_pre_header
    _
  $region3: #{ske_mixf.8} parent=0 // loop_header
    %s9 = sphi 0, %s13
    %p10 = scmp.ge.s32.totalorder %s9, 4
    %s19 = sphi 0, %s21
    %s22 = sphi 0, %s19
    %s23 = sphi 0, %s22
    %s39 = sphi 0, %s23
    %s43 = sphi 0, %s43
    %s45 = sphi 0, %s43
    %s46 = sphi 0, %s45
    %s60 = sphi 0, %s46
    %s64 = sphi 0, %s64
    %s66 = sphi 0, %s64
    %s67 = sphi 0, %s66
    %s81 = sphi 0, %s67
    %s87 = sphi 0, %s89
    %s90 = sphi 0, %s87
    %s91 = sphi 0, %s90
    %s107 = sphi 0, %s91
  $region4: #{ske_mixf.8} parent=0 // loop_header_branch
    %12 = sbr.rel (%p10) target = $region8
  $region5: #{ske_mixf.8} parent=0 // loop_body
    %s14 = ssub.s32 %s9, 1
    %s15 = ssub.s32 %s9, 2
    %s16 = sadd.s32 %s9, 1
    %s17 = ssub.s32 %s9, %s16
    %p18 = scmp.eq.s32.totalorder %s17, 0
    %s20 = sadd.s32 %s19, 1
    %s21 = scalar_select %p18, %s19, %s20
    %p24 = pneg %p18
    %p25 = scmp.eq.s32.totalorder %s9, 1
    %p26 = por %p24, %p25
    %p27 = scmp.ne.s32.totalorder %s19, %s22
    %p28 = scmp.eq.s32.totalorder %s9, 0
    %p29 = por %p27, %p28
    %p30 = scmp.ne.s32.totalorder %s19, %s22
    %p31 = scmp.eq.s32.totalorder %s14, 1
    %p32 = por %p30, %p31
    %p33 = scmp.ne.s32.totalorder %s22, %s23
    %p34 = scmp.eq.s32.totalorder %s14, 0
    %p35 = por %p33, %p34
    %p36 = scmp.ne.s32.totalorder %s22, %s23
    %p37 = scmp.eq.s32.totalorder %s15, 1
    %p38 = por %p36, %p37
    %p40 = scmp.ne.s32.totalorder %s23, %s39
    %p41 = scmp.eq.s32.totalorder %s15, 0
    %p42 = por %p40, %p41
    %s44 = sadd.s32 %s43, 1
    %p47 = scmp.eq.s32.totalorder %s9, 1
    %p48 = scmp.ne.s32.totalorder %s43, %s45
    %p49 = scmp.eq.s32.totalorder %s9, 0
    %p50 = por %p48, %p49
    %p51 = scmp.ne.s32.totalorder %s43, %s45
    %p52 = scmp.eq.s32.totalorder %s14, 1
    %p53 = por %p51, %p52
    %p54 = scmp.ne.s32.totalorder %s45, %s46
    %p55 = scmp.eq.s32.totalorder %s14, 0
    %p56 = por %p54, %p55
    %p57 = scmp.ne.s32.totalorder %s45, %s46
    %p58 = scmp.eq.s32.totalorder %s15, 1
    %p59 = por %p57, %p58
    %p61 = scmp.ne.s32.totalorder %s46, %s60
    %p62 = scmp.eq.s32.totalorder %s15, 0
    %p63 = por %p61, %p62
    %s65 = sadd.s32 %s64, 1
    %p68 = scmp.eq.s32.totalorder %s9, 1
    %p69 = scmp.ne.s32.totalorder %s64, %s66
    %p70 = scmp.eq.s32.totalorder %s9, 0
    %p71 = por %p69, %p70
    %p72 = scmp.ne.s32.totalorder %s64, %s66
    %p73 = scmp.eq.s32.totalorder %s14, 1
    %p74 = por %p72, %p73
    %p75 = scmp.ne.s32.totalorder %s66, %s67
    %p76 = scmp.eq.s32.totalorder %s14, 0
    %p77 = por %p75, %p76
    %p78 = scmp.ne.s32.totalorder %s66, %s67
    %p79 = scmp.eq.s32.totalorder %s15, 1
    %p80 = por %p78, %p79
    %p82 = scmp.ne.s32.totalorder %s67, %s81
    %p83 = scmp.eq.s32.totalorder %s15, 0
    %p84 = por %p82, %p83
    %s85 = ssub.s32 %s9, %s16
    %p86 = scmp.eq.s32.totalorder %s85, 0
    %s88 = sadd.s32 %s87, 1
    %s89 = scalar_select %p86, %s87, %s88
    %p92 = pneg %p86
    %p93 = scmp.eq.s32.totalorder %s9, 1
    %p94 = por %p92, %p93
    %p95 = scmp.ne.s32.totalorder %s87, %s90
    %p96 = scmp.eq.s32.totalorder %s9, 0
    %p97 = por %p95, %p96
    %p98 = scmp.ne.s32.totalorder %s87, %s90
    %p99 = scmp.eq.s32.totalorder %s14, 1
    %p100 = por %p98, %p99
    %p101 = scmp.ne.s32.totalorder %s90, %s91
    %p102 = scmp.eq.s32.totalorder %s14, 0
    %p103 = por %p101, %p102
    %p104 = scmp.ne.s32.totalorder %s90, %s91
    %p105 = scmp.eq.s32.totalorder %s15, 1
    %p106 = por %p104, %p105
    %p108 = scmp.ne.s32.totalorder %s91, %s107
    %p109 = scmp.eq.s32.totalorder %s15, 0
    %p110 = por %p108, %p109
    %p111 = scmp.le.s32.totalorder 1, %s9
    %p112 = scmp.lt.s32.totalorder %s9, 3
    %p113 = pnand %p111, %p112
    %p114 = pneg %p113
    // Predicated region
    $region9: #{ske_mixf.8} parent=5 // pred_check
      _
    $region10: #{ske_mixf.8} parent=5 // pred_check_branch
      %116 = sbr.rel (%p113) target = $region12
    $region11: #{ske_mixf.8} parent=5 // pred_region
      %s117 = ssub.s32 %s9, 1
      // Predicated region
      $region13: #{ske_mixf.8} parent=11 // pred_check
        %p118 = pneg %p56
      $region14: #{ske_mixf.8} parent=11 // pred_check_branch
        %120 = sbr.rel (%p118) target = $region16
      $region15: #{ske_mixf.8} parent=11 // pred_region
        _
      $region16: #{ske_mixf.8} parent=11 // pred_fallthru
        _
      // Predicated region
      $region17: #{ske_mixf.8} parent=11 // pred_check
        %p121 = pneg %p77
      $region18: #{ske_mixf.8} parent=11 // pred_check_branch
        %123 = sbr.rel (%p121) target = $region20
      $region19: #{ske_mixf.8} parent=11 // pred_region
        _
      $region20: #{ske_mixf.8} parent=11 // pred_fallthru
        _
    $region12: #{ske_mixf.8} parent=5 // pred_fallthru
      _
    %p124 = scmp.lt.s32.totalorder %s9, 2
    // Predicated region
    $region21: #{ske_mixf.8} parent=5 // pred_check
      %p125 = pneg %p124
    $region22: #{ske_mixf.8} parent=5 // pred_check_branch
      %127 = sbr.rel (%p125) target = $region24
    $region23: #{ske_mixf.8} parent=5 // pred_region
      // Predicated region
      $region25: #{ske_mixf.8} parent=23 // pred_check
        %p128 = pneg %p29
      $region26: #{ske_mixf.8} parent=23 // pred_check_branch
        %130 = sbr.rel (%p128) target = $region28
      $region27: #{ske_mixf.8} parent=23 // pred_region
        %s131 = smul.u32 32, %s9
        %p132 = scmp.lt.s32.totalorder %s131, 63
        %s133 = scalar_select %p132, %s131, 63
        %s134 = smul.addr %s133, 4
        %s135 = scalar_lea.vmem %s0, %s134
        %s136 = smul.u32 32, %s9
      $region28: #{ske_mixf.8} parent=23 // pred_fallthru
        _
    $region24: #{ske_mixf.8} parent=5 // pred_fallthru
      _
    %p137 = scmp.le.s32.totalorder 1, %s9
    %p138 = scmp.lt.s32.totalorder %s9, 3
    %p139 = pnand %p137, %p138
    %p140 = pneg %p139
    // Predicated region
    $region29: #{ske_mixf.8} parent=5 // pred_check
      _
    $region30: #{ske_mixf.8} parent=5 // pred_check_branch
      %142 = sbr.rel (%p139) target = $region32
    $region31: #{ske_mixf.8} parent=5 // pred_region
      %s143 = ssub.s32 %s9, 1
      %s144 = smul.u32 32, %s14
      %p145 = scmp.lt.s32.totalorder %s144, 63
      %s146 = scalar_select %p145, %s144, 63
      %s147 = smul.addr %s146, 4
      %s148 = scalar_lea.vmem %s0, %s147
      %p149 = pneg %p35
      %p150 = pneg %p32
      %p151 = pneg %p56
      %p152 = pneg %p53
      %p153 = pneg %p77
      %p154 = pneg %p74
      %p155 = pneg %p103
      %p156 = pneg %p100
      %s157 = smul.u32 32, %s14
      %p158 = scmp.lt.s32.totalorder %s157, 63
      %s159 = scalar_select %p158, %s157, 63
      %s160 = smul.addr %s159, 8
      %s161 = scalar_lea.vmem %s3, %s160
      %s162 = smul.u32 32, %s14
      %p163 = scmp.lt.s32.totalorder %s162, 63
      %s164 = scalar_select %p163, %s162, 63
      %s165 = smul.addr %s164, 4
      %s166 = scalar_lea.vmem %s0, %s165
      %s167 = smul.u32 32, %s14
      %s168 = smul.u32 32, %s14
      %p169 = scmp.lt.s32.totalorder %s168, 63
      %s170 = scalar_select %p169, %s168, 63
      %s171 = smul.addr %s170, 8
      %s172 = scalar_lea.vmem %s3, %s171
      %s173 = smul.u32 32, %s14
      %v175 = vld [vmem:[%s2] sm:$0x1]
      %v176 = vld [vmem:[%s2 + $0x1] sm:$0x1]
      %v177 = vld [vmem:[%s2 + $0x2] sm:$0x1]
      %v178 = vld [vmem:[%s166] sm:$0xf]
      %v179 = vld [vmem:[%s166 + $0x4] sm:$0xf]
      %v180 = vld [vmem:[%s166 + $0x8] sm:$0xf]
      %v181 = vld [vmem:[%s166 + $0xc] sm:$0xf]
      %v182 = vld [vmem:[%s166 + $0x10] sm:$0xf]
      %v183 = vld [vmem:[%s166 + $0x14] sm:$0xf]
      %v184 = vld [vmem:[%s166 + $0x18] sm:$0xf]
      %v185 = vld [vmem:[%s166 + $0x1c] sm:$0xf]
      %v186 = vld [vmem:[%s166 + $0x20] sm:$0xf]
      %v187 = vld [vmem:[%s166 + $0x24] sm:$0xf]
      %v188 = vld [vmem:[%s166 + $0x28] sm:$0xf]
      %v189 = vld [vmem:[%s166 + $0x2c] sm:$0xf]
      %v190 = vld [vmem:[%s166 + $0x30] sm:$0xf]
      %v191 = vld [vmem:[%s166 + $0x34] sm:$0xf]
      %v192 = vld [vmem:[%s166 + $0x38] sm:$0xf]
      %v193 = vld [vmem:[%s166 + $0x3c] sm:$0xf]
      %v194 = vld [vmem:[%s166 + $0x40] sm:$0xf]
      %v195 = vld [vmem:[%s166 + $0x44] sm:$0xf]
      %v196 = vld [vmem:[%s166 + $0x48] sm:$0xf]
      %v197 = vld [vmem:[%s166 + $0x4c] sm:$0xf]
      %v198 = vld [vmem:[%s166 + $0x50] sm:$0xf]
      %v199 = vld [vmem:[%s166 + $0x54] sm:$0xf]
      %v200 = vld [vmem:[%s166 + $0x58] sm:$0xf]
      %v201 = vld [vmem:[%s166 + $0x5c] sm:$0xf]
      %v202 = vld [vmem:[%s166 + $0x60] sm:$0xf]
      %v203 = vld [vmem:[%s166 + $0x64] sm:$0xf]
      %v204 = vld [vmem:[%s166 + $0x68] sm:$0xf]
      %v205 = vld [vmem:[%s166 + $0x6c] sm:$0xf]
      %v206 = vld [vmem:[%s166 + $0x70] sm:$0xf]
      %v207 = vld [vmem:[%s166 + $0x74] sm:$0xf]
      %v208 = vld [vmem:[%s166 + $0x78] sm:$0xf]
      %v209 = vld [vmem:[%s166 + $0x7c] sm:$0xf]
      %v210 = vld [vmem:[%s1] sm:$0xf]
      %v211 = vld [vmem:[%s1 + $0x4] sm:$0xf]
      %v212 = vld [vmem:[%s1 + $0x8] sm:$0xf]
      %v213 = vld [vmem:[%s1 + $0xc] sm:$0xf]
      %v214 = vld [vmem:[%s1 + $0x10] sm:$0xf]
      %v215 = vld [vmem:[%s1 + $0x14] sm:$0xf]
      %v216 = vld [vmem:[%s1 + $0x18] sm:$0xf]
      %v217 = vld [vmem:[%s1 + $0x1c] sm:$0xf]
      %v218 = vld [vmem:[%s1 + $0x20] sm:$0xf]
      %v219 = vld [vmem:[%s1 + $0x24] sm:$0xf]
      %v252 = vunpack.c.l.b16 %v178
      %v253 = vunpack.c.l.b16 %v179
      %v254 = vunpack.c.l.b16 %v180
      %v255 = vunpack.c.l.b16 %v181
      %v256 = vunpack.c.l.b16 %v182
      %v257 = vunpack.c.l.b16 %v183
      %v258 = vunpack.c.l.b16 %v184
      %v259 = vunpack.c.l.b16 %v185
      %v260 = vunpack.c.l.b16 %v186
      %v261 = vunpack.c.l.b16 %v187
      %v262 = vunpack.c.l.b16 %v188
      %v263 = vunpack.c.l.b16 %v189
      %v264 = vunpack.c.l.b16 %v190
      %v265 = vunpack.c.l.b16 %v191
      %v266 = vunpack.c.l.b16 %v192
      %v267 = vunpack.c.l.b16 %v193
      %v268 = vunpack.c.l.b16 %v194
      %v269 = vunpack.c.l.b16 %v195
      %v270 = vunpack.c.l.b16 %v196
      %v271 = vunpack.c.l.b16 %v197
      %v272 = vunpack.c.l.b16 %v198
      %v273 = vunpack.c.l.b16 %v199
      %v274 = vunpack.c.l.b16 %v200
      %v275 = vunpack.c.l.b16 %v201
      %v276 = vunpack.c.l.b16 %v202
      %v277 = vunpack.c.l.b16 %v203
      %v278 = vunpack.c.l.b16 %v204
      %v279 = vunpack.c.l.b16 %v205
      %v280 = vunpack.c.l.b16 %v206
      %v281 = vunpack.c.l.b16 %v207
      %v282 = vunpack.c.l.b16 %v208
      %v283 = vunpack.c.l.b16 %v209
      %v284 = vpack.c.b16 %v253, %v252
      %v285 = vpack.c.b16 %v255, %v254
      %v286 = vpack.c.b16 %v257, %v256
      %v287 = vpack.c.b16 %v259, %v258
      %v288 = vpack.c.b16 %v261, %v260
      %v289 = vpack.c.b16 %v263, %v262
      %v290 = vpack.c.b16 %v265, %v264
      %v291 = vpack.c.b16 %v267, %v266
      %v292 = vpack.c.b16 %v269, %v268
      %v293 = vpack.c.b16 %v271, %v270
      %v294 = vpack.c.b16 %v273, %v272
      %v295 = vpack.c.b16 %v275, %v274
      %v296 = vpack.c.b16 %v277, %v276
      %v297 = vpack.c.b16 %v279, %v278
      %v298 = vpack.c.b16 %v281, %v280
      %v299 = vpack.c.b16 %v283, %v282
      %v310 = vunpack.c.l.b16 %v210
      %v311 = vunpack.c.l.b16 %v211
      %v312 = vunpack.c.l.b16 %v212
      %v313 = vunpack.c.l.b16 %v213
      %v314 = vunpack.c.l.b16 %v214
      %v315 = vunpack.c.l.b16 %v215
      %v316 = vunpack.c.l.b16 %v216
      %v317 = vunpack.c.l.b16 %v217
      %v318 = vunpack.c.l.b16 %v218
      %v319 = vunpack.c.l.b16 %v219
      %v320 = vpack.c.b16 %v311, %v310
      %v321 = vpack.c.b16 %v313, %v312
      %v322 = vpack.c.b16 %v315, %v314
      %v323 = vpack.c.b16 %v317, %v316
      %v324 = vpack.c.b16 %v319, %v318
      %vm330 = vcmask 654336
      %v332 = vsel %vm330, %v284, 0
      %v335 = vsel %vm330, %v285, 0
      %v338 = vsel %vm330, %v286, 0
      %v341 = vsel %vm330, %v287, 0
      %v344 = vsel %vm330, %v288, 0
      %v347 = vsel %vm330, %v289, 0
      %v350 = vsel %vm330, %v290, 0
      %v353 = vsel %vm330, %v291, 0
      %v356 = vsel %vm330, %v292, 0
      %v359 = vsel %vm330, %v293, 0
      %v362 = vsel %vm330, %v294, 0
      %v365 = vsel %vm330, %v295, 0
      %v368 = vsel %vm330, %v296, 0
      %v371 = vsel %vm330, %v297, 0
      %v374 = vsel %vm330, %v298, 0
      %v377 = vsel %vm330, %v299, 0
      %379 = vmatprep.subr.bf16.mxu0 0
      %380 = vmatpush1.bf16.msra.mxu0 %v320
      %381 = vmatprep.subr.bf16.mxu0 0
      %382 = vmatpush1.bf16.msra.mxu0 %v321
      %383 = vmatprep.subr.bf16.mxu0 0
      %384 = vmatpush1.bf16.msra.mxu0 %v322
      %385 = vmatprep.subr.bf16.mxu0 0
      %386 = vmatpush1.bf16.msra.mxu0 %v323
      %387 = vmatprep.subr.bf16.mxu0 0
      %388 = vmatpush1.bf16.msra.mxu0 %v324
      %389 = vmatprep.subr.bf16.mxu0 0
      %390 = vmatpush1.bf16.msra.mxu0 0
      %391 = vmatprep.subr.bf16.mxu0 0
      %392 = vmatpush1.bf16.msra.mxu0 0
      %393 = vmatprep.subr.bf16.mxu0 0
      %394 = vmatpush1.bf16.msra.mxu0 0
      %395 = vmatprep.subr.bf16.mxu0 0
      %396 = vmatpush1.bf16.msra.mxu0 0
      %397 = vmatprep.subr.bf16.mxu0 0
      %398 = vmatpush1.bf16.msra.mxu0 0
      %399 = vmatprep.subr.bf16.mxu0 0
      %400 = vmatpush1.bf16.msra.mxu0 0
      %401 = vmatprep.subr.bf16.mxu0 0
      %402 = vmatpush1.bf16.msra.mxu0 0
      %403 = vmatprep.subr.bf16.mxu0 0
      %404 = vmatpush1.bf16.msra.mxu0 0
      %405 = vmatprep.subr.bf16.mxu0 0
      %406 = vmatpush1.bf16.msra.mxu0 0
      %407 = vmatprep.subr.bf16.mxu0 0
      %408 = vmatpush1.bf16.msra.mxu0 0
      %409 = vmatprep.subr.bf16.mxu0 0
      %410 = vmatpush1.bf16.msra.mxu0 0
      %411 = vmatprep.mubr.bf16.mxu0 0
      %412 = vmatmul.mubr.bf16.gmra.mrb[0].mxu0 %v332
      %v413 = vpop.f32.mrb[0].mxu0
      %v414 = vadd.f32 0.0, %v413
      %v415 = vpop.f32.mrb[0].mxu0
      %v416 = vpop.f32.mrb[0].mxu0
      %v417 = vadd.f32 0.0, %v416
      %v418 = vpop.f32.mrb[0].mxu0
      %419 = vmatprep.mubr.bf16.mxu0 0
      %420 = vmatmul.mubr.bf16.gmra.mrb[0].mxu0 %v335
      %v421 = vpop.f32.mrb[0].mxu0
      %v422 = vadd.f32 0.0, %v421
      %v423 = vpop.f32.mrb[0].mxu0
      %v424 = vpop.f32.mrb[0].mxu0
      %v425 = vadd.f32 0.0, %v424
      %v426 = vpop.f32.mrb[0].mxu0
      %427 = vmatprep.mubr.bf16.mxu0 0
      %428 = vmatmul.mubr.bf16.gmra.mrb[0].mxu0 %v338
      %v429 = vpop.f32.mrb[0].mxu0
      %v430 = vadd.f32 0.0, %v429
      %v431 = vpop.f32.mrb[0].mxu0
      %v432 = vpop.f32.mrb[0].mxu0
      %v433 = vadd.f32 0.0, %v432
      %v434 = vpop.f32.mrb[0].mxu0
      %435 = vmatprep.mubr.bf16.mxu0 0
      %436 = vmatmul.mubr.bf16.gmra.mrb[0].mxu0 %v341
      %v437 = vpop.f32.mrb[0].mxu0
      %v438 = vadd.f32 0.0, %v437
      %v439 = vpop.f32.mrb[0].mxu0
      %v440 = vpop.f32.mrb[0].mxu0
      %v441 = vadd.f32 0.0, %v440
      %v442 = vpop.f32.mrb[0].mxu0
      %443 = vmatprep.mubr.bf16.mxu0 0
      %444 = vmatmul.mubr.bf16.gmra.mrb[0].mxu0 %v344
      %v445 = vpop.f32.mrb[0].mxu0
      %v446 = vadd.f32 0.0, %v445
      %v447 = vpop.f32.mrb[0].mxu0
      %v448 = vpop.f32.mrb[0].mxu0
      %v449 = vadd.f32 0.0, %v448
      %v450 = vpop.f32.mrb[0].mxu0
      %451 = vmatprep.mubr.bf16.mxu0 0
      %452 = vmatmul.mubr.bf16.gmra.mrb[0].mxu0 %v347
      %v453 = vpop.f32.mrb[0].mxu0
      %v454 = vadd.f32 0.0, %v453
      %v455 = vpop.f32.mrb[0].mxu0
      %v456 = vpop.f32.mrb[0].mxu0
      %v457 = vadd.f32 0.0, %v456
      %v458 = vpop.f32.mrb[0].mxu0
      %459 = vmatprep.mubr.bf16.mxu0 0
      %460 = vmatmul.mubr.bf16.gmra.mrb[0].mxu0 %v350
      %v461 = vpop.f32.mrb[0].mxu0
      %v462 = vadd.f32 0.0, %v461
      %v463 = vpop.f32.mrb[0].mxu0
      %v464 = vpop.f32.mrb[0].mxu0
      %v465 = vadd.f32 0.0, %v464
      %v466 = vpop.f32.mrb[0].mxu0
      %467 = vmatprep.mubr.bf16.mxu0 0
      %468 = vmatmul.mubr.bf16.gmra.mrb[0].mxu0 %v353
      %v469 = vpop.f32.mrb[0].mxu0
      %v470 = vadd.f32 0.0, %v469
      %v471 = vpop.f32.mrb[0].mxu0
      %v472 = vpop.f32.mrb[0].mxu0
      %v473 = vadd.f32 0.0, %v472
      %v474 = vpop.f32.mrb[0].mxu0
      %475 = vmatprep.mubr.bf16.mxu0 0
      %476 = vmatmul.mubr.bf16.gmra.mrb[0].mxu0 %v356
      %v477 = vpop.f32.mrb[0].mxu0
      %v478 = vadd.f32 0.0, %v477
      %v479 = vpop.f32.mrb[0].mxu0
      %v480 = vpop.f32.mrb[0].mxu0
      %v481 = vadd.f32 0.0, %v480
      %v482 = vpop.f32.mrb[0].mxu0
      %483 = vmatprep.mubr.bf16.mxu0 0
      %484 = vmatmul.mubr.bf16.gmra.mrb[0].mxu0 %v359
      %v485 = vpop.f32.mrb[0].mxu0
      %v486 = vadd.f32 0.0, %v485
      %v487 = vpop.f32.mrb[0].mxu0
      %v488 = vpop.f32.mrb[0].mxu0
      %v489 = vadd.f32 0.0, %v488
      %v490 = vpop.f32.mrb[0].mxu0
      %491 = vmatprep.mubr.bf16.mxu0 0
      %492 = vmatmul.mubr.bf16.gmra.mrb[0].mxu0 %v362
      %v493 = vpop.f32.mrb[0].mxu0
      %v494 = vadd.f32 0.0, %v493
      %v495 = vpop.f32.mrb[0].mxu0
      %v496 = vpop.f32.mrb[0].mxu0
      %v497 = vadd.f32 0.0, %v496
      %v498 = vpop.f32.mrb[0].mxu0
      %499 = vmatprep.mubr.bf16.mxu0 0
      %500 = vmatmul.mubr.bf16.gmra.mrb[0].mxu0 %v365
      %v501 = vpop.f32.mrb[0].mxu0
      %v502 = vadd.f32 0.0, %v501
      %v503 = vpop.f32.mrb[0].mxu0
      %v504 = vpop.f32.mrb[0].mxu0
      %v505 = vadd.f32 0.0, %v504
      %v506 = vpop.f32.mrb[0].mxu0
      %507 = vmatprep.mubr.bf16.mxu0 0
      %508 = vmatmul.mubr.bf16.gmra.mrb[0].mxu0 %v368
      %v509 = vpop.f32.mrb[0].mxu0
      %v510 = vadd.f32 0.0, %v509
      %v511 = vpop.f32.mrb[0].mxu0
      %v512 = vpop.f32.mrb[0].mxu0
      %v513 = vadd.f32 0.0, %v512
      %v514 = vpop.f32.mrb[0].mxu0
      %515 = vmatprep.mubr.bf16.mxu0 0
      %516 = vmatmul.mubr.bf16.gmra.mrb[0].mxu0 %v371
      %v517 = vpop.f32.mrb[0].mxu0
      %v518 = vadd.f32 0.0, %v517
      %v519 = vpop.f32.mrb[0].mxu0
      %v520 = vpop.f32.mrb[0].mxu0
      %v521 = vadd.f32 0.0, %v520
      %v522 = vpop.f32.mrb[0].mxu0
      %523 = vmatprep.mubr.bf16.mxu0 0
      %524 = vmatmul.mubr.bf16.gmra.mrb[0].mxu0 %v374
      %v525 = vpop.f32.mrb[0].mxu0
      %v526 = vadd.f32 0.0, %v525
      %v527 = vpop.f32.mrb[0].mxu0
      %v528 = vpop.f32.mrb[0].mxu0
      %v529 = vadd.f32 0.0, %v528
      %v530 = vpop.f32.mrb[0].mxu0
      %531 = vmatprep.mubr.bf16.mxu0 0
      %532 = vmatmul.mubr.bf16.gmra.mrb[0].mxu0 %v377
      %v533 = vpop.f32.mrb[0].mxu0
      %v534 = vadd.f32 0.0, %v533
      %v535 = vpop.f32.mrb[0].mxu0
      %v536 = vpop.f32.mrb[0].mxu0
      %v537 = vadd.f32 0.0, %v536
      %v538 = vpop.f32.mrb[0].mxu0
      %539 = vdwg.mxu0
      %v540 = vlaneseq
      %v541 = vshrl.u32 %v540, 7
      %v542 = vsub.s32 0, %v541
      %v543 = vrot.slane %v175, %v542
      %v544 = vmul.f32 %v414, %v543
      %v545 = vmul.f32 %v417, %v543
      %v546 = vmul.f32 %v422, %v543
      %v547 = vmul.f32 %v425, %v543
      %v548 = vmul.f32 %v430, %v543
      %v549 = vmul.f32 %v433, %v543
      %v550 = vmul.f32 %v438, %v543
      %v551 = vmul.f32 %v441, %v543
      %v552 = vmul.f32 %v446, %v543
      %v553 = vmul.f32 %v449, %v543
      %v554 = vmul.f32 %v454, %v543
      %v555 = vmul.f32 %v457, %v543
      %v556 = vmul.f32 %v462, %v543
      %v557 = vmul.f32 %v465, %v543
      %v558 = vmul.f32 %v470, %v543
      %v559 = vmul.f32 %v473, %v543
      %v560 = vmul.f32 %v478, %v543
      %v561 = vmul.f32 %v481, %v543
      %v562 = vmul.f32 %v486, %v543
      %v563 = vmul.f32 %v489, %v543
      %v564 = vmul.f32 %v494, %v543
      %v565 = vmul.f32 %v497, %v543
      %v566 = vmul.f32 %v502, %v543
      %v567 = vmul.f32 %v505, %v543
      %v568 = vmul.f32 %v510, %v543
      %v569 = vmul.f32 %v513, %v543
      %v570 = vmul.f32 %v518, %v543
      %v571 = vmul.f32 %v521, %v543
      %v572 = vmul.f32 %v526, %v543
      %v573 = vmul.f32 %v529, %v543
      %v574 = vmul.f32 %v534, %v543
      %v575 = vmul.f32 %v537, %v543
      %v576 = vlaneseq
      %v577 = vshrl.u32 %v576, 7
      %v578 = vsub.s32 0, %v577
      %v579 = vrot.slane %v176, %v578
      %v580 = vadd.f32 %v544, %v579
      %v581 = vadd.f32 %v545, %v579
      %v582 = vadd.f32 %v546, %v579
      %v583 = vadd.f32 %v547, %v579
      %v584 = vadd.f32 %v548, %v579
      %v585 = vadd.f32 %v549, %v579
      %v586 = vadd.f32 %v550, %v579
      %v587 = vadd.f32 %v551, %v579
      %v588 = vadd.f32 %v552, %v579
      %v589 = vadd.f32 %v553, %v579
      %v590 = vadd.f32 %v554, %v579
      %v591 = vadd.f32 %v555, %v579
      %v592 = vadd.f32 %v556, %v579
      %v593 = vadd.f32 %v557, %v579
      %v594 = vadd.f32 %v558, %v579
      %v595 = vadd.f32 %v559, %v579
      %v596 = vadd.f32 %v560, %v579
      %v597 = vadd.f32 %v561, %v579
      %v598 = vadd.f32 %v562, %v579
      %v599 = vadd.f32 %v563, %v579
      %v600 = vadd.f32 %v564, %v579
      %v601 = vadd.f32 %v565, %v579
      %v602 = vadd.f32 %v566, %v579
      %v603 = vadd.f32 %v567, %v579
      %v604 = vadd.f32 %v568, %v579
      %v605 = vadd.f32 %v569, %v579
      %v606 = vadd.f32 %v570, %v579
      %v607 = vadd.f32 %v571, %v579
      %v608 = vadd.f32 %v572, %v579
      %v609 = vadd.f32 %v573, %v579
      %v610 = vadd.f32 %v574, %v579
      %v611 = vadd.f32 %v575, %v579
      %vm612 = vcmp.gt.f32.partialorder %v177, 0.0
      %v613 = vmax.f32 %v580, 0.0
      %v614 = vmax.f32 %v581, 0.0
      %v615 = vmax.f32 %v582, 0.0
      %v616 = vmax.f32 %v583, 0.0
      %v617 = vmax.f32 %v584, 0.0
      %v618 = vmax.f32 %v585, 0.0
      %v619 = vmax.f32 %v586, 0.0
      %v620 = vmax.f32 %v587, 0.0
      %v621 = vmax.f32 %v588, 0.0
      %v622 = vmax.f32 %v589, 0.0
      %v623 = vmax.f32 %v590, 0.0
      %v624 = vmax.f32 %v591, 0.0
      %v625 = vmax.f32 %v592, 0.0
      %v626 = vmax.f32 %v593, 0.0
      %v627 = vmax.f32 %v594, 0.0
      %v628 = vmax.f32 %v595, 0.0
      %v629 = vmax.f32 %v596, 0.0
      %v630 = vmax.f32 %v597, 0.0
      %v631 = vmax.f32 %v598, 0.0
      %v632 = vmax.f32 %v599, 0.0
      %v633 = vmax.f32 %v600, 0.0
      %v634 = vmax.f32 %v601, 0.0
      %v635 = vmax.f32 %v602, 0.0
      %v636 = vmax.f32 %v603, 0.0
      %v637 = vmax.f32 %v604, 0.0
      %v638 = vmax.f32 %v605, 0.0
      %v639 = vmax.f32 %v606, 0.0
      %v640 = vmax.f32 %v607, 0.0
      %v641 = vmax.f32 %v608, 0.0
      %v642 = vmax.f32 %v609, 0.0
      %v643 = vmax.f32 %v610, 0.0
      %v644 = vmax.f32 %v611, 0.0
      %v645 = vsel %vm612, 1, 0
      %v646 = vlaneseq
      %v647 = vshrl.u32 %v646, 7
      %v648 = vsub.s32 0, %v647
      %v649 = vrot.slane %v645, %v648
      %vm650 = vcmp.eq.s32.totalorder %v649, 1
      %v651 = vsel %vm650, %v613, %v580
      %v652 = vsel %vm650, %v614, %v581
      %v653 = vsel %vm650, %v615, %v582
      %v654 = vsel %vm650, %v616, %v583
      %v655 = vsel %vm650, %v617, %v584
      %v656 = vsel %vm650, %v618, %v585
      %v657 = vsel %vm650, %v619, %v586
      %v658 = vsel %vm650, %v620, %v587
      %v659 = vsel %vm650, %v621, %v588
      %v660 = vsel %vm650, %v622, %v589
      %v661 = vsel %vm650, %v623, %v590
      %v662 = vsel %vm650, %v624, %v591
      %v663 = vsel %vm650, %v625, %v592
      %v664 = vsel %vm650, %v626, %v593
      %v665 = vsel %vm650, %v627, %v594
      %v666 = vsel %vm650, %v628, %v595
      %v667 = vsel %vm650, %v629, %v596
      %v668 = vsel %vm650, %v630, %v597
      %v669 = vsel %vm650, %v631, %v598
      %v670 = vsel %vm650, %v632, %v599
      %v671 = vsel %vm650, %v633, %v600
      %v672 = vsel %vm650, %v634, %v601
      %v673 = vsel %vm650, %v635, %v602
      %v674 = vsel %vm650, %v636, %v603
      %v675 = vsel %vm650, %v637, %v604
      %v676 = vsel %vm650, %v638, %v605
      %v677 = vsel %vm650, %v639, %v606
      %v678 = vsel %vm650, %v640, %v607
      %v679 = vsel %vm650, %v641, %v608
      %v680 = vsel %vm650, %v642, %v609
      %v681 = vsel %vm650, %v643, %v610
      %v682 = vsel %vm650, %v644, %v611
      %vm683 = vcmask 130048
      %684 = vst.msk [vmem:[%s172] sm:$0xff] %vm683, %v651
      %685 = vst.msk [vmem:[%s172 + $0x8] sm:$0xff] %vm683, %v652
      %686 = vst.msk [vmem:[%s172 + $0x10] sm:$0xff] %vm683, %v653
      %687 = vst.msk [vmem:[%s172 + $0x18] sm:$0xff] %vm683, %v654
      %688 = vst.msk [vmem:[%s172 + $0x20] sm:$0xff] %vm683, %v655
      %689 = vst.msk [vmem:[%s172 + $0x28] sm:$0xff] %vm683, %v656
      %690 = vst.msk [vmem:[%s172 + $0x30] sm:$0xff] %vm683, %v657
      %691 = vst.msk [vmem:[%s172 + $0x38] sm:$0xff] %vm683, %v658
      %692 = vst.msk [vmem:[%s172 + $0x40] sm:$0xff] %vm683, %v659
      %693 = vst.msk [vmem:[%s172 + $0x48] sm:$0xff] %vm683, %v660
      %694 = vst.msk [vmem:[%s172 + $0x50] sm:$0xff] %vm683, %v661
      %695 = vst.msk [vmem:[%s172 + $0x58] sm:$0xff] %vm683, %v662
      %696 = vst.msk [vmem:[%s172 + $0x60] sm:$0xff] %vm683, %v663
      %697 = vst.msk [vmem:[%s172 + $0x68] sm:$0xff] %vm683, %v664
      %698 = vst.msk [vmem:[%s172 + $0x70] sm:$0xff] %vm683, %v665
      %699 = vst.msk [vmem:[%s172 + $0x78] sm:$0xff] %vm683, %v666
      %700 = vst.msk [vmem:[%s172 + $0x80] sm:$0xff] %vm683, %v667
      %701 = vst.msk [vmem:[%s172 + $0x88] sm:$0xff] %vm683, %v668
      %702 = vst.msk [vmem:[%s172 + $0x90] sm:$0xff] %vm683, %v669
      %703 = vst.msk [vmem:[%s172 + $0x98] sm:$0xff] %vm683, %v670
      %704 = vst.msk [vmem:[%s172 + $0xa0] sm:$0xff] %vm683, %v671
      %705 = vst.msk [vmem:[%s172 + $0xa8] sm:$0xff] %vm683, %v672
      %706 = vst.msk [vmem:[%s172 + $0xb0] sm:$0xff] %vm683, %v673
      %707 = vst.msk [vmem:[%s172 + $0xb8] sm:$0xff] %vm683, %v674
      %708 = vst.msk [vmem:[%s172 + $0xc0] sm:$0xff] %vm683, %v675
      %709 = vst.msk [vmem:[%s172 + $0xc8] sm:$0xff] %vm683, %v676
      %710 = vst.msk [vmem:[%s172 + $0xd0] sm:$0xff] %vm683, %v677
      %711 = vst.msk [vmem:[%s172 + $0xd8] sm:$0xff] %vm683, %v678
      %712 = vst.msk [vmem:[%s172 + $0xe0] sm:$0xff] %vm683, %v679
      %713 = vst.msk [vmem:[%s172 + $0xe8] sm:$0xff] %vm683, %v680
      %714 = vst.msk [vmem:[%s172 + $0xf0] sm:$0xff] %vm683, %v681
      %715 = vst.msk [vmem:[%s172 + $0xf8] sm:$0xff] %vm683, %v682
      %s716 = smul.u32 32, %s14
      %p717 = scmp.lt.s32.totalorder %s716, 63
      %s718 = scalar_select %p717, %s716, 63
      %s719 = smul.addr %s718, 8
      %s720 = scalar_lea.vmem %s3, %s719
      // Predicated region
      $region33: #{ske_mixf.8} parent=31 // pred_check
        %p721 = pneg %p100
      $region34: #{ske_mixf.8} parent=31 // pred_check_branch
        %723 = sbr.rel (%p721) target = $region36
      $region35: #{ske_mixf.8} parent=31 // pred_region
        %s724 = smul.u32 32, %s14
      $region36: #{ske_mixf.8} parent=31 // pred_fallthru
        _
    $region32: #{ske_mixf.8} parent=5 // pred_fallthru
      _
    %p725 = scmp.le.s32.totalorder 2, %s9
    // Predicated region
    $region37: #{ske_mixf.8} parent=5 // pred_check
      %p726 = pneg %p725
    $region38: #{ske_mixf.8} parent=5 // pred_check_branch
      %728 = sbr.rel (%p726) target = $region40
    $region39: #{ske_mixf.8} parent=5 // pred_region
      %s729 = ssub.s32 %s9, 2
      // Predicated region
      $region41: #{ske_mixf.8} parent=39 // pred_check
        %p730 = pneg %p106
      $region42: #{ske_mixf.8} parent=39 // pred_check_branch
        %732 = sbr.rel (%p730) target = $region44
      $region43: #{ske_mixf.8} parent=39 // pred_region
        %s733 = smul.u32 32, %s15
        %p734 = scmp.lt.s32.totalorder %s733, 63
        %s735 = scalar_select %p734, %s733, 63
        %s736 = smul.addr %s735, 8
        %s737 = scalar_lea.vmem %s3, %s736
      $region44: #{ske_mixf.8} parent=39 // pred_fallthru
        _
    $region40: #{ske_mixf.8} parent=5 // pred_fallthru
      _
  $region6: #{ske_mixf.8} parent=0 // loop_footer
    %s13 = sadd.s32 1, %s9
  $region7: #{ske_mixf.8} parent=0 // loop_footer_branch
    %8 = sbr.rel target = $region3
  $region8: #{ske_mixf.8} parent=0 // loop_exit
    _

</llo_original>
